<compile_context>
chip_gen: v7x
topology: tpu7x:2x2x1
jax: 0.10.0
libtpu: 0.0.40
codegen_flags: <defaults>
</compile_context>

<pallas_src>
import functools

import numpy as np
import jax
import jax.numpy as jnp
from jax.experimental import pallas as pl
from jax.experimental.pallas import tpu as pltpu


TB = 8  # images per grid step (raise on v6e's 128 MiB VMEM if desired)


# ---------------------------------------------------------------------------
# Fused forward kernel: one grid step == TB images, everything stays on-chip.
# ---------------------------------------------------------------------------
def _cnn_kernel(x_ref, wb1_ref, b1t_ref, r1e_ref, r1o_ref, s1e_ref, s1o_ref,
                wb2_ref, b2t_ref, r2e_ref, r2o_ref, s2e_ref, s2o_ref,
                eph_ref, wf1_ref, bf1_ref, wf2_ref, bf2_ref, wf3_ref, bf3_ref,
                o_ref):
    f32, bf16 = jnp.float32, jnp.bfloat16
    tb = x_ref.shape[0]
    dot = functools.partial(jnp.dot, preferred_element_type=f32)

    # ---- conv1 (+bias+relu): ONE banded bf16 matmul over all TB images ----
    # x lanes are w*3+c; concatenating 5 row-shifted copies gives K = 5*96 = 480.
    x = x_ref[...]                                                    # (TB, 40, 96)
    xcat = jnp.concatenate([x[:, kh:kh + 32, :] for kh in range(5)], axis=-1)
    y1 = dot(xcat.reshape(tb * 32, 480), wb1_ref[...])                # (TB*32, 168) f32
    y1 = jnp.maximum(y1 + b1t_ref[...], 0.0).astype(bf16)             # lanes = ow*6 + co

    # ---- 2x2 maxpool #1: exact 0/1 selection matmuls (row pairs, then columns) ----
    rp1 = jnp.maximum(dot(r1e_ref[...], y1), dot(r1o_ref[...], y1)).astype(bf16)
    p1 = jnp.maximum(dot(rp1, s1e_ref[...]), dot(rp1, s1o_ref[...])).astype(bf16)
    p1 = p1.reshape(tb, 16, 84)                                        # lanes = pw*6 + c
    p1 = jnp.concatenate([p1, jnp.zeros((tb, 8, 84), bf16)], axis=1)   # pad rows -> 24

    # ---- conv2 (+bias+relu): ONE banded bf16 matmul ----
    xcat2 = jnp.concatenate([p1[:, kh:kh + 16, :] for kh in range(5)], axis=-1)
    y2 = dot(xcat2.reshape(tb * 16, 420), wb2_ref[...])               # (TB*16, 160) f32
    y2 = jnp.maximum(y2 + b2t_ref[...], 0.0).astype(bf16)             # lanes = ow2*16 + co

    # ---- 2x2 maxpool #2 ----
    rp2 = jnp.maximum(dot(r2e_ref[...], y2), dot(r2o_ref[...], y2)).astype(bf16)
    p2 = jnp.maximum(dot(rp2, s2e_ref[...]), dot(rp2, s2o_ref[...])).astype(bf16)  # (TB*8, 80)

    # ---- fc1 accumulated over the 5 pooled rows (no 400-wide feature scatter) ----
    h = jnp.zeros((tb, 120), f32)
    for ph in range(5):
        row = dot(eph_ref[ph], p2).astype(bf16)                        # (TB, 80) row-extract
        h = h + dot(row, wf1_ref[ph])
    h = jnp.maximum(h + bf1_ref[...], 0.0)
    h = jnp.maximum(dot(h.astype(bf16), wf2_ref[...]) + bf2_ref[...], 0.0)
    o_ref[...] = dot(h.astype(bf16), wf3_ref[...]) + bf3_ref[...]


# ---------------------------------------------------------------------------
# Host wrapper: one pallas_call, TB images per grid step.
# ---------------------------------------------------------------------------
@jax.jit
def cnn_forward(x_nchw, kp):
    """Forward pass of the LeNet-style CNN. x_nchw: (B, 3, 32, 32) float32."""
    B = x_nchw.shape[0]
    bp = ((B + TB - 1) // TB) * TB
    # NCHW -> NHWC -> fold (W, C) into a lane-dense 96-wide dim; pad H 32->40
    # (zero rows) so in-kernel row-window slices stay in bounds; pad batch to TB.
    x = jnp.transpose(x_nchw, (0, 2, 3, 1)).reshape(B, 32, 96)
    x = jnp.pad(x, ((0, bp - B), (0, 8), (0, 0))).astype(jnp.bfloat16)

    out = pl.pallas_call(
        _cnn_kernel,
        out_shape=jax.ShapeDtypeStruct((bp, 10), jnp.float32),
        grid=(bp // TB,),
        in_specs=[
            pl.BlockSpec((TB, 40, 96), lambda i: (i, 0, 0)),          # image block
            pl.BlockSpec((480, 168), lambda i: (0, 0)),               # banded conv1 weight
            pl.BlockSpec((1, 168), lambda i: (0, 0)),                 # conv1 bias (tiled)
            pl.BlockSpec((TB * 16, TB * 32), lambda i: (0, 0)),       # row-pool select e
            pl.BlockSpec((TB * 16, TB * 32), lambda i: (0, 0)),       # row-pool select o
            pl.BlockSpec((168, 84), lambda i: (0, 0)),                # col-pool select e
            pl.BlockSpec((168, 84), lambda i: (0, 0)),                # col-pool select o
            pl.BlockSpec((420, 160), lambda i: (0, 0)),               # banded conv2 weight
            pl.BlockSpec((1, 160), lambda i: (0, 0)),                 # conv2 bias (tiled)
            pl.BlockSpec((TB * 8, TB * 16), lambda i: (0, 0)),        # row-pool select e
            pl.BlockSpec((TB * 8, TB * 16), lambda i: (0, 0)),        # row-pool select o
            pl.BlockSpec((160, 80), lambda i: (0, 0)),                # col-pool select e
            pl.BlockSpec((160, 80), lambda i: (0, 0)),                # col-pool select o
            pl.BlockSpec((5, TB, TB * 8), lambda i: (0, 0, 0)),       # fc1 row extractor
            pl.BlockSpec((5, 80, 120), lambda i: (0, 0, 0)),          # fc1 weight (per row)
            pl.BlockSpec((1, 120), lambda i: (0, 0)),                 # fc1 bias
            pl.BlockSpec((120, 84), lambda i: (0, 0)),                # fc2 weight
            pl.BlockSpec((1, 84), lambda i: (0, 0)),                  # fc2 bias
            pl.BlockSpec((84, 10), lambda i: (0, 0)),                 # fc3 weight
            pl.BlockSpec((1, 10), lambda i: (0, 0)),                  # fc3 bias
        ],
        out_specs=pl.BlockSpec((TB, 10), lambda i: (i, 0)),
        compiler_params=pltpu.CompilerParams(
            dimension_semantics=("parallel",),                        # batch across TCs
        ),
    )(x, kp["wb1"], kp["b1t"], kp["r1e"], kp["r1o"], kp["s1e"], kp["s1o"],
      kp["wb2"], kp["b2t"], kp["r2e"], kp["r2o"], kp["s2e"], kp["s2o"],
      kp["eph"], kp["wf1"], kp["bf1"], kp["wf2"], kp["bf2"], kp["wf3"], kp["bf3"])
    return out[:B]


# ---------------------------------------------------------------------------
# Deterministic parameter init (PyTorch layouts: OIHW convs, fc "in" index in
# PyTorch (C,H,W) flatten order).
# ---------------------------------------------------------------------------
def init_params(key):
    ks = jax.random.split(key, 10)

    def u(k, shape, fan_in):
        bound = 1.0 / jnp.sqrt(jnp.float32(fan_in))
        return jax.random.uniform(k, shape, jnp.float32, -bound, bound)

    return {
        "conv1_w": u(ks[0], (6, 3, 5, 5), 3 * 25),
        "conv1_b": u(ks[1], (6,), 3 * 25),
        "conv2_w": u(ks[2], (16, 6, 5, 5), 6 * 25),
        "conv2_b": u(ks[3], (16,), 6 * 25),
        "fc1_w": u(ks[4], (400, 120), 400),
        "fc1_b": u(ks[5], (120,), 400),
        "fc2_w": u(ks[6], (120, 84), 120),
        "fc2_b": u(ks[7], (84,), 120),
        "fc3_w": u(ks[8], (84, 10), 84),
        "fc3_b": u(ks[9], (10,), 84),
    }


def prepare_params(p, tb=TB):
    """One-time host-side repack into the kernel's banded / selection layout."""
    w1 = np.asarray(p["conv1_w"], np.float32)   # (6, 3, 5, 5)  (co, ci, kh, kw)
    w2 = np.asarray(p["conv2_w"], np.float32)   # (16, 6, 5, 5)

    # Banded (Toeplitz) conv weights: rows = kh*(W*C) + w*C + c, cols = ow*Cout + co.
    sel1 = (np.arange(32)[:, None, None] ==
            np.arange(28)[None, :, None] + np.arange(5)[None, None, :]).astype(np.float32)
    wb1 = np.einsum("wak,ochk->hwcao", sel1, w1).reshape(5 * 32 * 3, 28 * 6)   # (480, 168)
    sel2 = (np.arange(14)[:, None, None] ==
            np.arange(10)[None, :, None] + np.arange(5)[None, None, :]).astype(np.float32)
    wb2 = np.einsum("wak,ochk->hwcao", sel2, w2).reshape(5 * 14 * 6, 10 * 16)  # (420, 160)

    # Exact 0/1 column-pool selection (even / odd spatial columns of the lane dim).
    def col_pool_sel(npos, nch):
        e = np.zeros((2 * npos * nch, npos * nch), np.float32)
        o = np.zeros_like(e)
        for q in range(npos):
            for c in range(nch):
                e[(2 * q) * nch + c, q * nch + c] = 1.0
                o[(2 * q + 1) * nch + c, q * nch + c] = 1.0
        return e, o

    # Exact 0/1 row-pool selection across the (b, row)-flattened matmul rows.
    def row_pool_sel(rows_in, rows_out):
        e = np.zeros((tb * rows_out, tb * rows_in), np.float32)
        o = np.zeros_like(e)
        for b in range(tb):
            for q in range(rows_out):
                e[b * rows_out + q, b * rows_in + 2 * q] = 1.0
                o[b * rows_out + q, b * rows_in + 2 * q + 1] = 1.0
        return e, o

    s1e, s1o = col_pool_sel(14, 6)     # (168, 84)
    s2e, s2o = col_pool_sel(5, 16)     # (160, 80)
    r1e, r1o = row_pool_sel(32, 16)    # (tb*16, tb*32)
    r2e, r2o = row_pool_sel(16, 8)     # (tb*8,  tb*16)

    # fc1 weight regrouped per pooled output row: (ph, pw*16 + co, out).
    wf1 = np.asarray(p["fc1_w"], np.float32).reshape(16, 5, 5, 120)
    wf1 = np.transpose(wf1, (1, 2, 0, 3)).reshape(5, 80, 120)

    # Row extractor for fc1 accumulation: eph[ph, b, b*8 + ph] = 1.
    eph = np.zeros((5, tb, tb * 8), np.float32)
    for ph in range(5):
        for b in range(tb):
            eph[ph, b, b * 8 + ph] = 1.0

    bf = jnp.bfloat16
    f32 = jnp.float32
    return {
        "wb1": jnp.asarray(wb1, bf),
        "b1t": jnp.asarray(np.tile(np.asarray(p["conv1_b"]), 28)[None, :], f32),
        "r1e": jnp.asarray(r1e, bf), "r1o": jnp.asarray(r1o, bf),
        "s1e": jnp.asarray(s1e, bf), "s1o": jnp.asarray(s1o, bf),
        "wb2": jnp.asarray(wb2, bf),
        "b2t": jnp.asarray(np.tile(np.asarray(p["conv2_b"]), 10)[None, :], f32),
        "r2e": jnp.asarray(r2e, bf), "r2o": jnp.asarray(r2o, bf),
        "s2e": jnp.asarray(s2e, bf), "s2o": jnp.asarray(s2o, bf),
        "eph": jnp.asarray(eph, bf),
        "wf1": jnp.asarray(wf1, bf),
        "bf1": jnp.asarray(np.asarray(p["fc1_b"])[None, :], f32),
        "wf2": jnp.asarray(np.asarray(p["fc2_w"]), bf),
        "bf2": jnp.asarray(np.asarray(p["fc2_b"])[None, :], f32),
        "wf3": jnp.asarray(np.asarray(p["fc3_w"]), bf),
        "bf3": jnp.asarray(np.asarray(p["fc3_b"])[None, :], f32),
    }


# ---------------------------------------------------------------------------
# Pure-JAX reference (mirrors the PyTorch forward exactly).
# ---------------------------------------------------------------------------
def _ref_pool(y):  # 2x2 / stride-2 maxpool on NCHW
    return jnp.maximum(
        jnp.maximum(y[:, :, 0::2, 0::2], y[:, :, 0::2, 1::2]),
        jnp.maximum(y[:, :, 1::2, 0::2], y[:, :, 1::2, 1::2]))


def reference_forward(x, p):
    hp = jax.lax.Precision.HIGHEST
    y = jax.lax.conv_general_dilated(
        x, p["conv1_w"], window_strides=(1, 1), padding="VALID",
        dimension_numbers=("NCHW", "OIHW", "NCHW"), precision=hp)
    y = _ref_pool(jax.nn.relu(y + p["conv1_b"][None, :, None, None]))
    y = jax.lax.conv_general_dilated(
        y, p["conv2_w"], window_strides=(1, 1), padding="VALID",
        dimension_numbers=("NCHW", "OIHW", "NCHW"), precision=hp)
    y = _ref_pool(jax.nn.relu(y + p["conv2_b"][None, :, None, None]))
    y = y.reshape(y.shape[0], -1)                                  # PyTorch flatten
    y = jax.nn.relu(jnp.dot(y, p["fc1_w"], precision=hp) + p["fc1_b"])
    y = jax.nn.relu(jnp.dot(y, p["fc2_w"], precision=hp) + p["fc2_b"])
    return jnp.dot(y, p["fc3_w"], precision=hp) + p["fc3_b"]


if __name__ == "__main__":
    key = jax.random.PRNGKey(0)
    kx, kparam = jax.random.split(key)
    # Architecture fixes channels=3 and spatial=32 (so the 16*5*5 flatten works);
    # batch 16 -> two grid steps of TB=8 images each.
    x = jax.random.normal(kx, (16, 3, 32, 32), jnp.float32)
    params = init_params(kparam)
    kernel_params = prepare_params(params)

    out = cnn_forward(x, kernel_params)
    jax.block_until_ready(out)
    assert out.shape == (16, 10) and out.dtype == jnp.float32

    # Sanity check vs the f32 reference (kernel uses bf16 MXU operands with f32
    # accumulation, so allow a loose tolerance).
    ref = reference_forward(x, params)
    err = float(jnp.max(jnp.abs(out - ref)))
    assert err < 5e-2, f"mismatch vs reference: {err}"

    print("KERNEL_OK")
</pallas_src>

<mosaic_0001>
module attributes {stable_mosaic.version = 11 : i64} {
  func.func @_cnn_kernel(%arg0: i32, %arg1: memref<8x40x96xbf16, #tpu.memory_space<vmem>>, %arg2: memref<480x168xbf16, #tpu.memory_space<vmem>>, %arg3: memref<1x168xf32, #tpu.memory_space<vmem>>, %arg4: memref<128x256xbf16, #tpu.memory_space<vmem>>, %arg5: memref<128x256xbf16, #tpu.memory_space<vmem>>, %arg6: memref<168x84xbf16, #tpu.memory_space<vmem>>, %arg7: memref<168x84xbf16, #tpu.memory_space<vmem>>, %arg8: memref<420x160xbf16, #tpu.memory_space<vmem>>, %arg9: memref<1x160xf32, #tpu.memory_space<vmem>>, %arg10: memref<64x128xbf16, #tpu.memory_space<vmem>>, %arg11: memref<64x128xbf16, #tpu.memory_space<vmem>>, %arg12: memref<160x80xbf16, #tpu.memory_space<vmem>>, %arg13: memref<160x80xbf16, #tpu.memory_space<vmem>>, %arg14: memref<5x8x64xbf16, #tpu.memory_space<vmem>>, %arg15: memref<5x80x120xbf16, #tpu.memory_space<vmem>>, %arg16: memref<1x120xf32, #tpu.memory_space<vmem>>, %arg17: memref<120x84xbf16, #tpu.memory_space<vmem>>, %arg18: memref<1x84xf32, #tpu.memory_space<vmem>>, %arg19: memref<84x10xbf16, #tpu.memory_space<vmem>>, %arg20: memref<1x10xf32, #tpu.memory_space<vmem>>, %arg21: memref<8x10xf32, #tpu.memory_space<vmem>>) attributes {dimension_semantics = [#tpu.dimension_semantics<parallel>], iteration_bounds = array<i64: 2>, scalar_prefetch = 0 : i64, scratch_operands = 0 : i64, tpu.core_type = #tpu.core_type<tc>, window_params = [{transform_indices = @transform_0, window_bounds = array<i64: 8, 40, 96>}, {pipeline_mode = #tpu.pipeline_mode<synchronous>, transform_indices = @transform_1, window_bounds = array<i64: 480, 168>}, {pipeline_mode = #tpu.pipeline_mode<synchronous>, transform_indices = @transform_2, window_bounds = array<i64: 1, 168>}, {pipeline_mode = #tpu.pipeline_mode<synchronous>, transform_indices = @transform_3, window_bounds = array<i64: 128, 256>}, {pipeline_mode = #tpu.pipeline_mode<synchronous>, transform_indices = @transform_4, window_bounds = array<i64: 128, 256>}, {pipeline_mode = #tpu.pipeline_mode<synchronous>, transform_indices = @transform_5, window_bounds = array<i64: 168, 84>}, {pipeline_mode = #tpu.pipeline_mode<synchronous>, transform_indices = @transform_6, window_bounds = array<i64: 168, 84>}, {pipeline_mode = #tpu.pipeline_mode<synchronous>, transform_indices = @transform_7, window_bounds = array<i64: 420, 160>}, {pipeline_mode = #tpu.pipeline_mode<synchronous>, transform_indices = @transform_8, window_bounds = array<i64: 1, 160>}, {pipeline_mode = #tpu.pipeline_mode<synchronous>, transform_indices = @transform_9, window_bounds = array<i64: 64, 128>}, {pipeline_mode = #tpu.pipeline_mode<synchronous>, transform_indices = @transform_10, window_bounds = array<i64: 64, 128>}, {pipeline_mode = #tpu.pipeline_mode<synchronous>, transform_indices = @transform_11, window_bounds = array<i64: 160, 80>}, {pipeline_mode = #tpu.pipeline_mode<synchronous>, transform_indices = @transform_12, window_bounds = array<i64: 160, 80>}, {pipeline_mode = #tpu.pipeline_mode<synchronous>, transform_indices = @transform_13, window_bounds = array<i64: 5, 8, 64>}, {pipeline_mode = #tpu.pipeline_mode<synchronous>, transform_indices = @transform_14, window_bounds = array<i64: 5, 80, 120>}, {pipeline_mode = #tpu.pipeline_mode<synchronous>, transform_indices = @transform_15, window_bounds = array<i64: 1, 120>}, {pipeline_mode = #tpu.pipeline_mode<synchronous>, transform_indices = @transform_16, window_bounds = array<i64: 120, 84>}, {pipeline_mode = #tpu.pipeline_mode<synchronous>, transform_indices = @transform_17, window_bounds = array<i64: 1, 84>}, {pipeline_mode = #tpu.pipeline_mode<synchronous>, transform_indices = @transform_18, window_bounds = array<i64: 84, 10>}, {pipeline_mode = #tpu.pipeline_mode<synchronous>, transform_indices = @transform_19, window_bounds = array<i64: 1, 10>}, {transform_indices = @transform_20, window_bounds = array<i64: 8, 10>}]} {
    %c0 = arith.constant 0 : index
    %c0_0 = arith.constant 0 : index
    %c0_1 = arith.constant 0 : index
    %0 = vector.load %arg1[%c0, %c0_0, %c0_1] : memref<8x40x96xbf16, #tpu.memory_space<vmem>>, vector<8x40x96xbf16>
    %1 = vector.extract_strided_slice %0 {offsets = [0, 0, 0], sizes = [8, 32, 96], strides = [1, 1, 1]} : vector<8x40x96xbf16> to vector<8x32x96xbf16>
    %2 = vector.extract_strided_slice %0 {offsets = [0, 1, 0], sizes = [8, 32, 96], strides = [1, 1, 1]} : vector<8x40x96xbf16> to vector<8x32x96xbf16>
    %3 = vector.extract_strided_slice %0 {offsets = [0, 2, 0], sizes = [8, 32, 96], strides = [1, 1, 1]} : vector<8x40x96xbf16> to vector<8x32x96xbf16>
    %4 = vector.extract_strided_slice %0 {offsets = [0, 3, 0], sizes = [8, 32, 96], strides = [1, 1, 1]} : vector<8x40x96xbf16> to vector<8x32x96xbf16>
    %5 = vector.extract_strided_slice %0 {offsets = [0, 4, 0], sizes = [8, 32, 96], strides = [1, 1, 1]} : vector<8x40x96xbf16> to vector<8x32x96xbf16>
    %6 = tpu.concatenate %1, %2, %3, %4, %5 in 2 : vector<8x32x96xbf16>, vector<8x32x96xbf16>, vector<8x32x96xbf16>, vector<8x32x96xbf16>, vector<8x32x96xbf16> -> vector<8x32x480xbf16>
    %7 = vector.shape_cast %6 : vector<8x32x480xbf16> to vector<256x480xbf16>
    %c0_2 = arith.constant 0 : index
    %c0_3 = arith.constant 0 : index
    %8 = vector.load %arg2[%c0_2, %c0_3] : memref<480x168xbf16, #tpu.memory_space<vmem>>, vector<480x168xbf16>
    %cst = arith.constant dense<0.000000e+00> : vector<256x168xf32>
    %9 = tpu.matmul %7, %8, %cst {dimension_numbers = #tpu.dot_dimension_numbers<[1], [0], [0], [1], [0, 0, 1, 1], [], []>} : vector<256x480xbf16>, vector<480x168xbf16>, vector<256x168xf32> -> vector<256x168xf32>
    %c0_4 = arith.constant 0 : index
    %c0_5 = arith.constant 0 : index
    %10 = vector.load %arg3[%c0_4, %c0_5] : memref<1x168xf32, #tpu.memory_space<vmem>>, vector<1x168xf32>
    %11 = vector.broadcast %10 : vector<1x168xf32> to vector<256x168xf32>
    %12 = arith.addf %9, %11 : vector<256x168xf32>
    %cst_6 = arith.constant 0.000000e+00 : f32
    %13 = vector.broadcast %cst_6 : f32 to vector<256x168xf32>
    %14 = arith.maximumf %12, %13 : vector<256x168xf32>
    %15 = arith.truncf %14 : vector<256x168xf32> to vector<256x168xbf16>
    %c0_7 = arith.constant 0 : index
    %c0_8 = arith.constant 0 : index
    %16 = vector.load %arg4[%c0_7, %c0_8] : memref<128x256xbf16, #tpu.memory_space<vmem>>, vector<128x256xbf16>
    %cst_9 = arith.constant dense<0.000000e+00> : vector<128x168xf32>
    %17 = tpu.matmul %16, %15, %cst_9 {dimension_numbers = #tpu.dot_dimension_numbers<[1], [0], [0], [1], [0, 0, 1, 1], [], []>} : vector<128x256xbf16>, vector<256x168xbf16>, vector<128x168xf32> -> vector<128x168xf32>
    %c0_10 = arith.constant 0 : index
    %c0_11 = arith.constant 0 : index
    %18 = vector.load %arg5[%c0_10, %c0_11] : memref<128x256xbf16, #tpu.memory_space<vmem>>, vector<128x256xbf16>
    %cst_12 = arith.constant dense<0.000000e+00> : vector<128x168xf32>
    %19 = tpu.matmul %18, %15, %cst_12 {dimension_numbers = #tpu.dot_dimension_numbers<[1], [0], [0], [1], [0, 0, 1, 1], [], []>} : vector<128x256xbf16>, vector<256x168xbf16>, vector<128x168xf32> -> vector<128x168xf32>
    %20 = arith.maximumf %17, %19 : vector<128x168xf32>
    %21 = arith.truncf %20 : vector<128x168xf32> to vector<128x168xbf16>
    %c0_13 = arith.constant 0 : index
    %c0_14 = arith.constant 0 : index
    %22 = vector.load %arg6[%c0_13, %c0_14] : memref<168x84xbf16, #tpu.memory_space<vmem>>, vector<168x84xbf16>
    %cst_15 = arith.constant dense<0.000000e+00> : vector<128x84xf32>
    %23 = tpu.matmul %21, %22, %cst_15 {dimension_numbers = #tpu.dot_dimension_numbers<[1], [0], [0], [1], [0, 0, 1, 1], [], []>} : vector<128x168xbf16>, vector<168x84xbf16>, vector<128x84xf32> -> vector<128x84xf32>
    %c0_16 = arith.constant 0 : index
    %c0_17 = arith.constant 0 : index
    %24 = vector.load %arg7[%c0_16, %c0_17] : memref<168x84xbf16, #tpu.memory_space<vmem>>, vector<168x84xbf16>
    %cst_18 = arith.constant dense<0.000000e+00> : vector<128x84xf32>
    %25 = tpu.matmul %21, %24, %cst_18 {dimension_numbers = #tpu.dot_dimension_numbers<[1], [0], [0], [1], [0, 0, 1, 1], [], []>} : vector<128x168xbf16>, vector<168x84xbf16>, vector<128x84xf32> -> vector<128x84xf32>
    %26 = arith.maximumf %23, %25 : vector<128x84xf32>
    %27 = arith.truncf %26 : vector<128x84xf32> to vector<128x84xbf16>
    %28 = vector.shape_cast %27 : vector<128x84xbf16> to vector<8x16x84xbf16>
    %cst_19 = arith.constant 0.000000e+00 : bf16
    %29 = vector.broadcast %cst_19 : bf16 to vector<8x8x84xbf16>
    %30 = tpu.concatenate %28, %29 in 1 : vector<8x16x84xbf16>, vector<8x8x84xbf16> -> vector<8x24x84xbf16>
    %31 = vector.extract_strided_slice %30 {offsets = [0, 0, 0], sizes = [8, 16, 84], strides = [1, 1, 1]} : vector<8x24x84xbf16> to vector<8x16x84xbf16>
    %32 = vector.extract_strided_slice %30 {offsets = [0, 1, 0], sizes = [8, 16, 84], strides = [1, 1, 1]} : vector<8x24x84xbf16> to vector<8x16x84xbf16>
    %33 = vector.extract_strided_slice %30 {offsets = [0, 2, 0], sizes = [8, 16, 84], strides = [1, 1, 1]} : vector<8x24x84xbf16> to vector<8x16x84xbf16>
    %34 = vector.extract_strided_slice %30 {offsets = [0, 3, 0], sizes = [8, 16, 84], strides = [1, 1, 1]} : vector<8x24x84xbf16> to vector<8x16x84xbf16>
    %35 = vector.extract_strided_slice %30 {offsets = [0, 4, 0], sizes = [8, 16, 84], strides = [1, 1, 1]} : vector<8x24x84xbf16> to vector<8x16x84xbf16>
    %36 = tpu.concatenate %31, %32, %33, %34, %35 in 2 : vector<8x16x84xbf16>, vector<8x16x84xbf16>, vector<8x16x84xbf16>, vector<8x16x84xbf16>, vector<8x16x84xbf16> -> vector<8x16x420xbf16>
    %37 = vector.shape_cast %36 : vector<8x16x420xbf16> to vector<128x420xbf16>
    %c0_20 = arith.constant 0 : index
    %c0_21 = arith.constant 0 : index
    %38 = vector.load %arg8[%c0_20, %c0_21] : memref<420x160xbf16, #tpu.memory_space<vmem>>, vector<420x160xbf16>
    %cst_22 = arith.constant dense<0.000000e+00> : vector<128x160xf32>
    %39 = tpu.matmul %37, %38, %cst_22 {dimension_numbers = #tpu.dot_dimension_numbers<[1], [0], [0], [1], [0, 0, 1, 1], [], []>} : vector<128x420xbf16>, vector<420x160xbf16>, vector<128x160xf32> -> vector<128x160xf32>
    %c0_23 = arith.constant 0 : index
    %c0_24 = arith.constant 0 : index
    %40 = vector.load %arg9[%c0_23, %c0_24] : memref<1x160xf32, #tpu.memory_space<vmem>>, vector<1x160xf32>
    %41 = vector.broadcast %40 : vector<1x160xf32> to vector<128x160xf32>
    %42 = arith.addf %39, %41 : vector<128x160xf32>
    %cst_25 = arith.constant 0.000000e+00 : f32
    %43 = vector.broadcast %cst_25 : f32 to vector<128x160xf32>
    %44 = arith.maximumf %42, %43 : vector<128x160xf32>
    %45 = arith.truncf %44 : vector<128x160xf32> to vector<128x160xbf16>
    %c0_26 = arith.constant 0 : index
    %c0_27 = arith.constant 0 : index
    %46 = vector.load %arg10[%c0_26, %c0_27] : memref<64x128xbf16, #tpu.memory_space<vmem>>, vector<64x128xbf16>
    %cst_28 = arith.constant dense<0.000000e+00> : vector<64x160xf32>
    %47 = tpu.matmul %46, %45, %cst_28 {dimension_numbers = #tpu.dot_dimension_numbers<[1], [0], [0], [1], [0, 0, 1, 1], [], []>} : vector<64x128xbf16>, vector<128x160xbf16>, vector<64x160xf32> -> vector<64x160xf32>
    %c0_29 = arith.constant 0 : index
    %c0_30 = arith.constant 0 : index
    %48 = vector.load %arg11[%c0_29, %c0_30] : memref<64x128xbf16, #tpu.memory_space<vmem>>, vector<64x128xbf16>
    %cst_31 = arith.constant dense<0.000000e+00> : vector<64x160xf32>
    %49 = tpu.matmul %48, %45, %cst_31 {dimension_numbers = #tpu.dot_dimension_numbers<[1], [0], [0], [1], [0, 0, 1, 1], [], []>} : vector<64x128xbf16>, vector<128x160xbf16>, vector<64x160xf32> -> vector<64x160xf32>
    %50 = arith.maximumf %47, %49 : vector<64x160xf32>
    %51 = arith.truncf %50 : vector<64x160xf32> to vector<64x160xbf16>
    %c0_32 = arith.constant 0 : index
    %c0_33 = arith.constant 0 : index
    %52 = vector.load %arg12[%c0_32, %c0_33] : memref<160x80xbf16, #tpu.memory_space<vmem>>, vector<160x80xbf16>
    %cst_34 = arith.constant dense<0.000000e+00> : vector<64x80xf32>
    %53 = tpu.matmul %51, %52, %cst_34 {dimension_numbers = #tpu.dot_dimension_numbers<[1], [0], [0], [1], [0, 0, 1, 1], [], []>} : vector<64x160xbf16>, vector<160x80xbf16>, vector<64x80xf32> -> vector<64x80xf32>
    %c0_35 = arith.constant 0 : index
    %c0_36 = arith.constant 0 : index
    %54 = vector.load %arg13[%c0_35, %c0_36] : memref<160x80xbf16, #tpu.memory_space<vmem>>, vector<160x80xbf16>
    %cst_37 = arith.constant dense<0.000000e+00> : vector<64x80xf32>
    %55 = tpu.matmul %51, %54, %cst_37 {dimension_numbers = #tpu.dot_dimension_numbers<[1], [0], [0], [1], [0, 0, 1, 1], [], []>} : vector<64x160xbf16>, vector<160x80xbf16>, vector<64x80xf32> -> vector<64x80xf32>
    %56 = arith.maximumf %53, %55 : vector<64x80xf32>
    %57 = arith.truncf %56 : vector<64x80xf32> to vector<64x80xbf16>
    %cst_38 = arith.constant 0.000000e+00 : f32
    %58 = vector.broadcast %cst_38 : f32 to vector<8x120xf32>
    %c0_39 = arith.constant 0 : index
    %c0_40 = arith.constant 0 : index
    %c0_41 = arith.constant 0 : index
    %59 = vector.load %arg14[%c0_39, %c0_40, %c0_41] : memref<5x8x64xbf16, #tpu.memory_space<vmem>>, vector<1x8x64xbf16>
    %60 = vector.shape_cast %59 : vector<1x8x64xbf16> to vector<8x64xbf16>
    %cst_42 = arith.constant dense<0.000000e+00> : vector<8x80xf32>
    %61 = tpu.matmul %60, %57, %cst_42 {dimension_numbers = #tpu.dot_dimension_numbers<[1], [0], [0], [1], [0, 0, 1, 1], [], []>} : vector<8x64xbf16>, vector<64x80xbf16>, vector<8x80xf32> -> vector<8x80xf32>
    %62 = arith.truncf %61 : vector<8x80xf32> to vector<8x80xbf16>
    %c0_43 = arith.constant 0 : index
    %c0_44 = arith.constant 0 : index
    %c0_45 = arith.constant 0 : index
    %63 = vector.load %arg15[%c0_43, %c0_44, %c0_45] : memref<5x80x120xbf16, #tpu.memory_space<vmem>>, vector<1x80x120xbf16>
    %64 = vector.shape_cast %63 : vector<1x80x120xbf16> to vector<80x120xbf16>
    %cst_46 = arith.constant dense<0.000000e+00> : vector<8x120xf32>
    %65 = tpu.matmul %62, %64, %cst_46 {dimension_numbers = #tpu.dot_dimension_numbers<[1], [0], [0], [1], [0, 0, 1, 1], [], []>} : vector<8x80xbf16>, vector<80x120xbf16>, vector<8x120xf32> -> vector<8x120xf32>
    %66 = arith.addf %58, %65 : vector<8x120xf32>
    %c1 = arith.constant 1 : index
    %c0_47 = arith.constant 0 : index
    %c0_48 = arith.constant 0 : index
    %67 = vector.load %arg14[%c1, %c0_47, %c0_48] : memref<5x8x64xbf16, #tpu.memory_space<vmem>>, vector<1x8x64xbf16>
    %68 = vector.shape_cast %67 : vector<1x8x64xbf16> to vector<8x64xbf16>
    %cst_49 = arith.constant dense<0.000000e+00> : vector<8x80xf32>
    %69 = tpu.matmul %68, %57, %cst_49 {dimension_numbers = #tpu.dot_dimension_numbers<[1], [0], [0], [1], [0, 0, 1, 1], [], []>} : vector<8x64xbf16>, vector<64x80xbf16>, vector<8x80xf32> -> vector<8x80xf32>
    %70 = arith.truncf %69 : vector<8x80xf32> to vector<8x80xbf16>
    %c1_50 = arith.constant 1 : index
    %c0_51 = arith.constant 0 : index
    %c0_52 = arith.constant 0 : index
    %71 = vector.load %arg15[%c1_50, %c0_51, %c0_52] : memref<5x80x120xbf16, #tpu.memory_space<vmem>>, vector<1x80x120xbf16>
    %72 = vector.shape_cast %71 : vector<1x80x120xbf16> to vector<80x120xbf16>
    %cst_53 = arith.constant dense<0.000000e+00> : vector<8x120xf32>
    %73 = tpu.matmul %70, %72, %cst_53 {dimension_numbers = #tpu.dot_dimension_numbers<[1], [0], [0], [1], [0, 0, 1, 1], [], []>} : vector<8x80xbf16>, vector<80x120xbf16>, vector<8x120xf32> -> vector<8x120xf32>
    %74 = arith.addf %66, %73 : vector<8x120xf32>
    %c2 = arith.constant 2 : index
    %c0_54 = arith.constant 0 : index
    %c0_55 = arith.constant 0 : index
    %75 = vector.load %arg14[%c2, %c0_54, %c0_55] : memref<5x8x64xbf16, #tpu.memory_space<vmem>>, vector<1x8x64xbf16>
    %76 = vector.shape_cast %75 : vector<1x8x64xbf16> to vector<8x64xbf16>
    %cst_56 = arith.constant dense<0.000000e+00> : vector<8x80xf32>
    %77 = tpu.matmul %76, %57, %cst_56 {dimension_numbers = #tpu.dot_dimension_numbers<[1], [0], [0], [1], [0, 0, 1, 1], [], []>} : vector<8x64xbf16>, vector<64x80xbf16>, vector<8x80xf32> -> vector<8x80xf32>
    %78 = arith.truncf %77 : vector<8x80xf32> to vector<8x80xbf16>
    %c2_57 = arith.constant 2 : index
    %c0_58 = arith.constant 0 : index
    %c0_59 = arith.constant 0 : index
    %79 = vector.load %arg15[%c2_57, %c0_58, %c0_59] : memref<5x80x120xbf16, #tpu.memory_space<vmem>>, vector<1x80x120xbf16>
    %80 = vector.shape_cast %79 : vector<1x80x120xbf16> to vector<80x120xbf16>
    %cst_60 = arith.constant dense<0.000000e+00> : vector<8x120xf32>
    %81 = tpu.matmul %78, %80, %cst_60 {dimension_numbers = #tpu.dot_dimension_numbers<[1], [0], [0], [1], [0, 0, 1, 1], [], []>} : vector<8x80xbf16>, vector<80x120xbf16>, vector<8x120xf32> -> vector<8x120xf32>
    %82 = arith.addf %74, %81 : vector<8x120xf32>
    %c3 = arith.constant 3 : index
    %c0_61 = arith.constant 0 : index
    %c0_62 = arith.constant 0 : index
    %83 = vector.load %arg14[%c3, %c0_61, %c0_62] : memref<5x8x64xbf16, #tpu.memory_space<vmem>>, vector<1x8x64xbf16>
    %84 = vector.shape_cast %83 : vector<1x8x64xbf16> to vector<8x64xbf16>
    %cst_63 = arith.constant dense<0.000000e+00> : vector<8x80xf32>
    %85 = tpu.matmul %84, %57, %cst_63 {dimension_numbers = #tpu.dot_dimension_numbers<[1], [0], [0], [1], [0, 0, 1, 1], [], []>} : vector<8x64xbf16>, vector<64x80xbf16>, vector<8x80xf32> -> vector<8x80xf32>
    %86 = arith.truncf %85 : vector<8x80xf32> to vector<8x80xbf16>
    %c3_64 = arith.constant 3 : index
    %c0_65 = arith.constant 0 : index
    %c0_66 = arith.constant 0 : index
    %87 = vector.load %arg15[%c3_64, %c0_65, %c0_66] : memref<5x80x120xbf16, #tpu.memory_space<vmem>>, vector<1x80x120xbf16>
    %88 = vector.shape_cast %87 : vector<1x80x120xbf16> to vector<80x120xbf16>
    %cst_67 = arith.constant dense<0.000000e+00> : vector<8x120xf32>
    %89 = tpu.matmul %86, %88, %cst_67 {dimension_numbers = #tpu.dot_dimension_numbers<[1], [0], [0], [1], [0, 0, 1, 1], [], []>} : vector<8x80xbf16>, vector<80x120xbf16>, vector<8x120xf32> -> vector<8x120xf32>
    %90 = arith.addf %82, %89 : vector<8x120xf32>
    %c4 = arith.constant 4 : index
    %c0_68 = arith.constant 0 : index
    %c0_69 = arith.constant 0 : index
    %91 = vector.load %arg14[%c4, %c0_68, %c0_69] : memref<5x8x64xbf16, #tpu.memory_space<vmem>>, vector<1x8x64xbf16>
    %92 = vector.shape_cast %91 : vector<1x8x64xbf16> to vector<8x64xbf16>
    %cst_70 = arith.constant dense<0.000000e+00> : vector<8x80xf32>
    %93 = tpu.matmul %92, %57, %cst_70 {dimension_numbers = #tpu.dot_dimension_numbers<[1], [0], [0], [1], [0, 0, 1, 1], [], []>} : vector<8x64xbf16>, vector<64x80xbf16>, vector<8x80xf32> -> vector<8x80xf32>
    %94 = arith.truncf %93 : vector<8x80xf32> to vector<8x80xbf16>
    %c4_71 = arith.constant 4 : index
    %c0_72 = arith.constant 0 : index
    %c0_73 = arith.constant 0 : index
    %95 = vector.load %arg15[%c4_71, %c0_72, %c0_73] : memref<5x80x120xbf16, #tpu.memory_space<vmem>>, vector<1x80x120xbf16>
    %96 = vector.shape_cast %95 : vector<1x80x120xbf16> to vector<80x120xbf16>
    %cst_74 = arith.constant dense<0.000000e+00> : vector<8x120xf32>
    %97 = tpu.matmul %94, %96, %cst_74 {dimension_numbers = #tpu.dot_dimension_numbers<[1], [0], [0], [1], [0, 0, 1, 1], [], []>} : vector<8x80xbf16>, vector<80x120xbf16>, vector<8x120xf32> -> vector<8x120xf32>
    %98 = arith.addf %90, %97 : vector<8x120xf32>
    %c0_75 = arith.constant 0 : index
    %c0_76 = arith.constant 0 : index
    %99 = vector.load %arg16[%c0_75, %c0_76] : memref<1x120xf32, #tpu.memory_space<vmem>>, vector<1x120xf32>
    %100 = vector.broadcast %99 : vector<1x120xf32> to vector<8x120xf32>
    %101 = arith.addf %98, %100 : vector<8x120xf32>
    %cst_77 = arith.constant 0.000000e+00 : f32
    %102 = vector.broadcast %cst_77 : f32 to vector<8x120xf32>
    %103 = arith.maximumf %101, %102 : vector<8x120xf32>
    %104 = arith.truncf %103 : vector<8x120xf32> to vector<8x120xbf16>
    %c0_78 = arith.constant 0 : index
    %c0_79 = arith.constant 0 : index
    %105 = vector.load %arg17[%c0_78, %c0_79] : memref<120x84xbf16, #tpu.memory_space<vmem>>, vector<120x84xbf16>
    %cst_80 = arith.constant dense<0.000000e+00> : vector<8x84xf32>
    %106 = tpu.matmul %104, %105, %cst_80 {dimension_numbers = #tpu.dot_dimension_numbers<[1], [0], [0], [1], [0, 0, 1, 1], [], []>} : vector<8x120xbf16>, vector<120x84xbf16>, vector<8x84xf32> -> vector<8x84xf32>
    %c0_81 = arith.constant 0 : index
    %c0_82 = arith.constant 0 : index
    %107 = vector.load %arg18[%c0_81, %c0_82] : memref<1x84xf32, #tpu.memory_space<vmem>>, vector<1x84xf32>
    %108 = vector.broadcast %107 : vector<1x84xf32> to vector<8x84xf32>
    %109 = arith.addf %106, %108 : vector<8x84xf32>
    %cst_83 = arith.constant 0.000000e+00 : f32
    %110 = vector.broadcast %cst_83 : f32 to vector<8x84xf32>
    %111 = arith.maximumf %109, %110 : vector<8x84xf32>
    %112 = arith.truncf %111 : vector<8x84xf32> to vector<8x84xbf16>
    %c0_84 = arith.constant 0 : index
    %c0_85 = arith.constant 0 : index
    %113 = vector.load %arg19[%c0_84, %c0_85] : memref<84x10xbf16, #tpu.memory_space<vmem>>, vector<84x10xbf16>
    %cst_86 = arith.constant dense<0.000000e+00> : vector<8x10xf32>
    %114 = tpu.matmul %112, %113, %cst_86 {dimension_numbers = #tpu.dot_dimension_numbers<[1], [0], [0], [1], [0, 0, 1, 1], [], []>} : vector<8x84xbf16>, vector<84x10xbf16>, vector<8x10xf32> -> vector<8x10xf32>
    %c0_87 = arith.constant 0 : index
    %c0_88 = arith.constant 0 : index
    %115 = vector.load %arg20[%c0_87, %c0_88] : memref<1x10xf32, #tpu.memory_space<vmem>>, vector<1x10xf32>
    %116 = vector.broadcast %115 : vector<1x10xf32> to vector<8x10xf32>
    %117 = arith.addf %114, %116 : vector<8x10xf32>
    %c0_89 = arith.constant 0 : index
    %c0_90 = arith.constant 0 : index
    %118 = vector.load %arg21[%c0_89, %c0_90] : memref<8x10xf32, #tpu.memory_space<vmem>>, vector<8x10xf32>
    tpu.vector_store %arg21[%c0_89, %c0_90], %117 {strides = array<i32>} : memref<8x10xf32, #tpu.memory_space<vmem>>, vector<8x10xf32>,
    return
  }
  func.func @transform_0(%arg0: i32) -> (i32, i32, i32) {
    %c0_i32 = arith.constant 0 : i32
    %c0_i32_0 = arith.constant 0 : i32
    %c0_i32_1 = arith.constant 0 : i32
    return %arg0, %c0_i32, %c0_i32_0 : i32, i32, i32
  }
  func.func @transform_1(%arg0: i32) -> (i32, i32) {
    %c0_i32 = arith.constant 0 : i32
    %c0_i32_0 = arith.constant 0 : i32
    %c0_i32_1 = arith.constant 0 : i32
    return %c0_i32, %c0_i32_0 : i32, i32
  }
  func.func @transform_2(%arg0: i32) -> (i32, i32) {
    %c0_i32 = arith.constant 0 : i32
    %c0_i32_0 = arith.constant 0 : i32
    %c0_i32_1 = arith.constant 0 : i32
    return %c0_i32, %c0_i32_0 : i32, i32
  }
  func.func @transform_3(%arg0: i32) -> (i32, i32) {
    %c0_i32 = arith.constant 0 : i32
    %c0_i32_0 = arith.constant 0 : i32
    %c0_i32_1 = arith.constant 0 : i32
    return %c0_i32, %c0_i32_0 : i32, i32
  }
  func.func @transform_4(%arg0: i32) -> (i32, i32) {
    %c0_i32 = arith.constant 0 : i32
    %c0_i32_0 = arith.constant 0 : i32
    %c0_i32_1 = arith.constant 0 : i32
    return %c0_i32, %c0_i32_0 : i32, i32
  }
  func.func @transform_5(%arg0: i32) -> (i32, i32) {
    %c0_i32 = arith.constant 0 : i32
    %c0_i32_0 = arith.constant 0 : i32
    %c0_i32_1 = arith.constant 0 : i32
    return %c0_i32, %c0_i32_0 : i32, i32
  }
  func.func @transform_6(%arg0: i32) -> (i32, i32) {
    %c0_i32 = arith.constant 0 : i32
    %c0_i32_0 = arith.constant 0 : i32
    %c0_i32_1 = arith.constant 0 : i32
    return %c0_i32, %c0_i32_0 : i32, i32
  }
  func.func @transform_7(%arg0: i32) -> (i32, i32) {
    %c0_i32 = arith.constant 0 : i32
    %c0_i32_0 = arith.constant 0 : i32
    %c0_i32_1 = arith.constant 0 : i32
    return %c0_i32, %c0_i32_0 : i32, i32
  }
  func.func @transform_8(%arg0: i32) -> (i32, i32) {
    %c0_i32 = arith.constant 0 : i32
    %c0_i32_0 = arith.constant 0 : i32
    %c0_i32_1 = arith.constant 0 : i32
    return %c0_i32, %c0_i32_0 : i32, i32
  }
  func.func @transform_9(%arg0: i32) -> (i32, i32) {
    %c0_i32 = arith.constant 0 : i32
    %c0_i32_0 = arith.constant 0 : i32
    %c0_i32_1 = arith.constant 0 : i32
    return %c0_i32, %c0_i32_0 : i32, i32
  }
  func.func @transform_10(%arg0: i32) -> (i32, i32) {
    %c0_i32 = arith.constant 0 : i32
    %c0_i32_0 = arith.constant 0 : i32
    %c0_i32_1 = arith.constant 0 : i32
    return %c0_i32, %c0_i32_0 : i32, i32
  }
  func.func @transform_11(%arg0: i32) -> (i32, i32) {
    %c0_i32 = arith.constant 0 : i32
    %c0_i32_0 = arith.constant 0 : i32
    %c0_i32_1 = arith.constant 0 : i32
    return %c0_i32, %c0_i32_0 : i32, i32
  }
  func.func @transform_12(%arg0: i32) -> (i32, i32) {
    %c0_i32 = arith.constant 0 : i32
    %c0_i32_0 = arith.constant 0 : i32
    %c0_i32_1 = arith.constant 0 : i32
    return %c0_i32, %c0_i32_0 : i32, i32
  }
  func.func @transform_13(%arg0: i32) -> (i32, i32, i32) {
    %c0_i32 = arith.constant 0 : i32
    %c0_i32_0 = arith.constant 0 : i32
    %c0_i32_1 = arith.constant 0 : i32
    %c0_i32_2 = arith.constant 0 : i32
    return %c0_i32, %c0_i32_0, %c0_i32_1 : i32, i32, i32
  }
  func.func @transform_14(%arg0: i32) -> (i32, i32, i32) {
    %c0_i32 = arith.constant 0 : i32
    %c0_i32_0 = arith.constant 0 : i32
    %c0_i32_1 = arith.constant 0 : i32
    %c0_i32_2 = arith.constant 0 : i32
    return %c0_i32, %c0_i32_0, %c0_i32_1 : i32, i32, i32
  }
  func.func @transform_15(%arg0: i32) -> (i32, i32) {
    %c0_i32 = arith.constant 0 : i32
    %c0_i32_0 = arith.constant 0 : i32
    %c0_i32_1 = arith.constant 0 : i32
    return %c0_i32, %c0_i32_0 : i32, i32
  }
  func.func @transform_16(%arg0: i32) -> (i32, i32) {
    %c0_i32 = arith.constant 0 : i32
    %c0_i32_0 = arith.constant 0 : i32
    %c0_i32_1 = arith.constant 0 : i32
    return %c0_i32, %c0_i32_0 : i32, i32
  }
  func.func @transform_17(%arg0: i32) -> (i32, i32) {
    %c0_i32 = arith.constant 0 : i32
    %c0_i32_0 = arith.constant 0 : i32
    %c0_i32_1 = arith.constant 0 : i32
    return %c0_i32, %c0_i32_0 : i32, i32
  }
  func.func @transform_18(%arg0: i32) -> (i32, i32) {
    %c0_i32 = arith.constant 0 : i32
    %c0_i32_0 = arith.constant 0 : i32
    %c0_i32_1 = arith.constant 0 : i32
    return %c0_i32, %c0_i32_0 : i32, i32
  }
  func.func @transform_19(%arg0: i32) -> (i32, i32) {
    %c0_i32 = arith.constant 0 : i32
    %c0_i32_0 = arith.constant 0 : i32
    %c0_i32_1 = arith.constant 0 : i32
    return %c0_i32, %c0_i32_0 : i32, i32
  }
  func.func @transform_20(%arg0: i32) -> (i32, i32) {
    %c0_i32 = arith.constant 0 : i32
    %c0_i32_0 = arith.constant 0 : i32
    return %arg0, %c0_i32 : i32, i32
  }
}

</mosaic_0001>

<llo_original>
// kernel: cnn_forward.1
$region0: #{cnn_forward.1}
  #allocation0 [shape = 'u32[]', space=smem, size = 0x4, offset = 0x4, fixed_abs, tag = 'smem constant byte address 0x4 - core index']
  #allocation1 [shape = 'u32[144,128]{1,0:T(1,128)}', space=vmem, size = 0x12000, scoped, tag = 'internal scratch']
  %s0 = inlined_call_operand.vmem [shape: bf16[16,40,96], index: 0, kind: input, shape index: {}]
  %s1 = inlined_call_operand.vmem [shape: bf16[480,168], index: 1, kind: input, shape index: {}]
  %s2 = inlined_call_operand.vmem [shape: f32[1,168], index: 2, kind: input, shape index: {}]
  %s3 = inlined_call_operand.vmem [shape: bf16[128,256], index: 3, kind: input, shape index: {}]
  %s4 = inlined_call_operand.vmem [shape: bf16[128,256], index: 4, kind: input, shape index: {}]
  %s5 = inlined_call_operand.vmem [shape: bf16[168,84], index: 5, kind: input, shape index: {}]
  %s6 = inlined_call_operand.vmem [shape: bf16[168,84], index: 6, kind: input, shape index: {}]
  %s7 = inlined_call_operand.vmem [shape: bf16[420,160], index: 7, kind: input, shape index: {}]
  %s8 = inlined_call_operand.vmem [shape: f32[1,160], index: 8, kind: input, shape index: {}]
  %s9 = inlined_call_operand.vmem [shape: bf16[64,128], index: 9, kind: input, shape index: {}]
  %s10 = inlined_call_operand.vmem [shape: bf16[64,128], index: 10, kind: input, shape index: {}]
  %s11 = inlined_call_operand.vmem [shape: bf16[160,80], index: 11, kind: input, shape index: {}]
  %s12 = inlined_call_operand.vmem [shape: bf16[160,80], index: 12, kind: input, shape index: {}]
  %s13 = inlined_call_operand.vmem [shape: bf16[5,8,64], index: 13, kind: input, shape index: {}]
  %s14 = inlined_call_operand.vmem [shape: bf16[5,80,120], index: 14, kind: input, shape index: {}]
  %s15 = inlined_call_operand.vmem [shape: f32[1,120], index: 15, kind: input, shape index: {}]
  %s16 = inlined_call_operand.vmem [shape: bf16[120,84], index: 16, kind: input, shape index: {}]
  %s17 = inlined_call_operand.vmem [shape: f32[1,84], index: 17, kind: input, shape index: {}]
  %s18 = inlined_call_operand.vmem [shape: bf16[84,10], index: 18, kind: input, shape index: {}]
  %s19 = inlined_call_operand.vmem [shape: f32[1,10], index: 19, kind: input, shape index: {}]
  %s20 = inlined_call_operand.hbm [shape: f32[16,10], index: 20, kind: output, shape index: {}]
  %s21 = sld [smem:[#allocation0]]
  $region113: #{cnn_forward.1} parent=0
    _
  %s23 = ssub.s32 1, %s21
  %s24 = scalar_select 0, %s23, %s21
  $region1: #{cnn_forward.1} parent=0
    #allocation2 [shape = 'u8[8192]{0}', space=vmem, size = 0x2000, scoped, tag = 'output window, operand 0']
    #allocation3 [shape = 's32[2]{0}', space=sflag, size = 0x8, scoped, tag = 'scoped memory for cnn_forward.1']
    %25 = vsyncpa [#allocation3], 0
    %s26 = scalar_lea.sflag [#allocation3], 1
    %27 = vsyncpa %s26, 0
    loop: start=0, step=1, limit=4
    $region2: #{cnn_forward.1} parent=1 // loop_pre_header
      _
    $region3: #{cnn_forward.1} parent=1 // loop_header
      %s29 = sphi 0, %s33
      %p30 = scmp.ge.s32.totalorder %s29, 4
      %s39 = sphi 0, %s41
      %s42 = sphi 0, %s39
      %s43 = sphi 0, %s42
      %s59 = sphi 0, %s43
      %s63 = sphi 0, %s63
      %s65 = sphi 0, %s63
      %s66 = sphi 0, %s65
      %s80 = sphi 0, %s66
      %s84 = sphi 0, %s84
      %s86 = sphi 0, %s84
      %s87 = sphi 0, %s86
      %s101 = sphi 0, %s87
      %s105 = sphi 0, %s105
      %s107 = sphi 0, %s105
      %s108 = sphi 0, %s107
      %s122 = sphi 0, %s108
      %s126 = sphi 0, %s126
      %s128 = sphi 0, %s126
      %s129 = sphi 0, %s128
      %s143 = sphi 0, %s129
      %s147 = sphi 0, %s147
      %s149 = sphi 0, %s147
      %s150 = sphi 0, %s149
      %s164 = sphi 0, %s150
      %s168 = sphi 0, %s168
      %s170 = sphi 0, %s168
      %s171 = sphi 0, %s170
      %s185 = sphi 0, %s171
      %s189 = sphi 0, %s189
      %s191 = sphi 0, %s189
      %s192 = sphi 0, %s191
      %s206 = sphi 0, %s192
      %s210 = sphi 0, %s210
      %s212 = sphi 0, %s210
      %s213 = sphi 0, %s212
      %s227 = sphi 0, %s213
      %s231 = sphi 0, %s231
      %s233 = sphi 0, %s231
      %s234 = sphi 0, %s233
      %s248 = sphi 0, %s234
      %s252 = sphi 0, %s252
      %s254 = sphi 0, %s252
      %s255 = sphi 0, %s254
      %s269 = sphi 0, %s255
      %s273 = sphi 0, %s273
      %s275 = sphi 0, %s273
      %s276 = sphi 0, %s275
      %s290 = sphi 0, %s276
      %s294 = sphi 0, %s294
      %s296 = sphi 0, %s294
      %s297 = sphi 0, %s296
      %s311 = sphi 0, %s297
      %s315 = sphi 0, %s315
      %s317 = sphi 0, %s315
      %s318 = sphi 0, %s317
      %s332 = sphi 0, %s318
      %s336 = sphi 0, %s336
      %s338 = sphi 0, %s336
      %s339 = sphi 0, %s338
      %s353 = sphi 0, %s339
      %s357 = sphi 0, %s357
      %s359 = sphi 0, %s357
      %s360 = sphi 0, %s359
      %s374 = sphi 0, %s360
      %s378 = sphi 0, %s378
      %s380 = sphi 0, %s378
      %s381 = sphi 0, %s380
      %s395 = sphi 0, %s381
      %s399 = sphi 0, %s399
      %s401 = sphi 0, %s399
      %s402 = sphi 0, %s401
      %s416 = sphi 0, %s402
      %s420 = sphi 0, %s420
      %s422 = sphi 0, %s420
      %s423 = sphi 0, %s422
      %s437 = sphi 0, %s423
      %s441 = sphi 0, %s441
      %s443 = sphi 0, %s441
      %s444 = sphi 0, %s443
      %s458 = sphi 0, %s444
      %s464 = sphi 0, %s466
      %s467 = sphi 0, %s464
      %s468 = sphi 0, %s467
      %s484 = sphi 0, %s468
    $region4: #{cnn_forward.1} parent=1 // loop_header_branch
      %32 = sbr.rel (%p30) target = $region8
    $region5: #{cnn_forward.1} parent=1 // loop_body
      %s34 = ssub.s32 %s29, 1
      %s35 = ssub.s32 %s29, 2
      %s36 = sadd.s32 %s29, 1
      %s37 = ssub.s32 %s29, %s36
      %p38 = scmp.eq.s32.totalorder %s37, 0
      %s40 = sadd.s32 %s39, 1
      %s41 = scalar_select %p38, %s39, %s40
      %p44 = pneg %p38
      %p45 = scmp.eq.s32.totalorder %s29, 1
      %p46 = por %p44, %p45
      %p47 = scmp.ne.s32.totalorder %s39, %s42
      %p48 = scmp.eq.s32.totalorder %s29, 0
      %p49 = por %p47, %p48
      %p50 = scmp.ne.s32.totalorder %s39, %s42
      %p51 = scmp.eq.s32.totalorder %s34, 1
      %p52 = por %p50, %p51
      %p53 = scmp.ne.s32.totalorder %s42, %s43
      %p54 = scmp.eq.s32.totalorder %s34, 0
      %p55 = por %p53, %p54
      %p56 = scmp.ne.s32.totalorder %s42, %s43
      %p57 = scmp.eq.s32.totalorder %s35, 1
      %p58 = por %p56, %p57
      %p60 = scmp.ne.s32.totalorder %s43, %s59
      %p61 = scmp.eq.s32.totalorder %s35, 0
      %p62 = por %p60, %p61
      %s64 = sadd.s32 %s63, 1
      %p67 = scmp.eq.s32.totalorder %s29, 1
      %p68 = scmp.ne.s32.totalorder %s63, %s65
      %p69 = scmp.eq.s32.totalorder %s29, 0
      %p70 = por %p68, %p69
      %p71 = scmp.ne.s32.totalorder %s63, %s65
      %p72 = scmp.eq.s32.totalorder %s34, 1
      %p73 = por %p71, %p72
      %p74 = scmp.ne.s32.totalorder %s65, %s66
      %p75 = scmp.eq.s32.totalorder %s34, 0
      %p76 = por %p74, %p75
      %p77 = scmp.ne.s32.totalorder %s65, %s66
      %p78 = scmp.eq.s32.totalorder %s35, 1
      %p79 = por %p77, %p78
      %p81 = scmp.ne.s32.totalorder %s66, %s80
      %p82 = scmp.eq.s32.totalorder %s35, 0
      %p83 = por %p81, %p82
      %s85 = sadd.s32 %s84, 1
      %p88 = scmp.eq.s32.totalorder %s29, 1
      %p89 = scmp.ne.s32.totalorder %s84, %s86
      %p90 = scmp.eq.s32.totalorder %s29, 0
      %p91 = por %p89, %p90
      %p92 = scmp.ne.s32.totalorder %s84, %s86
      %p93 = scmp.eq.s32.totalorder %s34, 1
      %p94 = por %p92, %p93
      %p95 = scmp.ne.s32.totalorder %s86, %s87
      %p96 = scmp.eq.s32.totalorder %s34, 0
      %p97 = por %p95, %p96
      %p98 = scmp.ne.s32.totalorder %s86, %s87
      %p99 = scmp.eq.s32.totalorder %s35, 1
      %p100 = por %p98, %p99
      %p102 = scmp.ne.s32.totalorder %s87, %s101
      %p103 = scmp.eq.s32.totalorder %s35, 0
      %p104 = por %p102, %p103
      %s106 = sadd.s32 %s105, 1
      %p109 = scmp.eq.s32.totalorder %s29, 1
      %p110 = scmp.ne.s32.totalorder %s105, %s107
      %p111 = scmp.eq.s32.totalorder %s29, 0
      %p112 = por %p110, %p111
      %p113 = scmp.ne.s32.totalorder %s105, %s107
      %p114 = scmp.eq.s32.totalorder %s34, 1
      %p115 = por %p113, %p114
      %p116 = scmp.ne.s32.totalorder %s107, %s108
      %p117 = scmp.eq.s32.totalorder %s34, 0
      %p118 = por %p116, %p117
      %p119 = scmp.ne.s32.totalorder %s107, %s108
      %p120 = scmp.eq.s32.totalorder %s35, 1
      %p121 = por %p119, %p120
      %p123 = scmp.ne.s32.totalorder %s108, %s122
      %p124 = scmp.eq.s32.totalorder %s35, 0
      %p125 = por %p123, %p124
      %s127 = sadd.s32 %s126, 1
      %p130 = scmp.eq.s32.totalorder %s29, 1
      %p131 = scmp.ne.s32.totalorder %s126, %s128
      %p132 = scmp.eq.s32.totalorder %s29, 0
      %p133 = por %p131, %p132
      %p134 = scmp.ne.s32.totalorder %s126, %s128
      %p135 = scmp.eq.s32.totalorder %s34, 1
      %p136 = por %p134, %p135
      %p137 = scmp.ne.s32.totalorder %s128, %s129
      %p138 = scmp.eq.s32.totalorder %s34, 0
      %p139 = por %p137, %p138
      %p140 = scmp.ne.s32.totalorder %s128, %s129
      %p141 = scmp.eq.s32.totalorder %s35, 1
      %p142 = por %p140, %p141
      %p144 = scmp.ne.s32.totalorder %s129, %s143
      %p145 = scmp.eq.s32.totalorder %s35, 0
      %p146 = por %p144, %p145
      %s148 = sadd.s32 %s147, 1
      %p151 = scmp.eq.s32.totalorder %s29, 1
      %p152 = scmp.ne.s32.totalorder %s147, %s149
      %p153 = scmp.eq.s32.totalorder %s29, 0
      %p154 = por %p152, %p153
      %p155 = scmp.ne.s32.totalorder %s147, %s149
      %p156 = scmp.eq.s32.totalorder %s34, 1
      %p157 = por %p155, %p156
      %p158 = scmp.ne.s32.totalorder %s149, %s150
      %p159 = scmp.eq.s32.totalorder %s34, 0
      %p160 = por %p158, %p159
      %p161 = scmp.ne.s32.totalorder %s149, %s150
      %p162 = scmp.eq.s32.totalorder %s35, 1
      %p163 = por %p161, %p162
      %p165 = scmp.ne.s32.totalorder %s150, %s164
      %p166 = scmp.eq.s32.totalorder %s35, 0
      %p167 = por %p165, %p166
      %s169 = sadd.s32 %s168, 1
      %p172 = scmp.eq.s32.totalorder %s29, 1
      %p173 = scmp.ne.s32.totalorder %s168, %s170
      %p174 = scmp.eq.s32.totalorder %s29, 0
      %p175 = por %p173, %p174
      %p176 = scmp.ne.s32.totalorder %s168, %s170
      %p177 = scmp.eq.s32.totalorder %s34, 1
      %p178 = por %p176, %p177
      %p179 = scmp.ne.s32.totalorder %s170, %s171
      %p180 = scmp.eq.s32.totalorder %s34, 0
      %p181 = por %p179, %p180
      %p182 = scmp.ne.s32.totalorder %s170, %s171
      %p183 = scmp.eq.s32.totalorder %s35, 1
      %p184 = por %p182, %p183
      %p186 = scmp.ne.s32.totalorder %s171, %s185
      %p187 = scmp.eq.s32.totalorder %s35, 0
      %p188 = por %p186, %p187
      %s190 = sadd.s32 %s189, 1
      %p193 = scmp.eq.s32.totalorder %s29, 1
      %p194 = scmp.ne.s32.totalorder %s189, %s191
      %p195 = scmp.eq.s32.totalorder %s29, 0
      %p196 = por %p194, %p195
      %p197 = scmp.ne.s32.totalorder %s189, %s191
      %p198 = scmp.eq.s32.totalorder %s34, 1
      %p199 = por %p197, %p198
      %p200 = scmp.ne.s32.totalorder %s191, %s192
      %p201 = scmp.eq.s32.totalorder %s34, 0
      %p202 = por %p200, %p201
      %p203 = scmp.ne.s32.totalorder %s191, %s192
      %p204 = scmp.eq.s32.totalorder %s35, 1
      %p205 = por %p203, %p204
      %p207 = scmp.ne.s32.totalorder %s192, %s206
      %p208 = scmp.eq.s32.totalorder %s35, 0
      %p209 = por %p207, %p208
      %s211 = sadd.s32 %s210, 1
      %p214 = scmp.eq.s32.totalorder %s29, 1
      %p215 = scmp.ne.s32.totalorder %s210, %s212
      %p216 = scmp.eq.s32.totalorder %s29, 0
      %p217 = por %p215, %p216
      %p218 = scmp.ne.s32.totalorder %s210, %s212
      %p219 = scmp.eq.s32.totalorder %s34, 1
      %p220 = por %p218, %p219
      %p221 = scmp.ne.s32.totalorder %s212, %s213
      %p222 = scmp.eq.s32.totalorder %s34, 0
      %p223 = por %p221, %p222
      %p224 = scmp.ne.s32.totalorder %s212, %s213
      %p225 = scmp.eq.s32.totalorder %s35, 1
      %p226 = por %p224, %p225
      %p228 = scmp.ne.s32.totalorder %s213, %s227
      %p229 = scmp.eq.s32.totalorder %s35, 0
      %p230 = por %p228, %p229
      %s232 = sadd.s32 %s231, 1
      %p235 = scmp.eq.s32.totalorder %s29, 1
      %p236 = scmp.ne.s32.totalorder %s231, %s233
      %p237 = scmp.eq.s32.totalorder %s29, 0
      %p238 = por %p236, %p237
      %p239 = scmp.ne.s32.totalorder %s231, %s233
      %p240 = scmp.eq.s32.totalorder %s34, 1
      %p241 = por %p239, %p240
      %p242 = scmp.ne.s32.totalorder %s233, %s234
      %p243 = scmp.eq.s32.totalorder %s34, 0
      %p244 = por %p242, %p243
      %p245 = scmp.ne.s32.totalorder %s233, %s234
      %p246 = scmp.eq.s32.totalorder %s35, 1
      %p247 = por %p245, %p246
      %p249 = scmp.ne.s32.totalorder %s234, %s248
      %p250 = scmp.eq.s32.totalorder %s35, 0
      %p251 = por %p249, %p250
      %s253 = sadd.s32 %s252, 1
      %p256 = scmp.eq.s32.totalorder %s29, 1
      %p257 = scmp.ne.s32.totalorder %s252, %s254
      %p258 = scmp.eq.s32.totalorder %s29, 0
      %p259 = por %p257, %p258
      %p260 = scmp.ne.s32.totalorder %s252, %s254
      %p261 = scmp.eq.s32.totalorder %s34, 1
      %p262 = por %p260, %p261
      %p263 = scmp.ne.s32.totalorder %s254, %s255
      %p264 = scmp.eq.s32.totalorder %s34, 0
      %p265 = por %p263, %p264
      %p266 = scmp.ne.s32.totalorder %s254, %s255
      %p267 = scmp.eq.s32.totalorder %s35, 1
      %p268 = por %p266, %p267
      %p270 = scmp.ne.s32.totalorder %s255, %s269
      %p271 = scmp.eq.s32.totalorder %s35, 0
      %p272 = por %p270, %p271
      %s274 = sadd.s32 %s273, 1
      %p277 = scmp.eq.s32.totalorder %s29, 1
      %p278 = scmp.ne.s32.totalorder %s273, %s275
      %p279 = scmp.eq.s32.totalorder %s29, 0
      %p280 = por %p278, %p279
      %p281 = scmp.ne.s32.totalorder %s273, %s275
      %p282 = scmp.eq.s32.totalorder %s34, 1
      %p283 = por %p281, %p282
      %p284 = scmp.ne.s32.totalorder %s275, %s276
      %p285 = scmp.eq.s32.totalorder %s34, 0
      %p286 = por %p284, %p285
      %p287 = scmp.ne.s32.totalorder %s275, %s276
      %p288 = scmp.eq.s32.totalorder %s35, 1
      %p289 = por %p287, %p288
      %p291 = scmp.ne.s32.totalorder %s276, %s290
      %p292 = scmp.eq.s32.totalorder %s35, 0
      %p293 = por %p291, %p292
      %s295 = sadd.s32 %s294, 1
      %p298 = scmp.eq.s32.totalorder %s29, 1
      %p299 = scmp.ne.s32.totalorder %s294, %s296
      %p300 = scmp.eq.s32.totalorder %s29, 0
      %p301 = por %p299, %p300
      %p302 = scmp.ne.s32.totalorder %s294, %s296
      %p303 = scmp.eq.s32.totalorder %s34, 1
      %p304 = por %p302, %p303
      %p305 = scmp.ne.s32.totalorder %s296, %s297
      %p306 = scmp.eq.s32.totalorder %s34, 0
      %p307 = por %p305, %p306
      %p308 = scmp.ne.s32.totalorder %s296, %s297
      %p309 = scmp.eq.s32.totalorder %s35, 1
      %p310 = por %p308, %p309
      %p312 = scmp.ne.s32.totalorder %s297, %s311
      %p313 = scmp.eq.s32.totalorder %s35, 0
      %p314 = por %p312, %p313
      %s316 = sadd.s32 %s315, 1
      %p319 = scmp.eq.s32.totalorder %s29, 1
      %p320 = scmp.ne.s32.totalorder %s315, %s317
      %p321 = scmp.eq.s32.totalorder %s29, 0
      %p322 = por %p320, %p321
      %p323 = scmp.ne.s32.totalorder %s315, %s317
      %p324 = scmp.eq.s32.totalorder %s34, 1
      %p325 = por %p323, %p324
      %p326 = scmp.ne.s32.totalorder %s317, %s318
      %p327 = scmp.eq.s32.totalorder %s34, 0
      %p328 = por %p326, %p327
      %p329 = scmp.ne.s32.totalorder %s317, %s318
      %p330 = scmp.eq.s32.totalorder %s35, 1
      %p331 = por %p329, %p330
      %p333 = scmp.ne.s32.totalorder %s318, %s332
      %p334 = scmp.eq.s32.totalorder %s35, 0
      %p335 = por %p333, %p334
      %s337 = sadd.s32 %s336, 1
      %p340 = scmp.eq.s32.totalorder %s29, 1
      %p341 = scmp.ne.s32.totalorder %s336, %s338
      %p342 = scmp.eq.s32.totalorder %s29, 0
      %p343 = por %p341, %p342
      %p344 = scmp.ne.s32.totalorder %s336, %s338
      %p345 = scmp.eq.s32.totalorder %s34, 1
      %p346 = por %p344, %p345
      %p347 = scmp.ne.s32.totalorder %s338, %s339
      %p348 = scmp.eq.s32.totalorder %s34, 0
      %p349 = por %p347, %p348
      %p350 = scmp.ne.s32.totalorder %s338, %s339
      %p351 = scmp.eq.s32.totalorder %s35, 1
      %p352 = por %p350, %p351
      %p354 = scmp.ne.s32.totalorder %s339, %s353
      %p355 = scmp.eq.s32.totalorder %s35, 0
      %p356 = por %p354, %p355
      %s358 = sadd.s32 %s357, 1
      %p361 = scmp.eq.s32.totalorder %s29, 1
      %p362 = scmp.ne.s32.totalorder %s357, %s359
      %p363 = scmp.eq.s32.totalorder %s29, 0
      %p364 = por %p362, %p363
      %p365 = scmp.ne.s32.totalorder %s357, %s359
      %p366 = scmp.eq.s32.totalorder %s34, 1
      %p367 = por %p365, %p366
      %p368 = scmp.ne.s32.totalorder %s359, %s360
      %p369 = scmp.eq.s32.totalorder %s34, 0
      %p370 = por %p368, %p369
      %p371 = scmp.ne.s32.totalorder %s359, %s360
      %p372 = scmp.eq.s32.totalorder %s35, 1
      %p373 = por %p371, %p372
      %p375 = scmp.ne.s32.totalorder %s360, %s374
      %p376 = scmp.eq.s32.totalorder %s35, 0
      %p377 = por %p375, %p376
      %s379 = sadd.s32 %s378, 1
      %p382 = scmp.eq.s32.totalorder %s29, 1
      %p383 = scmp.ne.s32.totalorder %s378, %s380
      %p384 = scmp.eq.s32.totalorder %s29, 0
      %p385 = por %p383, %p384
      %p386 = scmp.ne.s32.totalorder %s378, %s380
      %p387 = scmp.eq.s32.totalorder %s34, 1
      %p388 = por %p386, %p387
      %p389 = scmp.ne.s32.totalorder %s380, %s381
      %p390 = scmp.eq.s32.totalorder %s34, 0
      %p391 = por %p389, %p390
      %p392 = scmp.ne.s32.totalorder %s380, %s381
      %p393 = scmp.eq.s32.totalorder %s35, 1
      %p394 = por %p392, %p393
      %p396 = scmp.ne.s32.totalorder %s381, %s395
      %p397 = scmp.eq.s32.totalorder %s35, 0
      %p398 = por %p396, %p397
      %s400 = sadd.s32 %s399, 1
      %p403 = scmp.eq.s32.totalorder %s29, 1
      %p404 = scmp.ne.s32.totalorder %s399, %s401
      %p405 = scmp.eq.s32.totalorder %s29, 0
      %p406 = por %p404, %p405
      %p407 = scmp.ne.s32.totalorder %s399, %s401
      %p408 = scmp.eq.s32.totalorder %s34, 1
      %p409 = por %p407, %p408
      %p410 = scmp.ne.s32.totalorder %s401, %s402
      %p411 = scmp.eq.s32.totalorder %s34, 0
      %p412 = por %p410, %p411
      %p413 = scmp.ne.s32.totalorder %s401, %s402
      %p414 = scmp.eq.s32.totalorder %s35, 1
      %p415 = por %p413, %p414
      %p417 = scmp.ne.s32.totalorder %s402, %s416
      %p418 = scmp.eq.s32.totalorder %s35, 0
      %p419 = por %p417, %p418
      %s421 = sadd.s32 %s420, 1
      %p424 = scmp.eq.s32.totalorder %s29, 1
      %p425 = scmp.ne.s32.totalorder %s420, %s422
      %p426 = scmp.eq.s32.totalorder %s29, 0
      %p427 = por %p425, %p426
      %p428 = scmp.ne.s32.totalorder %s420, %s422
      %p429 = scmp.eq.s32.totalorder %s34, 1
      %p430 = por %p428, %p429
      %p431 = scmp.ne.s32.totalorder %s422, %s423
      %p432 = scmp.eq.s32.totalorder %s34, 0
      %p433 = por %p431, %p432
      %p434 = scmp.ne.s32.totalorder %s422, %s423
      %p435 = scmp.eq.s32.totalorder %s35, 1
      %p436 = por %p434, %p435
      %p438 = scmp.ne.s32.totalorder %s423, %s437
      %p439 = scmp.eq.s32.totalorder %s35, 0
      %p440 = por %p438, %p439
      %s442 = sadd.s32 %s441, 1
      %p445 = scmp.eq.s32.totalorder %s29, 1
      %p446 = scmp.ne.s32.totalorder %s441, %s443
      %p447 = scmp.eq.s32.totalorder %s29, 0
      %p448 = por %p446, %p447
      %p449 = scmp.ne.s32.totalorder %s441, %s443
      %p450 = scmp.eq.s32.totalorder %s34, 1
      %p451 = por %p449, %p450
      %p452 = scmp.ne.s32.totalorder %s443, %s444
      %p453 = scmp.eq.s32.totalorder %s34, 0
      %p454 = por %p452, %p453
      %p455 = scmp.ne.s32.totalorder %s443, %s444
      %p456 = scmp.eq.s32.totalorder %s35, 1
      %p457 = por %p455, %p456
      %p459 = scmp.ne.s32.totalorder %s444, %s458
      %p460 = scmp.eq.s32.totalorder %s35, 0
      %p461 = por %p459, %p460
      %s462 = ssub.s32 %s29, %s36
      %p463 = scmp.eq.s32.totalorder %s462, 0
      %s465 = sadd.s32 %s464, 1
      %s466 = scalar_select %p463, %s464, %s465
      %p469 = pneg %p463
      %p470 = scmp.eq.s32.totalorder %s29, 1
      %p471 = por %p469, %p470
      %p472 = scmp.ne.s32.totalorder %s464, %s467
      %p473 = scmp.eq.s32.totalorder %s29, 0
      %p474 = por %p472, %p473
      %p475 = scmp.ne.s32.totalorder %s464, %s467
      %p476 = scmp.eq.s32.totalorder %s34, 1
      %p477 = por %p475, %p476
      %p478 = scmp.ne.s32.totalorder %s467, %s468
      %p479 = scmp.eq.s32.totalorder %s34, 0
      %p480 = por %p478, %p479
      %p481 = scmp.ne.s32.totalorder %s467, %s468
      %p482 = scmp.eq.s32.totalorder %s35, 1
      %p483 = por %p481, %p482
      %p485 = scmp.ne.s32.totalorder %s468, %s484
      %p486 = scmp.eq.s32.totalorder %s35, 0
      %p487 = por %p485, %p486
      %p488 = scmp.le.s32.totalorder 1, %s29
      %p489 = scmp.lt.s32.totalorder %s29, 3
      %p490 = pnand %p488, %p489
      %p491 = pneg %p490
      // Predicated region
      $region9: #{cnn_forward.1} parent=5 // pred_check
        _
      $region10: #{cnn_forward.1} parent=5 // pred_check_branch
        %493 = sbr.rel (%p490) target = $region12
      $region11: #{cnn_forward.1} parent=5 // pred_region
        %s494 = ssub.s32 %s29, 1
        // Predicated region
        $region13: #{cnn_forward.1} parent=11 // pred_check
          %p495 = pneg %p76
        $region14: #{cnn_forward.1} parent=11 // pred_check_branch
          %497 = sbr.rel (%p495) target = $region16
        $region15: #{cnn_forward.1} parent=11 // pred_region
          _
        $region16: #{cnn_forward.1} parent=11 // pred_fallthru
          _
        // Predicated region
        $region17: #{cnn_forward.1} parent=11 // pred_check
          %p498 = pneg %p97
        $region18: #{cnn_forward.1} parent=11 // pred_check_branch
          %500 = sbr.rel (%p498) target = $region20
        $region19: #{cnn_forward.1} parent=11 // pred_region
          _
        $region20: #{cnn_forward.1} parent=11 // pred_fallthru
          _
        // Predicated region
        $region21: #{cnn_forward.1} parent=11 // pred_check
          %p501 = pneg %p118
        $region22: #{cnn_forward.1} parent=11 // pred_check_branch
          %503 = sbr.rel (%p501) target = $region24
        $region23: #{cnn_forward.1} parent=11 // pred_region
          _
        $region24: #{cnn_forward.1} parent=11 // pred_fallthru
          _
        // Predicated region
        $region25: #{cnn_forward.1} parent=11 // pred_check
          %p504 = pneg %p139
        $region26: #{cnn_forward.1} parent=11 // pred_check_branch
          %506 = sbr.rel (%p504) target = $region28
        $region27: #{cnn_forward.1} parent=11 // pred_region
          _
        $region28: #{cnn_forward.1} parent=11 // pred_fallthru
          _
        // Predicated region
        $region29: #{cnn_forward.1} parent=11 // pred_check
          %p507 = pneg %p160
        $region30: #{cnn_forward.1} parent=11 // pred_check_branch
          %509 = sbr.rel (%p507) target = $region32
        $region31: #{cnn_forward.1} parent=11 // pred_region
          _
        $region32: #{cnn_forward.1} parent=11 // pred_fallthru
          _
        // Predicated region
        $region33: #{cnn_forward.1} parent=11 // pred_check
          %p510 = pneg %p181
        $region34: #{cnn_forward.1} parent=11 // pred_check_branch
          %512 = sbr.rel (%p510) target = $region36
        $region35: #{cnn_forward.1} parent=11 // pred_region
          _
        $region36: #{cnn_forward.1} parent=11 // pred_fallthru
          _
        // Predicated region
        $region37: #{cnn_forward.1} parent=11 // pred_check
          %p513 = pneg %p202
        $region38: #{cnn_forward.1} parent=11 // pred_check_branch
          %515 = sbr.rel (%p513) target = $region40
        $region39: #{cnn_forward.1} parent=11 // pred_region
          _
        $region40: #{cnn_forward.1} parent=11 // pred_fallthru
          _
        // Predicated region
        $region41: #{cnn_forward.1} parent=11 // pred_check
          %p516 = pneg %p223
        $region42: #{cnn_forward.1} parent=11 // pred_check_branch
          %518 = sbr.rel (%p516) target = $region44
        $region43: #{cnn_forward.1} parent=11 // pred_region
          _
        $region44: #{cnn_forward.1} parent=11 // pred_fallthru
          _
        // Predicated region
        $region45: #{cnn_forward.1} parent=11 // pred_check
          %p519 = pneg %p244
        $region46: #{cnn_forward.1} parent=11 // pred_check_branch
          %521 = sbr.rel (%p519) target = $region48
        $region47: #{cnn_forward.1} parent=11 // pred_region
          _
        $region48: #{cnn_forward.1} parent=11 // pred_fallthru
          _
        // Predicated region
        $region49: #{cnn_forward.1} parent=11 // pred_check
          %p522 = pneg %p265
        $region50: #{cnn_forward.1} parent=11 // pred_check_branch
          %524 = sbr.rel (%p522) target = $region52
        $region51: #{cnn_forward.1} parent=11 // pred_region
          _
        $region52: #{cnn_forward.1} parent=11 // pred_fallthru
          _
        // Predicated region
        $region53: #{cnn_forward.1} parent=11 // pred_check
          %p525 = pneg %p286
        $region54: #{cnn_forward.1} parent=11 // pred_check_branch
          %527 = sbr.rel (%p525) target = $region56
        $region55: #{cnn_forward.1} parent=11 // pred_region
          _
        $region56: #{cnn_forward.1} parent=11 // pred_fallthru
          _
        // Predicated region
        $region57: #{cnn_forward.1} parent=11 // pred_check
          %p528 = pneg %p307
        $region58: #{cnn_forward.1} parent=11 // pred_check_branch
          %530 = sbr.rel (%p528) target = $region60
        $region59: #{cnn_forward.1} parent=11 // pred_region
          _
        $region60: #{cnn_forward.1} parent=11 // pred_fallthru
          _
        // Predicated region
        $region61: #{cnn_forward.1} parent=11 // pred_check
          %p531 = pneg %p328
        $region62: #{cnn_forward.1} parent=11 // pred_check_branch
          %533 = sbr.rel (%p531) target = $region64
        $region63: #{cnn_forward.1} parent=11 // pred_region
          _
        $region64: #{cnn_forward.1} parent=11 // pred_fallthru
          _
        // Predicated region
        $region65: #{cnn_forward.1} parent=11 // pred_check
          %p534 = pneg %p349
        $region66: #{cnn_forward.1} parent=11 // pred_check_branch
          %536 = sbr.rel (%p534) target = $region68
        $region67: #{cnn_forward.1} parent=11 // pred_region
          _
        $region68: #{cnn_forward.1} parent=11 // pred_fallthru
          _
        // Predicated region
        $region69: #{cnn_forward.1} parent=11 // pred_check
          %p537 = pneg %p370
        $region70: #{cnn_forward.1} parent=11 // pred_check_branch
          %539 = sbr.rel (%p537) target = $region72
        $region71: #{cnn_forward.1} parent=11 // pred_region
          _
        $region72: #{cnn_forward.1} parent=11 // pred_fallthru
          _
        // Predicated region
        $region73: #{cnn_forward.1} parent=11 // pred_check
          %p540 = pneg %p391
        $region74: #{cnn_forward.1} parent=11 // pred_check_branch
          %542 = sbr.rel (%p540) target = $region76
        $region75: #{cnn_forward.1} parent=11 // pred_region
          _
        $region76: #{cnn_forward.1} parent=11 // pred_fallthru
          _
        // Predicated region
        $region77: #{cnn_forward.1} parent=11 // pred_check
          %p543 = pneg %p412
        $region78: #{cnn_forward.1} parent=11 // pred_check_branch
          %545 = sbr.rel (%p543) target = $region80
        $region79: #{cnn_forward.1} parent=11 // pred_region
          _
        $region80: #{cnn_forward.1} parent=11 // pred_fallthru
          _
        // Predicated region
        $region81: #{cnn_forward.1} parent=11 // pred_check
          %p546 = pneg %p433
        $region82: #{cnn_forward.1} parent=11 // pred_check_branch
          %548 = sbr.rel (%p546) target = $region84
        $region83: #{cnn_forward.1} parent=11 // pred_region
          _
        $region84: #{cnn_forward.1} parent=11 // pred_fallthru
          _
        // Predicated region
        $region85: #{cnn_forward.1} parent=11 // pred_check
          %p549 = pneg %p454
        $region86: #{cnn_forward.1} parent=11 // pred_check_branch
          %551 = sbr.rel (%p549) target = $region88
        $region87: #{cnn_forward.1} parent=11 // pred_region
          _
        $region88: #{cnn_forward.1} parent=11 // pred_fallthru
          _
      $region12: #{cnn_forward.1} parent=5 // pred_fallthru
        _
      %p552 = scmp.lt.s32.totalorder %s29, 2
      // Predicated region
      $region89: #{cnn_forward.1} parent=5 // pred_check
        %p553 = pneg %p552
      $region90: #{cnn_forward.1} parent=5 // pred_check_branch
        %555 = sbr.rel (%p553) target = $region92
      $region91: #{cnn_forward.1} parent=5 // pred_region
        // Predicated region
        $region93: #{cnn_forward.1} parent=91 // pred_check
          %p556 = pneg %p49
        $region94: #{cnn_forward.1} parent=91 // pred_check_branch
          %558 = sbr.rel (%p556) target = $region96
        $region95: #{cnn_forward.1} parent=91 // pred_region
          %s559 = smul.u32 8, %s29
          %p560 = scmp.lt.s32.totalorder %s559, 15
          %s561 = scalar_select %p560, %s559, 15
          %s562 = smul.addr %s561, 5
          %s563 = smul.addr %s562, 4
          %s564 = scalar_lea.vmem %s0, %s563
          %s565 = smul.u32 8, %s29
        $region96: #{cnn_forward.1} parent=91 // pred_fallthru
          _
      $region92: #{cnn_forward.1} parent=5 // pred_fallthru
        _
      %p566 = scmp.le.s32.totalorder 1, %s29
      %p567 = scmp.lt.s32.totalorder %s29, 3
      %p568 = pnand %p566, %p567
      %p569 = pneg %p568
      // Predicated region
      $region97: #{cnn_forward.1} parent=5 // pred_check
        _
      $region98: #{cnn_forward.1} parent=5 // pred_check_branch
        %571 = sbr.rel (%p568) target = $region100
      $region99: #{cnn_forward.1} parent=5 // pred_region
        %s572 = ssub.s32 %s29, 1
        %s573 = smul.u32 8, %s34
        %p574 = scmp.lt.s32.totalorder %s573, 15
        %s575 = scalar_select %p574, %s573, 15
        %s576 = smul.addr %s575, 5
        %s577 = smul.addr %s576, 4
        %s578 = scalar_lea.vmem %s0, %s577
        %p579 = pneg %p55
        %p580 = pneg %p52
        %p581 = pneg %p76
        %p582 = pneg %p73
        %p583 = pneg %p97
        %p584 = pneg %p94
        %p585 = pneg %p118
        %p586 = pneg %p115
        %p587 = pneg %p139
        %p588 = pneg %p136
        %p589 = pneg %p160
        %p590 = pneg %p157
        %p591 = pneg %p181
        %p592 = pneg %p178
        %p593 = pneg %p202
        %p594 = pneg %p199
        %p595 = pneg %p223
        %p596 = pneg %p220
        %p597 = pneg %p244
        %p598 = pneg %p241
        %p599 = pneg %p265
        %p600 = pneg %p262
        %p601 = pneg %p286
        %p602 = pneg %p283
        %p603 = pneg %p307
        %p604 = pneg %p304
        %p605 = pneg %p328
        %p606 = pneg %p325
        %p607 = pneg %p349
        %p608 = pneg %p346
        %p609 = pneg %p370
        %p610 = pneg %p367
        %p611 = pneg %p391
        %p612 = pneg %p388
        %p613 = pneg %p412
        %p614 = pneg %p409
        %p615 = pneg %p433
        %p616 = pneg %p430
        %p617 = pneg %p454
        %p618 = pneg %p451
        %p619 = pneg %p480
        %p620 = pneg %p477
        %s621 = sand.u32 %s467, 1
        %s622 = scalar_lea.sflag [#allocation3], %s621
        %s623 = sand.u32 %s467, 1
        %s624 = smul.addr %s623, 8
        %s625 = scalar_lea.vmem [#allocation2], %s624
        %s626 = smul.u32 8, %s34
        %p627 = scmp.lt.s32.totalorder %s626, 15
        %s628 = scalar_select %p627, %s626, 15
        %s629 = smul.addr %s628, 5
        %s630 = smul.addr %s629, 4
        %s631 = scalar_lea.vmem %s0, %s630
        %s632 = smul.u32 8, %s34
        %v634 = vld [vmem:[%s631] sm:$0xf]
        %v635 = vld [vmem:[%s631 + $0x4] sm:$0xf]
        %v636 = vld [vmem:[%s631 + $0x8] sm:$0xf]
        %v637 = vld [vmem:[%s631 + $0xc] sm:$0xf]
        %v638 = vld [vmem:[%s631 + $0x10] sm:$0xf]
        %v639 = vld [vmem:[%s631 + $0x14] sm:$0xf]
        %v640 = vld [vmem:[%s631 + $0x18] sm:$0xf]
        %v641 = vld [vmem:[%s631 + $0x1c] sm:$0xf]
        %v642 = vld [vmem:[%s631 + $0x20] sm:$0xf]
        %v643 = vld [vmem:[%s631 + $0x24] sm:$0xf]
        %v644 = vld [vmem:[%s631 + $0x28] sm:$0xf]
        %v645 = vld [vmem:[%s631 + $0x2c] sm:$0xf]
        %v646 = vld [vmem:[%s631 + $0x30] sm:$0xf]
        %v647 = vld [vmem:[%s631 + $0x34] sm:$0xf]
        %v648 = vld [vmem:[%s631 + $0x38] sm:$0xf]
        %v649 = vld [vmem:[%s631 + $0x3c] sm:$0xf]
        %v650 = vld [vmem:[%s631 + $0x40] sm:$0xf]
        %v651 = vld [vmem:[%s631 + $0x44] sm:$0xf]
        %v652 = vld [vmem:[%s631 + $0x48] sm:$0xf]
        %v653 = vld [vmem:[%s631 + $0x4c] sm:$0xf]
        %v654 = vld [vmem:[%s631 + $0x50] sm:$0xf]
        %v655 = vld [vmem:[%s631 + $0x54] sm:$0xf]
        %v656 = vld [vmem:[%s631 + $0x58] sm:$0xf]
        %v657 = vld [vmem:[%s631 + $0x5c] sm:$0xf]
        %v658 = vld [vmem:[%s631 + $0x60] sm:$0xf]
        %v659 = vld [vmem:[%s631 + $0x64] sm:$0xf]
        %v660 = vld [vmem:[%s631 + $0x68] sm:$0xf]
        %v661 = vld [vmem:[%s631 + $0x6c] sm:$0xf]
        %v662 = vld [vmem:[%s631 + $0x70] sm:$0xf]
        %v663 = vld [vmem:[%s631 + $0x74] sm:$0xf]
        %v664 = vld [vmem:[%s631 + $0x78] sm:$0xf]
        %v665 = vld [vmem:[%s631 + $0x7c] sm:$0xf]
        %v666 = vld [vmem:[%s631 + $0x80] sm:$0xf]
        %v667 = vld [vmem:[%s631 + $0x84] sm:$0xf]
        %v668 = vld [vmem:[%s631 + $0x88] sm:$0xf]
        %v669 = vld [vmem:[%s631 + $0x8c] sm:$0xf]
        %v670 = vld [vmem:[%s631 + $0x90] sm:$0xf]
        %v671 = vld [vmem:[%s631 + $0x94] sm:$0xf]
        %v672 = vld [vmem:[%s631 + $0x98] sm:$0xf]
        %v673 = vld [vmem:[%s631 + $0x9c] sm:$0xf]
        %v706 = vunpack.c.l.b16 %v634
        %v707 = vunpack.c.l.b16 %v635
        %v708 = vunpack.c.l.b16 %v636
        %v709 = vunpack.c.l.b16 %v637
        %v710 = vunpack.c.l.b16 %v639
        %v711 = vunpack.c.l.b16 %v640
        %v712 = vunpack.c.l.b16 %v641
        %v713 = vunpack.c.l.b16 %v642
        %v714 = vunpack.c.l.b16 %v644
        %v715 = vunpack.c.l.b16 %v645
        %v716 = vunpack.c.l.b16 %v646
        %v717 = vunpack.c.l.b16 %v647
        %v718 = vunpack.c.l.b16 %v649
        %v719 = vunpack.c.l.b16 %v650
        %v720 = vunpack.c.l.b16 %v651
        %v721 = vunpack.c.l.b16 %v652
        %v722 = vunpack.c.l.b16 %v654
        %v723 = vunpack.c.l.b16 %v655
        %v724 = vunpack.c.l.b16 %v656
        %v725 = vunpack.c.l.b16 %v657
        %v726 = vunpack.c.l.b16 %v659
        %v727 = vunpack.c.l.b16 %v660
        %v728 = vunpack.c.l.b16 %v661
        %v729 = vunpack.c.l.b16 %v662
        %v730 = vunpack.c.l.b16 %v664
        %v731 = vunpack.c.l.b16 %v665
        %v732 = vunpack.c.l.b16 %v666
        %v733 = vunpack.c.l.b16 %v667
        %v734 = vunpack.c.l.b16 %v669
        %v735 = vunpack.c.l.b16 %v670
        %v736 = vunpack.c.l.b16 %v671
        %v737 = vunpack.c.l.b16 %v672
        %v738 = vpack.c.b16 %v707, %v706
        %v739 = vpack.c.b16 %v709, %v708
        %v740 = vpack.c.b16 %v711, %v710
        %v741 = vpack.c.b16 %v713, %v712
        %v742 = vpack.c.b16 %v715, %v714
        %v743 = vpack.c.b16 %v717, %v716
        %v744 = vpack.c.b16 %v719, %v718
        %v745 = vpack.c.b16 %v721, %v720
        %v746 = vpack.c.b16 %v723, %v722
        %v747 = vpack.c.b16 %v725, %v724
        %v748 = vpack.c.b16 %v727, %v726
        %v749 = vpack.c.b16 %v729, %v728
        %v750 = vpack.c.b16 %v731, %v730
        %v751 = vpack.c.b16 %v733, %v732
        %v752 = vpack.c.b16 %v735, %v734
        %v753 = vpack.c.b16 %v737, %v736
        %v762 = vunpack.c.l.b16 %v638
        %v763 = vunpack.c.l.b16 %v643
        %v764 = vunpack.c.l.b16 %v648
        %v765 = vunpack.c.l.b16 %v653
        %v766 = vunpack.c.l.b16 %v658
        %v767 = vunpack.c.l.b16 %v663
        %v768 = vunpack.c.l.b16 %v668
        %v769 = vunpack.c.l.b16 %v673
        %v770 = vpack.c.b16 %v762, %v762
        %v771 = vpack.c.b16 %v763, %v763
        %v772 = vpack.c.b16 %v764, %v764
        %v773 = vpack.c.b16 %v765, %v765
        %v774 = vpack.c.b16 %v766, %v766
        %v775 = vpack.c.b16 %v767, %v767
        %v776 = vpack.c.b16 %v768, %v768
        %v777 = vpack.c.b16 %v769, %v769
        %vm778 = vsmask.f32 7424
        %v780 = vshrl.u32 %v738, 16
        %v782 = vshll.u32 %v738, 16
        %v784 = vrot.slane %v782, 1
        %v785 = vor.u32 %v780, %v784
        %v787 = vshll.u32 %v739, 16
        %v789 = vrot.slane %v787, 1
        %v790 = vsel %vm778, %v785, %v789
        %v791 = vshrl.u32 %v739, 16
        %v793 = vor.u32 %v791, %v789
        %v795 = vshll.u32 %v770, 16
        %v797 = vrot.slane %v795, 1
        %v798 = vsel %vm778, %v793, %v797
        %v800 = vshrl.u32 %v740, 16
        %v802 = vshll.u32 %v740, 16
        %v804 = vrot.slane %v802, 1
        %v805 = vor.u32 %v800, %v804
        %v807 = vshll.u32 %v741, 16
        %v809 = vrot.slane %v807, 1
        %v810 = vsel %vm778, %v805, %v809
        %v811 = vshrl.u32 %v741, 16
        %v813 = vor.u32 %v811, %v809
        %v815 = vshll.u32 %v771, 16
        %v817 = vrot.slane %v815, 1
        %v818 = vsel %vm778, %v813, %v817
        %v820 = vshrl.u32 %v742, 16
        %v822 = vshll.u32 %v742, 16
        %v824 = vrot.slane %v822, 1
        %v825 = vor.u32 %v820, %v824
        %v827 = vshll.u32 %v743, 16
        %v829 = vrot.slane %v827, 1
        %v830 = vsel %vm778, %v825, %v829
        %v831 = vshrl.u32 %v743, 16
        %v833 = vor.u32 %v831, %v829
        %v835 = vshll.u32 %v772, 16
        %v837 = vrot.slane %v835, 1
        %v838 = vsel %vm778, %v833, %v837
        %v840 = vshrl.u32 %v744, 16
        %v842 = vshll.u32 %v744, 16
        %v844 = vrot.slane %v842, 1
        %v845 = vor.u32 %v840, %v844
        %v847 = vshll.u32 %v745, 16
        %v849 = vrot.slane %v847, 1
        %v850 = vsel %vm778, %v845, %v849
        %v851 = vshrl.u32 %v745, 16
        %v853 = vor.u32 %v851, %v849
        %v855 = vshll.u32 %v773, 16
        %v857 = vrot.slane %v855, 1
        %v858 = vsel %vm778, %v853, %v857
        %v860 = vshrl.u32 %v746, 16
        %v862 = vshll.u32 %v746, 16
        %v864 = vrot.slane %v862, 1
        %v865 = vor.u32 %v860, %v864
        %v867 = vshll.u32 %v747, 16
        %v869 = vrot.slane %v867, 1
        %v870 = vsel %vm778, %v865, %v869
        %v871 = vshrl.u32 %v747, 16
        %v873 = vor.u32 %v871, %v869
        %v875 = vshll.u32 %v774, 16
        %v877 = vrot.slane %v875, 1
        %v878 = vsel %vm778, %v873, %v877
        %v880 = vshrl.u32 %v748, 16
        %v882 = vshll.u32 %v748, 16
        %v884 = vrot.slane %v882, 1
        %v885 = vor.u32 %v880, %v884
        %v887 = vshll.u32 %v749, 16
        %v889 = vrot.slane %v887, 1
        %v890 = vsel %vm778, %v885, %v889
        %v891 = vshrl.u32 %v749, 16
        %v893 = vor.u32 %v891, %v889
        %v895 = vshll.u32 %v775, 16
        %v897 = vrot.slane %v895, 1
        %v898 = vsel %vm778, %v893, %v897
        %v900 = vshrl.u32 %v750, 16
        %v902 = vshll.u32 %v750, 16
        %v904 = vrot.slane %v902, 1
        %v905 = vor.u32 %v900, %v904
        %v907 = vshll.u32 %v751, 16
        %v909 = vrot.slane %v907, 1
        %v910 = vsel %vm778, %v905, %v909
        %v911 = vshrl.u32 %v751, 16
        %v913 = vor.u32 %v911, %v909
        %v915 = vshll.u32 %v776, 16
        %v917 = vrot.slane %v915, 1
        %v918 = vsel %vm778, %v913, %v917
        %v920 = vshrl.u32 %v752, 16
        %v922 = vshll.u32 %v752, 16
        %v924 = vrot.slane %v922, 1
        %v925 = vor.u32 %v920, %v924
        %v927 = vshll.u32 %v753, 16
        %v929 = vrot.slane %v927, 1
        %v930 = vsel %vm778, %v925, %v929
        %v931 = vshrl.u32 %v753, 16
        %v933 = vor.u32 %v931, %v929
        %v935 = vshll.u32 %v777, 16
        %v937 = vrot.slane %v935, 1
        %v938 = vsel %vm778, %v933, %v937
        %939 = vrot.lane.b32.xlu0 %v790, 96
        %v940 = vpop.permute.xlu0 %939
        %941 = vrot.lane.b32.xlu0 %v798, 96
        %v942 = vpop.permute.xlu0 %941
        %943 = vrot.lane.b32.xlu0 %v810, 96
        %v944 = vpop.permute.xlu0 %943
        %945 = vrot.lane.b32.xlu0 %v818, 96
        %v946 = vpop.permute.xlu0 %945
        %947 = vrot.lane.b32.xlu0 %v830, 96
        %v948 = vpop.permute.xlu0 %947
        %949 = vrot.lane.b32.xlu0 %v838, 96
        %v950 = vpop.permute.xlu0 %949
        %951 = vrot.lane.b32.xlu0 %v850, 96
        %v952 = vpop.permute.xlu0 %951
        %953 = vrot.lane.b32.xlu0 %v858, 96
        %v954 = vpop.permute.xlu0 %953
        %955 = vrot.lane.b32.xlu0 %v870, 96
        %v956 = vpop.permute.xlu0 %955
        %957 = vrot.lane.b32.xlu0 %v878, 96
        %v958 = vpop.permute.xlu0 %957
        %959 = vrot.lane.b32.xlu0 %v890, 96
        %v960 = vpop.permute.xlu0 %959
        %961 = vrot.lane.b32.xlu0 %v898, 96
        %v962 = vpop.permute.xlu0 %961
        %963 = vrot.lane.b32.xlu0 %v910, 96
        %v964 = vpop.permute.xlu0 %963
        %965 = vrot.lane.b32.xlu0 %v918, 96
        %v966 = vpop.permute.xlu0 %965
        %967 = vrot.lane.b32.xlu0 %v930, 96
        %v968 = vpop.permute.xlu0 %967
        %969 = vrot.lane.b32.xlu0 %v938, 96
        %v970 = vpop.permute.xlu0 %969
        %vm971 = vcmask 1046528
        %v972 = vrot.slane %v738, 1
        %v973 = vrot.slane %v739, 1
        %v974 = vsel %vm971, %v972, %v973
        %v975 = vrot.slane %v770, 1
        %v976 = vsel %vm971, %v973, %v975
        %v977 = vrot.slane %v740, 1
        %v978 = vrot.slane %v741, 1
        %v979 = vsel %vm971, %v977, %v978
        %v980 = vrot.slane %v771, 1
        %v981 = vsel %vm971, %v978, %v980
        %v982 = vrot.slane %v742, 1
        %v983 = vrot.slane %v743, 1
        %v984 = vsel %vm971, %v982, %v983
        %v985 = vrot.slane %v772, 1
        %v986 = vsel %vm971, %v983, %v985
        %v987 = vrot.slane %v744, 1
        %v988 = vrot.slane %v745, 1
        %v989 = vsel %vm971, %v987, %v988
        %v990 = vrot.slane %v773, 1
        %v991 = vsel %vm971, %v988, %v990
        %v992 = vrot.slane %v746, 1
        %v993 = vrot.slane %v747, 1
        %v994 = vsel %vm971, %v992, %v993
        %v995 = vrot.slane %v774, 1
        %v996 = vsel %vm971, %v993, %v995
        %v997 = vrot.slane %v748, 1
        %v998 = vrot.slane %v749, 1
        %v999 = vsel %vm971, %v997, %v998
        %v1000 = vrot.slane %v775, 1
        %v1001 = vsel %vm971, %v998, %v1000
        %v1002 = vrot.slane %v750, 1
        %v1003 = vrot.slane %v751, 1
        %v1004 = vsel %vm971, %v1002, %v1003
        %v1005 = vrot.slane %v776, 1
        %v1006 = vsel %vm971, %v1003, %v1005
        %v1007 = vrot.slane %v752, 1
        %v1008 = vrot.slane %v753, 1
        %v1009 = vsel %vm971, %v1007, %v1008
        %v1010 = vrot.slane %v777, 1
        %v1011 = vsel %vm971, %v1008, %v1010
        %1012 = vrot.lane.b32.xlu0 %v974, 64
        %v1013 = vpop.permute.xlu0 %1012
        %1014 = vrot.lane.b32.xlu0 %v976, 64
        %v1015 = vpop.permute.xlu0 %1014
        %1016 = vrot.lane.b32.xlu0 %v979, 64
        %v1017 = vpop.permute.xlu0 %1016
        %1018 = vrot.lane.b32.xlu0 %v981, 64
        %v1019 = vpop.permute.xlu0 %1018
        %1020 = vrot.lane.b32.xlu0 %v984, 64
        %v1021 = vpop.permute.xlu0 %1020
        %1022 = vrot.lane.b32.xlu0 %v986, 64
        %v1023 = vpop.permute.xlu0 %1022
        %1024 = vrot.lane.b32.xlu0 %v989, 64
        %v1025 = vpop.permute.xlu0 %1024
        %1026 = vrot.lane.b32.xlu0 %v991, 64
        %v1027 = vpop.permute.xlu0 %1026
        %1028 = vrot.lane.b32.xlu0 %v994, 64
        %v1029 = vpop.permute.xlu0 %1028
        %1030 = vrot.lane.b32.xlu0 %v996, 64
        %v1031 = vpop.permute.xlu0 %1030
        %1032 = vrot.lane.b32.xlu0 %v999, 64
        %v1033 = vpop.permute.xlu0 %1032
        %1034 = vrot.lane.b32.xlu0 %v1001, 64
        %v1035 = vpop.permute.xlu0 %1034
        %1036 = vrot.lane.b32.xlu0 %v1004, 64
        %v1037 = vpop.permute.xlu0 %1036
        %1038 = vrot.lane.b32.xlu0 %v1006, 64
        %v1039 = vpop.permute.xlu0 %1038
        %1040 = vrot.lane.b32.xlu0 %v1009, 64
        %v1041 = vpop.permute.xlu0 %1040
        %1042 = vrot.lane.b32.xlu0 %v1011, 64
        %v1043 = vpop.permute.xlu0 %1042
        %vm1044 = vsmask.f32 6400
        %v1045 = vrot.slane %v780, 1
        %v1046 = vrot.slane %v782, 2
        %v1047 = vor.u32 %v1045, %v1046
        %v1048 = vrot.slane %v791, 1
        %v1049 = vrot.slane %v787, 2
        %v1050 = vor.u32 %v1048, %v1049
        %v1051 = vsel %vm1044, %v1047, %v1050
        %v1052 = vshrl.u32 %v770, 16
        %v1054 = vrot.slane %v1052, 1
        %v1055 = vrot.slane %v795, 2
        %v1056 = vor.u32 %v1054, %v1055
        %v1057 = vsel %vm1044, %v1050, %v1056
        %v1058 = vrot.slane %v800, 1
        %v1059 = vrot.slane %v802, 2
        %v1060 = vor.u32 %v1058, %v1059
        %v1061 = vrot.slane %v811, 1
        %v1062 = vrot.slane %v807, 2
        %v1063 = vor.u32 %v1061, %v1062
        %v1064 = vsel %vm1044, %v1060, %v1063
        %v1065 = vshrl.u32 %v771, 16
        %v1067 = vrot.slane %v1065, 1
        %v1068 = vrot.slane %v815, 2
        %v1069 = vor.u32 %v1067, %v1068
        %v1070 = vsel %vm1044, %v1063, %v1069
        %v1071 = vrot.slane %v820, 1
        %v1072 = vrot.slane %v822, 2
        %v1073 = vor.u32 %v1071, %v1072
        %v1074 = vrot.slane %v831, 1
        %v1075 = vrot.slane %v827, 2
        %v1076 = vor.u32 %v1074, %v1075
        %v1077 = vsel %vm1044, %v1073, %v1076
        %v1078 = vshrl.u32 %v772, 16
        %v1080 = vrot.slane %v1078, 1
        %v1081 = vrot.slane %v835, 2
        %v1082 = vor.u32 %v1080, %v1081
        %v1083 = vsel %vm1044, %v1076, %v1082
        %v1084 = vrot.slane %v840, 1
        %v1085 = vrot.slane %v842, 2
        %v1086 = vor.u32 %v1084, %v1085
        %v1087 = vrot.slane %v851, 1
        %v1088 = vrot.slane %v847, 2
        %v1089 = vor.u32 %v1087, %v1088
        %v1090 = vsel %vm1044, %v1086, %v1089
        %v1091 = vshrl.u32 %v773, 16
        %v1093 = vrot.slane %v1091, 1
        %v1094 = vrot.slane %v855, 2
        %v1095 = vor.u32 %v1093, %v1094
        %v1096 = vsel %vm1044, %v1089, %v1095
        %v1097 = vrot.slane %v860, 1
        %v1098 = vrot.slane %v862, 2
        %v1099 = vor.u32 %v1097, %v1098
        %v1100 = vrot.slane %v871, 1
        %v1101 = vrot.slane %v867, 2
        %v1102 = vor.u32 %v1100, %v1101
        %v1103 = vsel %vm1044, %v1099, %v1102
        %v1104 = vshrl.u32 %v774, 16
        %v1106 = vrot.slane %v1104, 1
        %v1107 = vrot.slane %v875, 2
        %v1108 = vor.u32 %v1106, %v1107
        %v1109 = vsel %vm1044, %v1102, %v1108
        %v1110 = vrot.slane %v880, 1
        %v1111 = vrot.slane %v882, 2
        %v1112 = vor.u32 %v1110, %v1111
        %v1113 = vrot.slane %v891, 1
        %v1114 = vrot.slane %v887, 2
        %v1115 = vor.u32 %v1113, %v1114
        %v1116 = vsel %vm1044, %v1112, %v1115
        %v1117 = vshrl.u32 %v775, 16
        %v1119 = vrot.slane %v1117, 1
        %v1120 = vrot.slane %v895, 2
        %v1121 = vor.u32 %v1119, %v1120
        %v1122 = vsel %vm1044, %v1115, %v1121
        %v1123 = vrot.slane %v900, 1
        %v1124 = vrot.slane %v902, 2
        %v1125 = vor.u32 %v1123, %v1124
        %v1126 = vrot.slane %v911, 1
        %v1127 = vrot.slane %v907, 2
        %v1128 = vor.u32 %v1126, %v1127
        %v1129 = vsel %vm1044, %v1125, %v1128
        %v1130 = vshrl.u32 %v776, 16
        %v1132 = vrot.slane %v1130, 1
        %v1133 = vrot.slane %v915, 2
        %v1134 = vor.u32 %v1132, %v1133
        %v1135 = vsel %vm1044, %v1128, %v1134
        %v1136 = vrot.slane %v920, 1
        %v1137 = vrot.slane %v922, 2
        %v1138 = vor.u32 %v1136, %v1137
        %v1139 = vrot.slane %v931, 1
        %v1140 = vrot.slane %v927, 2
        %v1141 = vor.u32 %v1139, %v1140
        %v1142 = vsel %vm1044, %v1138, %v1141
        %v1143 = vshrl.u32 %v777, 16
        %v1145 = vrot.slane %v1143, 1
        %v1146 = vrot.slane %v935, 2
        %v1147 = vor.u32 %v1145, %v1146
        %v1148 = vsel %vm1044, %v1141, %v1147
        %1149 = vrot.lane.b32.xlu0 %v1051, 32
        %v1150 = vpop.permute.xlu0 %1149
        %1151 = vrot.lane.b32.xlu0 %v1057, 32
        %v1152 = vpop.permute.xlu0 %1151
        %1153 = vrot.lane.b32.xlu0 %v1064, 32
        %v1154 = vpop.permute.xlu0 %1153
        %1155 = vrot.lane.b32.xlu0 %v1070, 32
        %v1156 = vpop.permute.xlu0 %1155
        %1157 = vrot.lane.b32.xlu0 %v1077, 32
        %v1158 = vpop.permute.xlu0 %1157
        %1159 = vrot.lane.b32.xlu0 %v1083, 32
        %v1160 = vpop.permute.xlu0 %1159
        %1161 = vrot.lane.b32.xlu0 %v1090, 32
        %v1162 = vpop.permute.xlu0 %1161
        %1163 = vrot.lane.b32.xlu0 %v1096, 32
        %v1164 = vpop.permute.xlu0 %1163
        %1165 = vrot.lane.b32.xlu0 %v1103, 32
        %v1166 = vpop.permute.xlu0 %1165
        %1167 = vrot.lane.b32.xlu0 %v1109, 32
        %v1168 = vpop.permute.xlu0 %1167
        %1169 = vrot.lane.b32.xlu0 %v1116, 32
        %v1170 = vpop.permute.xlu0 %1169
        %1171 = vrot.lane.b32.xlu0 %v1122, 32
        %v1172 = vpop.permute.xlu0 %1171
        %1173 = vrot.lane.b32.xlu0 %v1129, 32
        %v1174 = vpop.permute.xlu0 %1173
        %1175 = vrot.lane.b32.xlu0 %v1135, 32
        %v1176 = vpop.permute.xlu0 %1175
        %1177 = vrot.lane.b32.xlu0 %v1142, 32
        %v1178 = vpop.permute.xlu0 %1177
        %1179 = vrot.lane.b32.xlu0 %v1148, 32
        %v1180 = vpop.permute.xlu0 %1179
        %vm1181 = vcmask 1045504
        %v1182 = vrot.slane %v738, 2
        %v1183 = vrot.slane %v739, 2
        %v1184 = vsel %vm1181, %v1182, %v1183
        %v1185 = vrot.slane %v770, 2
        %v1186 = vsel %vm1181, %v1183, %v1185
        %v1187 = vrot.slane %v740, 2
        %v1188 = vrot.slane %v741, 2
        %v1189 = vsel %vm1181, %v1187, %v1188
        %v1190 = vrot.slane %v771, 2
        %v1191 = vsel %vm1181, %v1188, %v1190
        %v1192 = vrot.slane %v742, 2
        %v1193 = vrot.slane %v743, 2
        %v1194 = vsel %vm1181, %v1192, %v1193
        %v1195 = vrot.slane %v772, 2
        %v1196 = vsel %vm1181, %v1193, %v1195
        %v1197 = vrot.slane %v744, 2
        %v1198 = vrot.slane %v745, 2
        %v1199 = vsel %vm1181, %v1197, %v1198
        %v1200 = vrot.slane %v773, 2
        %v1201 = vsel %vm1181, %v1198, %v1200
        %v1202 = vrot.slane %v746, 2
        %v1203 = vrot.slane %v747, 2
        %v1204 = vsel %vm1181, %v1202, %v1203
        %v1205 = vrot.slane %v774, 2
        %v1206 = vsel %vm1181, %v1203, %v1205
        %v1207 = vrot.slane %v748, 2
        %v1208 = vrot.slane %v749, 2
        %v1209 = vsel %vm1181, %v1207, %v1208
        %v1210 = vrot.slane %v775, 2
        %v1211 = vsel %vm1181, %v1208, %v1210
        %v1212 = vrot.slane %v750, 2
        %v1213 = vrot.slane %v751, 2
        %v1214 = vsel %vm1181, %v1212, %v1213
        %v1215 = vrot.slane %v776, 2
        %v1216 = vsel %vm1181, %v1213, %v1215
        %v1217 = vrot.slane %v752, 2
        %v1218 = vrot.slane %v753, 2
        %v1219 = vsel %vm1181, %v1217, %v1218
        %v1220 = vrot.slane %v777, 2
        %v1221 = vsel %vm1181, %v1218, %v1220
        %vm1222 = vcmask 785408
        %v1224 = vsel %vm1222, %v738, %v940
        %v1227 = vsel %vm1222, %v739, %v942
        %v1230 = vsel %vm1222, %v740, %v944
        %v1233 = vsel %vm1222, %v741, %v946
        %v1236 = vsel %vm1222, %v742, %v948
        %v1239 = vsel %vm1222, %v743, %v950
        %v1242 = vsel %vm1222, %v744, %v952
        %v1245 = vsel %vm1222, %v745, %v954
        %v1248 = vsel %vm1222, %v746, %v956
        %v1251 = vsel %vm1222, %v747, %v958
        %v1254 = vsel %vm1222, %v748, %v960
        %v1257 = vsel %vm1222, %v749, %v962
        %v1260 = vsel %vm1222, %v750, %v964
        %v1263 = vsel %vm1222, %v751, %v966
        %v1266 = vsel %vm1222, %v752, %v968
        %v1269 = vsel %vm1222, %v753, %v970
        %vm1271 = vcmask 523264
        %v1273 = vsel %vm1271, %v940, %v1013
        %v1276 = vsel %vm1271, %v942, %v1015
        %v1279 = vsel %vm1271, %v944, %v1017
        %v1282 = vsel %vm1271, %v946, %v1019
        %v1285 = vsel %vm1271, %v948, %v1021
        %v1288 = vsel %vm1271, %v950, %v1023
        %v1291 = vsel %vm1271, %v952, %v1025
        %v1294 = vsel %vm1271, %v954, %v1027
        %v1297 = vsel %vm1271, %v956, %v1029
        %v1300 = vsel %vm1271, %v958, %v1031
        %v1303 = vsel %vm1271, %v960, %v1033
        %v1306 = vsel %vm1271, %v962, %v1035
        %v1309 = vsel %vm1271, %v964, %v1037
        %v1312 = vsel %vm1271, %v966, %v1039
        %v1315 = vsel %vm1271, %v968, %v1041
        %v1318 = vsel %vm1271, %v970, %v1043
        %vm1320 = vcmask 261120
        %v1322 = vsel %vm1320, %v1013, %v1150
        %v1325 = vsel %vm1320, %v1015, %v1152
        %v1328 = vsel %vm1320, %v1017, %v1154
        %v1331 = vsel %vm1320, %v1019, %v1156
        %v1334 = vsel %vm1320, %v1021, %v1158
        %v1337 = vsel %vm1320, %v1023, %v1160
        %v1340 = vsel %vm1320, %v1025, %v1162
        %v1343 = vsel %vm1320, %v1027, %v1164
        %v1346 = vsel %vm1320, %v1029, %v1166
        %v1349 = vsel %vm1320, %v1031, %v1168
        %v1352 = vsel %vm1320, %v1033, %v1170
        %v1355 = vsel %vm1320, %v1035, %v1172
        %v1358 = vsel %vm1320, %v1037, %v1174
        %v1361 = vsel %vm1320, %v1039, %v1176
        %v1364 = vsel %vm1320, %v1041, %v1178
        %v1367 = vsel %vm1320, %v1043, %v1180
        %v1369 = vld [vmem:[%s1] sm:$0xff]
        %v1370 = vld [vmem:[%s1 + $0x8] sm:$0xff]
        %v1371 = vld [vmem:[%s1 + $0x10] sm:$0xff]
        %v1372 = vld [vmem:[%s1 + $0x18] sm:$0xff]
        %v1373 = vld [vmem:[%s1 + $0x20] sm:$0xff]
        %v1374 = vld [vmem:[%s1 + $0x28] sm:$0xff]
        %v1375 = vld [vmem:[%s1 + $0x30] sm:$0xff]
        %v1376 = vld [vmem:[%s1 + $0x38] sm:$0xff]
        %v1377 = vld [vmem:[%s1 + $0x40] sm:$0xff]
        %v1378 = vld [vmem:[%s1 + $0x48] sm:$0xff]
        %v1379 = vld [vmem:[%s1 + $0x50] sm:$0xff]
        %v1380 = vld [vmem:[%s1 + $0x58] sm:$0xff]
        %v1381 = vld [vmem:[%s1 + $0x60] sm:$0xff]
        %v1382 = vld [vmem:[%s1 + $0x68] sm:$0xff]
        %v1383 = vld [vmem:[%s1 + $0x70] sm:$0xff]
        %v1384 = vld [vmem:[%s1 + $0x78] sm:$0xff]
        %v1385 = vld [vmem:[%s1 + $0x80] sm:$0xff]
        %v1386 = vld [vmem:[%s1 + $0x88] sm:$0xff]
        %v1387 = vld [vmem:[%s1 + $0x90] sm:$0xff]
        %v1388 = vld [vmem:[%s1 + $0x98] sm:$0xff]
        %v1389 = vld [vmem:[%s1 + $0xa0] sm:$0xff]
        %v1390 = vld [vmem:[%s1 + $0xa8] sm:$0xff]
        %v1391 = vld [vmem:[%s1 + $0xb0] sm:$0xff]
        %v1392 = vld [vmem:[%s1 + $0xb8] sm:$0xff]
        %v1393 = vld [vmem:[%s1 + $0xc0] sm:$0xff]
        %v1394 = vld [vmem:[%s1 + $0xc8] sm:$0xff]
        %v1395 = vld [vmem:[%s1 + $0xd0] sm:$0xff]
        %v1396 = vld [vmem:[%s1 + $0xd8] sm:$0xff]
        %v1397 = vld [vmem:[%s1 + $0xe0] sm:$0xff]
        %v1398 = vld [vmem:[%s1 + $0xe8] sm:$0xff]
        %v1399 = vld [vmem:[%s1 + $0xf0] sm:$0xff]
        %v1400 = vld [vmem:[%s1 + $0xf8] sm:$0xff]
        %v1401 = vld [vmem:[%s1 + $0x100] sm:$0xff]
        %v1402 = vld [vmem:[%s1 + $0x108] sm:$0xff]
        %v1403 = vld [vmem:[%s1 + $0x110] sm:$0xff]
        %v1404 = vld [vmem:[%s1 + $0x118] sm:$0xff]
        %v1405 = vld [vmem:[%s1 + $0x120] sm:$0xff]
        %v1406 = vld [vmem:[%s1 + $0x128] sm:$0xff]
        %v1407 = vld [vmem:[%s1 + $0x130] sm:$0xff]
        %v1408 = vld [vmem:[%s1 + $0x138] sm:$0xff]
        %v1409 = vld [vmem:[%s1 + $0x140] sm:$0xff]
        %v1410 = vld [vmem:[%s1 + $0x148] sm:$0xff]
        %v1411 = vld [vmem:[%s1 + $0x150] sm:$0xff]
        %v1412 = vld [vmem:[%s1 + $0x158] sm:$0xff]
        %v1413 = vld [vmem:[%s1 + $0x160] sm:$0xff]
        %v1414 = vld [vmem:[%s1 + $0x168] sm:$0xff]
        %v1415 = vld [vmem:[%s1 + $0x170] sm:$0xff]
        %v1416 = vld [vmem:[%s1 + $0x178] sm:$0xff]
        %v1417 = vld [vmem:[%s1 + $0x180] sm:$0xff]
        %v1418 = vld [vmem:[%s1 + $0x188] sm:$0xff]
        %v1419 = vld [vmem:[%s1 + $0x190] sm:$0xff]
        %v1420 = vld [vmem:[%s1 + $0x198] sm:$0xff]
        %v1421 = vld [vmem:[%s1 + $0x1a0] sm:$0xff]
        %v1422 = vld [vmem:[%s1 + $0x1a8] sm:$0xff]
        %v1423 = vld [vmem:[%s1 + $0x1b0] sm:$0xff]
        %v1424 = vld [vmem:[%s1 + $0x1b8] sm:$0xff]
        %v1425 = vld [vmem:[%s1 + $0x1c0] sm:$0xff]
        %v1426 = vld [vmem:[%s1 + $0x1c8] sm:$0xff]
        %v1427 = vld [vmem:[%s1 + $0x1d0] sm:$0xff]
        %v1428 = vld [vmem:[%s1 + $0x1d8] sm:$0xff]
        %v1429 = vld [vmem:[%s2] sm:$0x3]
        %v1431 = vlaneseq
        %v1432 = vshrl.u32 %v1431, 7
        %v1433 = vsub.s32 0, %v1432
        %v1434 = vrot.slane %v1429, %v1433
        %v1435 = vlaneseq
        %v1436 = vshrl.u32 %v1435, 7
        %v1437 = vsub.s32 1, %v1436
        %v1438 = vrot.slane %v1429, %v1437
        %v1501 = vunpack.c.l.b16 %v1369
        %v1502 = vunpack.c.h.b16 %v1369
        %v1503 = vunpack.c.l.b16 %v1370
        %v1504 = vunpack.c.h.b16 %v1370
        %v1505 = vunpack.c.l.b16 %v1371
        %v1506 = vunpack.c.h.b16 %v1371
        %v1507 = vunpack.c.l.b16 %v1372
        %v1508 = vunpack.c.h.b16 %v1372
        %v1509 = vunpack.c.l.b16 %v1373
        %v1510 = vunpack.c.h.b16 %v1373
        %v1511 = vunpack.c.l.b16 %v1374
        %v1512 = vunpack.c.h.b16 %v1374
        %v1513 = vunpack.c.l.b16 %v1375
        %v1514 = vunpack.c.h.b16 %v1375
        %v1515 = vunpack.c.l.b16 %v1376
        %v1516 = vunpack.c.h.b16 %v1376
        %v1517 = vunpack.c.l.b16 %v1377
        %v1518 = vunpack.c.h.b16 %v1377
        %v1519 = vunpack.c.l.b16 %v1378
        %v1520 = vunpack.c.h.b16 %v1378
        %v1521 = vunpack.c.l.b16 %v1379
        %v1522 = vunpack.c.h.b16 %v1379
        %v1523 = vunpack.c.l.b16 %v1380
        %v1524 = vunpack.c.h.b16 %v1380
        %v1525 = vunpack.c.l.b16 %v1381
        %v1526 = vunpack.c.h.b16 %v1381
        %v1527 = vunpack.c.l.b16 %v1382
        %v1528 = vunpack.c.h.b16 %v1382
        %v1529 = vunpack.c.l.b16 %v1383
        %v1530 = vunpack.c.h.b16 %v1383
        %v1531 = vunpack.c.l.b16 %v1384
        %v1532 = vunpack.c.h.b16 %v1384
        %v1533 = vunpack.c.l.b16 %v1385
        %v1534 = vunpack.c.h.b16 %v1385
        %v1535 = vunpack.c.l.b16 %v1386
        %v1536 = vunpack.c.h.b16 %v1386
        %v1537 = vunpack.c.l.b16 %v1387
        %v1538 = vunpack.c.h.b16 %v1387
        %v1539 = vunpack.c.l.b16 %v1388
        %v1540 = vunpack.c.h.b16 %v1388
        %v1541 = vunpack.c.l.b16 %v1389
        %v1542 = vunpack.c.h.b16 %v1389
        %v1543 = vunpack.c.l.b16 %v1390
        %v1544 = vunpack.c.h.b16 %v1390
        %v1545 = vunpack.c.l.b16 %v1391
        %v1546 = vunpack.c.h.b16 %v1391
        %v1547 = vunpack.c.l.b16 %v1392
        %v1548 = vunpack.c.h.b16 %v1392
        %v1549 = vunpack.c.l.b16 %v1393
        %v1550 = vunpack.c.h.b16 %v1393
        %v1551 = vunpack.c.l.b16 %v1394
        %v1552 = vunpack.c.h.b16 %v1394
        %v1553 = vunpack.c.l.b16 %v1395
        %v1554 = vunpack.c.h.b16 %v1395
        %v1555 = vunpack.c.l.b16 %v1396
        %v1556 = vunpack.c.h.b16 %v1396
        %v1557 = vunpack.c.l.b16 %v1397
        %v1558 = vunpack.c.h.b16 %v1397
        %v1559 = vunpack.c.l.b16 %v1398
        %v1560 = vunpack.c.h.b16 %v1398
        %v1561 = vunpack.c.l.b16 %v1399
        %v1562 = vunpack.c.h.b16 %v1399
        %v1563 = vunpack.c.l.b16 %v1400
        %v1564 = vunpack.c.h.b16 %v1400
        %v1565 = vunpack.c.l.b16 %v1401
        %v1566 = vunpack.c.h.b16 %v1401
        %v1567 = vunpack.c.l.b16 %v1402
        %v1568 = vunpack.c.h.b16 %v1402
        %v1569 = vunpack.c.l.b16 %v1403
        %v1570 = vunpack.c.h.b16 %v1403
        %v1571 = vunpack.c.l.b16 %v1404
        %v1572 = vunpack.c.h.b16 %v1404
        %v1573 = vunpack.c.l.b16 %v1405
        %v1574 = vunpack.c.h.b16 %v1405
        %v1575 = vunpack.c.l.b16 %v1406
        %v1576 = vunpack.c.h.b16 %v1406
        %v1577 = vunpack.c.l.b16 %v1407
        %v1578 = vunpack.c.h.b16 %v1407
        %v1579 = vunpack.c.l.b16 %v1408
        %v1580 = vunpack.c.h.b16 %v1408
        %v1581 = vunpack.c.l.b16 %v1409
        %v1582 = vunpack.c.h.b16 %v1409
        %v1583 = vunpack.c.l.b16 %v1410
        %v1584 = vunpack.c.h.b16 %v1410
        %v1585 = vunpack.c.l.b16 %v1411
        %v1586 = vunpack.c.h.b16 %v1411
        %v1587 = vunpack.c.l.b16 %v1412
        %v1588 = vunpack.c.h.b16 %v1412
        %v1589 = vunpack.c.l.b16 %v1413
        %v1590 = vunpack.c.h.b16 %v1413
        %v1591 = vunpack.c.l.b16 %v1414
        %v1592 = vunpack.c.h.b16 %v1414
        %v1593 = vunpack.c.l.b16 %v1415
        %v1594 = vunpack.c.h.b16 %v1415
        %v1595 = vunpack.c.l.b16 %v1416
        %v1596 = vunpack.c.h.b16 %v1416
        %v1597 = vunpack.c.l.b16 %v1417
        %v1598 = vunpack.c.h.b16 %v1417
        %v1599 = vunpack.c.l.b16 %v1418
        %v1600 = vunpack.c.h.b16 %v1418
        %v1601 = vunpack.c.l.b16 %v1419
        %v1602 = vunpack.c.h.b16 %v1419
        %v1603 = vunpack.c.l.b16 %v1420
        %v1604 = vunpack.c.h.b16 %v1420
        %v1605 = vunpack.c.l.b16 %v1421
        %v1606 = vunpack.c.h.b16 %v1421
        %v1607 = vunpack.c.l.b16 %v1422
        %v1608 = vunpack.c.h.b16 %v1422
        %v1609 = vunpack.c.l.b16 %v1423
        %v1610 = vunpack.c.h.b16 %v1423
        %v1611 = vunpack.c.l.b16 %v1424
        %v1612 = vunpack.c.h.b16 %v1424
        %v1613 = vunpack.c.l.b16 %v1425
        %v1614 = vunpack.c.h.b16 %v1425
        %v1615 = vunpack.c.l.b16 %v1426
        %v1616 = vunpack.c.h.b16 %v1426
        %v1617 = vunpack.c.l.b16 %v1427
        %v1618 = vunpack.c.h.b16 %v1427
        %v1619 = vunpack.c.l.b16 %v1428
        %v1620 = vunpack.c.h.b16 %v1428
        %v1621 = vpack.c.b16 %v1503, %v1501
        %v1622 = vpack.c.b16 %v1504, %v1502
        %v1623 = vpack.c.b16 %v1507, %v1505
        %v1624 = vpack.c.b16 %v1508, %v1506
        %v1625 = vpack.c.b16 %v1511, %v1509
        %v1626 = vpack.c.b16 %v1512, %v1510
        %v1627 = vpack.c.b16 %v1515, %v1513
        %v1628 = vpack.c.b16 %v1516, %v1514
        %v1629 = vpack.c.b16 %v1519, %v1517
        %v1630 = vpack.c.b16 %v1520, %v1518
        %v1631 = vpack.c.b16 %v1523, %v1521
        %v1632 = vpack.c.b16 %v1524, %v1522
        %v1633 = vpack.c.b16 %v1527, %v1525
        %v1634 = vpack.c.b16 %v1528, %v1526
        %v1635 = vpack.c.b16 %v1531, %v1529
        %v1636 = vpack.c.b16 %v1532, %v1530
        %v1637 = vpack.c.b16 %v1535, %v1533
        %v1638 = vpack.c.b16 %v1536, %v1534
        %v1639 = vpack.c.b16 %v1539, %v1537
        %v1640 = vpack.c.b16 %v1540, %v1538
        %v1641 = vpack.c.b16 %v1543, %v1541
        %v1642 = vpack.c.b16 %v1544, %v1542
        %v1643 = vpack.c.b16 %v1547, %v1545
        %v1644 = vpack.c.b16 %v1548, %v1546
        %v1645 = vpack.c.b16 %v1551, %v1549
        %v1646 = vpack.c.b16 %v1552, %v1550
        %v1647 = vpack.c.b16 %v1555, %v1553
        %v1648 = vpack.c.b16 %v1556, %v1554
        %v1649 = vpack.c.b16 %v1559, %v1557
        %v1650 = vpack.c.b16 %v1560, %v1558
        %v1651 = vpack.c.b16 %v1563, %v1561
        %v1652 = vpack.c.b16 %v1564, %v1562
        %v1653 = vpack.c.b16 %v1567, %v1565
        %v1654 = vpack.c.b16 %v1568, %v1566
        %v1655 = vpack.c.b16 %v1571, %v1569
        %v1656 = vpack.c.b16 %v1572, %v1570
        %v1657 = vpack.c.b16 %v1575, %v1573
        %v1658 = vpack.c.b16 %v1576, %v1574
        %v1659 = vpack.c.b16 %v1579, %v1577
        %v1660 = vpack.c.b16 %v1580, %v1578
        %v1661 = vpack.c.b16 %v1583, %v1581
        %v1662 = vpack.c.b16 %v1584, %v1582
        %v1663 = vpack.c.b16 %v1587, %v1585
        %v1664 = vpack.c.b16 %v1588, %v1586
        %v1665 = vpack.c.b16 %v1591, %v1589
        %v1666 = vpack.c.b16 %v1592, %v1590
        %v1667 = vpack.c.b16 %v1595, %v1593
        %v1668 = vpack.c.b16 %v1596, %v1594
        %v1669 = vpack.c.b16 %v1599, %v1597
        %v1670 = vpack.c.b16 %v1600, %v1598
        %v1671 = vpack.c.b16 %v1603, %v1601
        %v1672 = vpack.c.b16 %v1604, %v1602
        %v1673 = vpack.c.b16 %v1607, %v1605
        %v1674 = vpack.c.b16 %v1608, %v1606
        %v1675 = vpack.c.b16 %v1611, %v1609
        %v1676 = vpack.c.b16 %v1612, %v1610
        %v1677 = vpack.c.b16 %v1615, %v1613
        %v1678 = vpack.c.b16 %v1616, %v1614
        %v1679 = vpack.c.b16 %v1619, %v1617
        %v1680 = vpack.c.b16 %v1620, %v1618
        %v1742 = vsel %vm1222, %v1184, 0
        %v1745 = vsel %vm1222, %v1186, 0
        %v1748 = vsel %vm1222, %v1189, 0
        %v1751 = vsel %vm1222, %v1191, 0
        %v1754 = vsel %vm1222, %v1194, 0
        %v1757 = vsel %vm1222, %v1196, 0
        %v1760 = vsel %vm1222, %v1199, 0
        %v1763 = vsel %vm1222, %v1201, 0
        %v1766 = vsel %vm1222, %v1204, 0
        %v1769 = vsel %vm1222, %v1206, 0
        %v1772 = vsel %vm1222, %v1209, 0
        %v1775 = vsel %vm1222, %v1211, 0
        %v1778 = vsel %vm1222, %v1214, 0
        %v1781 = vsel %vm1222, %v1216, 0
        %v1784 = vsel %vm1222, %v1219, 0
        %v1787 = vsel %vm1222, %v1221, 0
        %1789 = vmatprep.subr.bf16.mxu0 %v1622
        %1790 = vmatpush1.bf16.msra.mxu0 %v1621
        %1791 = vmatprep.subr.bf16.mxu0 %v1624
        %1792 = vmatpush1.bf16.msra.mxu0 %v1623
        %1793 = vmatprep.subr.bf16.mxu0 %v1626
        %1794 = vmatpush1.bf16.msra.mxu0 %v1625
        %1795 = vmatprep.subr.bf16.mxu0 %v1628
        %1796 = vmatpush1.bf16.msra.mxu0 %v1627
        %1797 = vmatprep.subr.bf16.mxu0 %v1630
        %1798 = vmatpush1.bf16.msra.mxu0 %v1629
        %1799 = vmatprep.subr.bf16.mxu0 %v1632
        %1800 = vmatpush1.bf16.msra.mxu0 %v1631
        %1801 = vmatprep.subr.bf16.mxu0 %v1634
        %1802 = vmatpush1.bf16.msra.mxu0 %v1633
        %1803 = vmatprep.subr.bf16.mxu0 %v1636
        %1804 = vmatpush1.bf16.msra.mxu0 %v1635
        %1805 = vmatprep.subr.bf16.mxu0 %v1638
        %1806 = vmatpush1.bf16.msra.mxu0 %v1637
        %1807 = vmatprep.subr.bf16.mxu0 %v1640
        %1808 = vmatpush1.bf16.msra.mxu0 %v1639
        %1809 = vmatprep.subr.bf16.mxu0 %v1642
        %1810 = vmatpush1.bf16.msra.mxu0 %v1641
        %1811 = vmatprep.subr.bf16.mxu0 %v1644
        %1812 = vmatpush1.bf16.msra.mxu0 %v1643
        %1813 = vmatprep.subr.bf16.mxu0 %v1646
        %1814 = vmatpush1.bf16.msra.mxu0 %v1645
        %1815 = vmatprep.subr.bf16.mxu0 %v1648
        %1816 = vmatpush1.bf16.msra.mxu0 %v1647
        %1817 = vmatprep.subr.bf16.mxu0 %v1650
        %1818 = vmatpush1.bf16.msra.mxu0 %v1649
        %1819 = vmatprep.subr.bf16.mxu0 %v1652
        %1820 = vmatpush1.bf16.msra.mxu0 %v1651
        %1821 = vmatprep.mubr.bf16.mxu0 %v1273
        %1822 = vmatmul.mubr.bf16.gmra.mrb[0].mxu0 %v1224
        %v1823 = vpop.f32.mrb[0].mxu0
        %v1824 = vadd.f32 %v1434, %v1823
        %v1825 = vpop.f32.mrb[0].mxu0
        %v1826 = vadd.f32 %v1438, %v1825
        %v1827 = vpop.f32.mrb[0].mxu0
        %v1828 = vadd.f32 %v1434, %v1827
        %v1829 = vpop.f32.mrb[0].mxu0
        %v1830 = vadd.f32 %v1438, %v1829
        %1831 = vmatprep.mubr.bf16.mxu0 %v1276
        %1832 = vmatmul.mubr.bf16.gmra.mrb[0].mxu0 %v1227
        %v1833 = vpop.f32.mrb[0].mxu0
        %v1834 = vadd.f32 %v1434, %v1833
        %v1835 = vpop.f32.mrb[0].mxu0
        %v1836 = vadd.f32 %v1438, %v1835
        %v1837 = vpop.f32.mrb[0].mxu0
        %v1838 = vadd.f32 %v1434, %v1837
        %v1839 = vpop.f32.mrb[0].mxu0
        %v1840 = vadd.f32 %v1438, %v1839
        %1841 = vmatprep.mubr.bf16.mxu0 %v1279
        %1842 = vmatmul.mubr.bf16.gmra.mrb[0].mxu0 %v1230
        %v1843 = vpop.f32.mrb[0].mxu0
        %v1844 = vadd.f32 %v1434, %v1843
        %v1845 = vpop.f32.mrb[0].mxu0
        %v1846 = vadd.f32 %v1438, %v1845
        %v1847 = vpop.f32.mrb[0].mxu0
        %v1848 = vadd.f32 %v1434, %v1847
        %v1849 = vpop.f32.mrb[0].mxu0
        %v1850 = vadd.f32 %v1438, %v1849
        %1851 = vmatprep.mubr.bf16.mxu0 %v1282
        %1852 = vmatmul.mubr.bf16.gmra.mrb[0].mxu0 %v1233
        %v1853 = vpop.f32.mrb[0].mxu0
        %v1854 = vadd.f32 %v1434, %v1853
        %v1855 = vpop.f32.mrb[0].mxu0
        %v1856 = vadd.f32 %v1438, %v1855
        %v1857 = vpop.f32.mrb[0].mxu0
        %v1858 = vadd.f32 %v1434, %v1857
        %v1859 = vpop.f32.mrb[0].mxu0
        %v1860 = vadd.f32 %v1438, %v1859
        %1861 = vmatprep.mubr.bf16.mxu0 %v1285
        %1862 = vmatmul.mubr.bf16.gmra.mrb[0].mxu0 %v1236
        %v1863 = vpop.f32.mrb[0].mxu0
        %v1864 = vadd.f32 %v1434, %v1863
        %v1865 = vpop.f32.mrb[0].mxu0
        %v1866 = vadd.f32 %v1438, %v1865
        %v1867 = vpop.f32.mrb[0].mxu0
        %v1868 = vadd.f32 %v1434, %v1867
        %v1869 = vpop.f32.mrb[0].mxu0
        %v1870 = vadd.f32 %v1438, %v1869
        %1871 = vmatprep.mubr.bf16.mxu0 %v1288
        %1872 = vmatmul.mubr.bf16.gmra.mrb[0].mxu0 %v1239
        %v1873 = vpop.f32.mrb[0].mxu0
        %v1874 = vadd.f32 %v1434, %v1873
        %v1875 = vpop.f32.mrb[0].mxu0
        %v1876 = vadd.f32 %v1438, %v1875
        %v1877 = vpop.f32.mrb[0].mxu0
        %v1878 = vadd.f32 %v1434, %v1877
        %v1879 = vpop.f32.mrb[0].mxu0
        %v1880 = vadd.f32 %v1438, %v1879
        %1881 = vmatprep.mubr.bf16.mxu0 %v1291
        %1882 = vmatmul.mubr.bf16.gmra.mrb[0].mxu0 %v1242
        %v1883 = vpop.f32.mrb[0].mxu0
        %v1884 = vadd.f32 %v1434, %v1883
        %v1885 = vpop.f32.mrb[0].mxu0
        %v1886 = vadd.f32 %v1438, %v1885
        %v1887 = vpop.f32.mrb[0].mxu0
        %v1888 = vadd.f32 %v1434, %v1887
        %v1889 = vpop.f32.mrb[0].mxu0
        %v1890 = vadd.f32 %v1438, %v1889
        %1891 = vmatprep.mubr.bf16.mxu0 %v1294
        %1892 = vmatmul.mubr.bf16.gmra.mrb[0].mxu0 %v1245
        %v1893 = vpop.f32.mrb[0].mxu0
        %v1894 = vadd.f32 %v1434, %v1893
        %v1895 = vpop.f32.mrb[0].mxu0
        %v1896 = vadd.f32 %v1438, %v1895
        %v1897 = vpop.f32.mrb[0].mxu0
        %v1898 = vadd.f32 %v1434, %v1897
        %v1899 = vpop.f32.mrb[0].mxu0
        %v1900 = vadd.f32 %v1438, %v1899
        %1901 = vmatprep.mubr.bf16.mxu0 %v1297
        %1902 = vmatmul.mubr.bf16.gmra.mrb[0].mxu0 %v1248
        %v1903 = vpop.f32.mrb[0].mxu0
        %v1904 = vadd.f32 %v1434, %v1903
        %v1905 = vpop.f32.mrb[0].mxu0
        %v1906 = vadd.f32 %v1438, %v1905
        %v1907 = vpop.f32.mrb[0].mxu0
        %v1908 = vadd.f32 %v1434, %v1907
        %v1909 = vpop.f32.mrb[0].mxu0
        %v1910 = vadd.f32 %v1438, %v1909
        %1911 = vmatprep.mubr.bf16.mxu0 %v1300
        %1912 = vmatmul.mubr.bf16.gmra.mrb[0].mxu0 %v1251
        %v1913 = vpop.f32.mrb[0].mxu0
        %v1914 = vadd.f32 %v1434, %v1913
        %v1915 = vpop.f32.mrb[0].mxu0
        %v1916 = vadd.f32 %v1438, %v1915
        %v1917 = vpop.f32.mrb[0].mxu0
        %v1918 = vadd.f32 %v1434, %v1917
        %v1919 = vpop.f32.mrb[0].mxu0
        %v1920 = vadd.f32 %v1438, %v1919
        %1921 = vmatprep.mubr.bf16.mxu0 %v1303
        %1922 = vmatmul.mubr.bf16.gmra.mrb[0].mxu0 %v1254
        %v1923 = vpop.f32.mrb[0].mxu0
        %v1924 = vadd.f32 %v1434, %v1923
        %v1925 = vpop.f32.mrb[0].mxu0
        %v1926 = vadd.f32 %v1438, %v1925
        %v1927 = vpop.f32.mrb[0].mxu0
        %v1928 = vadd.f32 %v1434, %v1927
        %v1929 = vpop.f32.mrb[0].mxu0
        %v1930 = vadd.f32 %v1438, %v1929
        %1931 = vmatprep.mubr.bf16.mxu0 %v1306
        %1932 = vmatmul.mubr.bf16.gmra.mrb[0].mxu0 %v1257
        %v1933 = vpop.f32.mrb[0].mxu0
        %v1934 = vadd.f32 %v1434, %v1933
        %v1935 = vpop.f32.mrb[0].mxu0
        %v1936 = vadd.f32 %v1438, %v1935
        %v1937 = vpop.f32.mrb[0].mxu0
        %v1938 = vadd.f32 %v1434, %v1937
        %v1939 = vpop.f32.mrb[0].mxu0
        %v1940 = vadd.f32 %v1438, %v1939
        %1941 = vmatprep.mubr.bf16.mxu0 %v1309
        %1942 = vmatmul.mubr.bf16.gmra.mrb[0].mxu0 %v1260
        %v1943 = vpop.f32.mrb[0].mxu0
        %v1944 = vadd.f32 %v1434, %v1943
        %v1945 = vpop.f32.mrb[0].mxu0
        %v1946 = vadd.f32 %v1438, %v1945
        %v1947 = vpop.f32.mrb[0].mxu0
        %v1948 = vadd.f32 %v1434, %v1947
        %v1949 = vpop.f32.mrb[0].mxu0
        %v1950 = vadd.f32 %v1438, %v1949
        %1951 = vmatprep.mubr.bf16.mxu0 %v1312
        %1952 = vmatmul.mubr.bf16.gmra.mrb[0].mxu0 %v1263
        %v1953 = vpop.f32.mrb[0].mxu0
        %v1954 = vadd.f32 %v1434, %v1953
        %v1955 = vpop.f32.mrb[0].mxu0
        %v1956 = vadd.f32 %v1438, %v1955
        %v1957 = vpop.f32.mrb[0].mxu0
        %v1958 = vadd.f32 %v1434, %v1957
        %v1959 = vpop.f32.mrb[0].mxu0
        %v1960 = vadd.f32 %v1438, %v1959
        %1961 = vmatprep.mubr.bf16.mxu0 %v1315
        %1962 = vmatmul.mubr.bf16.gmra.mrb[0].mxu0 %v1266
        %v1963 = vpop.f32.mrb[0].mxu0
        %v1964 = vadd.f32 %v1434, %v1963
        %v1965 = vpop.f32.mrb[0].mxu0
        %v1966 = vadd.f32 %v1438, %v1965
        %v1967 = vpop.f32.mrb[0].mxu0
        %v1968 = vadd.f32 %v1434, %v1967
        %v1969 = vpop.f32.mrb[0].mxu0
        %v1970 = vadd.f32 %v1438, %v1969
        %1971 = vmatprep.mubr.bf16.mxu0 %v1318
        %1972 = vmatmul.mubr.bf16.gmra.mrb[0].mxu0 %v1269
        %v1973 = vpop.f32.mrb[0].mxu0
        %v1974 = vadd.f32 %v1434, %v1973
        %v1975 = vpop.f32.mrb[0].mxu0
        %v1976 = vadd.f32 %v1438, %v1975
        %v1977 = vpop.f32.mrb[0].mxu0
        %v1978 = vadd.f32 %v1434, %v1977
        %v1979 = vpop.f32.mrb[0].mxu0
        %v1980 = vadd.f32 %v1438, %v1979
        %1981 = vdwg.mxu0
        %1982 = vmatprep.subr.bf16.mxu0 %v1654
        %1983 = vmatpush1.bf16.msra.mxu0 %v1653
        %1984 = vmatprep.subr.bf16.mxu0 %v1656
        %1985 = vmatpush1.bf16.msra.mxu0 %v1655
        %1986 = vmatprep.subr.bf16.mxu0 %v1658
        %1987 = vmatpush1.bf16.msra.mxu0 %v1657
        %1988 = vmatprep.subr.bf16.mxu0 %v1660
        %1989 = vmatpush1.bf16.msra.mxu0 %v1659
        %1990 = vmatprep.subr.bf16.mxu0 %v1662
        %1991 = vmatpush1.bf16.msra.mxu0 %v1661
        %1992 = vmatprep.subr.bf16.mxu0 %v1664
        %1993 = vmatpush1.bf16.msra.mxu0 %v1663
        %1994 = vmatprep.subr.bf16.mxu0 %v1666
        %1995 = vmatpush1.bf16.msra.mxu0 %v1665
        %1996 = vmatprep.subr.bf16.mxu0 %v1668
        %1997 = vmatpush1.bf16.msra.mxu0 %v1667
        %1998 = vmatprep.subr.bf16.mxu0 %v1670
        %1999 = vmatpush1.bf16.msra.mxu0 %v1669
        %2000 = vmatprep.subr.bf16.mxu0 %v1672
        %2001 = vmatpush1.bf16.msra.mxu0 %v1671
        %2002 = vmatprep.subr.bf16.mxu0 %v1674
        %2003 = vmatpush1.bf16.msra.mxu0 %v1673
        %2004 = vmatprep.subr.bf16.mxu0 %v1676
        %2005 = vmatpush1.bf16.msra.mxu0 %v1675
        %2006 = vmatprep.subr.bf16.mxu0 %v1678
        %2007 = vmatpush1.bf16.msra.mxu0 %v1677
        %2008 = vmatprep.subr.bf16.mxu0 %v1680
        %2009 = vmatpush1.bf16.msra.mxu0 %v1679
        %2010 = vmatprep.subr.bf16.mxu0 0
        %2011 = vmatpush1.bf16.msra.mxu0 0
        %2012 = vmatprep.subr.bf16.mxu0 0
        %2013 = vmatpush1.bf16.msra.mxu0 0
        %2014 = vmatprep.mubr.bf16.mxu0 %v1742
        %2015 = vmatmul.mubr.bf16.gmra.mrb[0].mxu0 %v1322
        %v2016 = vpop.f32.mrb[0].mxu0
        %v2017 = vadd.f32 %v1824, %v2016
        %v2018 = vpop.f32.mrb[0].mxu0
        %v2019 = vadd.f32 %v1826, %v2018
        %v2020 = vpop.f32.mrb[0].mxu0
        %v2021 = vadd.f32 %v1828, %v2020
        %v2022 = vpop.f32.mrb[0].mxu0
        %v2023 = vadd.f32 %v1830, %v2022
        %2024 = vmatprep.mubr.bf16.mxu0 %v1745
        %2025 = vmatmul.mubr.bf16.gmra.mrb[0].mxu0 %v1325
        %v2026 = vpop.f32.mrb[0].mxu0
        %v2027 = vadd.f32 %v1834, %v2026
        %v2028 = vpop.f32.mrb[0].mxu0
        %v2029 = vadd.f32 %v1836, %v2028
        %v2030 = vpop.f32.mrb[0].mxu0
        %v2031 = vadd.f32 %v1838, %v2030
        %v2032 = vpop.f32.mrb[0].mxu0
        %v2033 = vadd.f32 %v1840, %v2032
        %2034 = vmatprep.mubr.bf16.mxu0 %v1748
        %2035 = vmatmul.mubr.bf16.gmra.mrb[0].mxu0 %v1328
        %v2036 = vpop.f32.mrb[0].mxu0
        %v2037 = vadd.f32 %v1844, %v2036
        %v2038 = vpop.f32.mrb[0].mxu0
        %v2039 = vadd.f32 %v1846, %v2038
        %v2040 = vpop.f32.mrb[0].mxu0
        %v2041 = vadd.f32 %v1848, %v2040
        %v2042 = vpop.f32.mrb[0].mxu0
        %v2043 = vadd.f32 %v1850, %v2042
        %2044 = vmatprep.mubr.bf16.mxu0 %v1751
        %2045 = vmatmul.mubr.bf16.gmra.mrb[0].mxu0 %v1331
        %v2046 = vpop.f32.mrb[0].mxu0
        %v2047 = vadd.f32 %v1854, %v2046
        %v2048 = vpop.f32.mrb[0].mxu0
        %v2049 = vadd.f32 %v1856, %v2048
        %v2050 = vpop.f32.mrb[0].mxu0
        %v2051 = vadd.f32 %v1858, %v2050
        %v2052 = vpop.f32.mrb[0].mxu0
        %v2053 = vadd.f32 %v1860, %v2052
        %2054 = vmatprep.mubr.bf16.mxu0 %v1754
        %2055 = vmatmul.mubr.bf16.gmra.mrb[0].mxu0 %v1334
        %v2056 = vpop.f32.mrb[0].mxu0
        %v2057 = vadd.f32 %v1864, %v2056
        %v2058 = vpop.f32.mrb[0].mxu0
        %v2059 = vadd.f32 %v1866, %v2058
        %v2060 = vpop.f32.mrb[0].mxu0
        %v2061 = vadd.f32 %v1868, %v2060
        %v2062 = vpop.f32.mrb[0].mxu0
        %v2063 = vadd.f32 %v1870, %v2062
        %2064 = vmatprep.mubr.bf16.mxu0 %v1757
        %2065 = vmatmul.mubr.bf16.gmra.mrb[0].mxu0 %v1337
        %v2066 = vpop.f32.mrb[0].mxu0
        %v2067 = vadd.f32 %v1874, %v2066
        %v2068 = vpop.f32.mrb[0].mxu0
        %v2069 = vadd.f32 %v1876, %v2068
        %v2070 = vpop.f32.mrb[0].mxu0
        %v2071 = vadd.f32 %v1878, %v2070
        %v2072 = vpop.f32.mrb[0].mxu0
        %v2073 = vadd.f32 %v1880, %v2072
        %2074 = vmatprep.mubr.bf16.mxu0 %v1760
        %2075 = vmatmul.mubr.bf16.gmra.mrb[0].mxu0 %v1340
        %v2076 = vpop.f32.mrb[0].mxu0
        %v2077 = vadd.f32 %v1884, %v2076
        %v2078 = vpop.f32.mrb[0].mxu0
        %v2079 = vadd.f32 %v1886, %v2078
        %v2080 = vpop.f32.mrb[0].mxu0
        %v2081 = vadd.f32 %v1888, %v2080
        %v2082 = vpop.f32.mrb[0].mxu0
        %v2083 = vadd.f32 %v1890, %v2082
        %2084 = vmatprep.mubr.bf16.mxu0 %v1763
        %2085 = vmatmul.mubr.bf16.gmra.mrb[0].mxu0 %v1343
        %v2086 = vpop.f32.mrb[0].mxu0
        %v2087 = vadd.f32 %v1894, %v2086
        %v2088 = vpop.f32.mrb[0].mxu0
        %v2089 = vadd.f32 %v1896, %v2088
        %v2090 = vpop.f32.mrb[0].mxu0
        %v2091 = vadd.f32 %v1898, %v2090
        %v2092 = vpop.f32.mrb[0].mxu0
        %v2093 = vadd.f32 %v1900, %v2092
        %2094 = vmatprep.mubr.bf16.mxu0 %v1766
        %2095 = vmatmul.mubr.bf16.gmra.mrb[0].mxu0 %v1346
        %v2096 = vpop.f32.mrb[0].mxu0
        %v2097 = vadd.f32 %v1904, %v2096
        %v2098 = vpop.f32.mrb[0].mxu0
        %v2099 = vadd.f32 %v1906, %v2098
        %v2100 = vpop.f32.mrb[0].mxu0
        %v2101 = vadd.f32 %v1908, %v2100
        %v2102 = vpop.f32.mrb[0].mxu0
        %v2103 = vadd.f32 %v1910, %v2102
        %2104 = vmatprep.mubr.bf16.mxu0 %v1769
        %2105 = vmatmul.mubr.bf16.gmra.mrb[0].mxu0 %v1349
        %v2106 = vpop.f32.mrb[0].mxu0
        %v2107 = vadd.f32 %v1914, %v2106
        %v2108 = vpop.f32.mrb[0].mxu0
        %v2109 = vadd.f32 %v1916, %v2108
        %v2110 = vpop.f32.mrb[0].mxu0
        %v2111 = vadd.f32 %v1918, %v2110
        %v2112 = vpop.f32.mrb[0].mxu0
        %v2113 = vadd.f32 %v1920, %v2112
        %2114 = vmatprep.mubr.bf16.mxu0 %v1772
        %2115 = vmatmul.mubr.bf16.gmra.mrb[0].mxu0 %v1352
        %v2116 = vpop.f32.mrb[0].mxu0
        %v2117 = vadd.f32 %v1924, %v2116
        %v2118 = vpop.f32.mrb[0].mxu0
        %v2119 = vadd.f32 %v1926, %v2118
        %v2120 = vpop.f32.mrb[0].mxu0
        %v2121 = vadd.f32 %v1928, %v2120
        %v2122 = vpop.f32.mrb[0].mxu0
        %v2123 = vadd.f32 %v1930, %v2122
        %2124 = vmatprep.mubr.bf16.mxu0 %v1775
        %2125 = vmatmul.mubr.bf16.gmra.mrb[0].mxu0 %v1355
        %v2126 = vpop.f32.mrb[0].mxu0
        %v2127 = vadd.f32 %v1934, %v2126
        %v2128 = vpop.f32.mrb[0].mxu0
        %v2129 = vadd.f32 %v1936, %v2128
        %v2130 = vpop.f32.mrb[0].mxu0
        %v2131 = vadd.f32 %v1938, %v2130
        %v2132 = vpop.f32.mrb[0].mxu0
        %v2133 = vadd.f32 %v1940, %v2132
        %2134 = vmatprep.mubr.bf16.mxu0 %v1778
        %2135 = vmatmul.mubr.bf16.gmra.mrb[0].mxu0 %v1358
        %v2136 = vpop.f32.mrb[0].mxu0
        %v2137 = vadd.f32 %v1944, %v2136
        %v2138 = vpop.f32.mrb[0].mxu0
        %v2139 = vadd.f32 %v1946, %v2138
        %v2140 = vpop.f32.mrb[0].mxu0
        %v2141 = vadd.f32 %v1948, %v2140
        %v2142 = vpop.f32.mrb[0].mxu0
        %v2143 = vadd.f32 %v1950, %v2142
        %2144 = vmatprep.mubr.bf16.mxu0 %v1781
        %2145 = vmatmul.mubr.bf16.gmra.mrb[0].mxu0 %v1361
        %v2146 = vpop.f32.mrb[0].mxu0
        %v2147 = vadd.f32 %v1954, %v2146
        %v2148 = vpop.f32.mrb[0].mxu0
        %v2149 = vadd.f32 %v1956, %v2148
        %v2150 = vpop.f32.mrb[0].mxu0
        %v2151 = vadd.f32 %v1958, %v2150
        %v2152 = vpop.f32.mrb[0].mxu0
        %v2153 = vadd.f32 %v1960, %v2152
        %2154 = vmatprep.mubr.bf16.mxu0 %v1784
        %2155 = vmatmul.mubr.bf16.gmra.mrb[0].mxu0 %v1364
        %v2156 = vpop.f32.mrb[0].mxu0
        %v2157 = vadd.f32 %v1964, %v2156
        %v2158 = vpop.f32.mrb[0].mxu0
        %v2159 = vadd.f32 %v1966, %v2158
        %v2160 = vpop.f32.mrb[0].mxu0
        %v2161 = vadd.f32 %v1968, %v2160
        %v2162 = vpop.f32.mrb[0].mxu0
        %v2163 = vadd.f32 %v1970, %v2162
        %2164 = vmatprep.mubr.bf16.mxu0 %v1787
        %2165 = vmatmul.mubr.bf16.gmra.mrb[0].mxu0 %v1367
        %v2166 = vpop.f32.mrb[0].mxu0
        %v2167 = vadd.f32 %v1974, %v2166
        %v2168 = vpop.f32.mrb[0].mxu0
        %v2169 = vadd.f32 %v1976, %v2168
        %v2170 = vpop.f32.mrb[0].mxu0
        %v2171 = vadd.f32 %v1978, %v2170
        %v2172 = vpop.f32.mrb[0].mxu0
        %v2173 = vadd.f32 %v1980, %v2172
        %2174 = vdwg.mxu0
        %v2175 = vmax.f32 %v2017, 0.0
        %v2176 = vmax.f32 %v2019, 0.0
        %v2177 = vmax.f32 %v2021, 0.0
        %v2178 = vmax.f32 %v2023, 0.0
        %v2179 = vmax.f32 %v2027, 0.0
        %v2180 = vmax.f32 %v2029, 0.0
        %v2181 = vmax.f32 %v2031, 0.0
        %v2182 = vmax.f32 %v2033, 0.0
        %v2183 = vmax.f32 %v2037, 0.0
        %v2184 = vmax.f32 %v2039, 0.0
        %v2185 = vmax.f32 %v2041, 0.0
        %v2186 = vmax.f32 %v2043, 0.0
        %v2187 = vmax.f32 %v2047, 0.0
        %v2188 = vmax.f32 %v2049, 0.0
        %v2189 = vmax.f32 %v2051, 0.0
        %v2190 = vmax.f32 %v2053, 0.0
        %v2191 = vmax.f32 %v2057, 0.0
        %v2192 = vmax.f32 %v2059, 0.0
        %v2193 = vmax.f32 %v2061, 0.0
        %v2194 = vmax.f32 %v2063, 0.0
        %v2195 = vmax.f32 %v2067, 0.0
        %v2196 = vmax.f32 %v2069, 0.0
        %v2197 = vmax.f32 %v2071, 0.0
        %v2198 = vmax.f32 %v2073, 0.0
        %v2199 = vmax.f32 %v2077, 0.0
        %v2200 = vmax.f32 %v2079, 0.0
        %v2201 = vmax.f32 %v2081, 0.0
        %v2202 = vmax.f32 %v2083, 0.0
        %v2203 = vmax.f32 %v2087, 0.0
        %v2204 = vmax.f32 %v2089, 0.0
        %v2205 = vmax.f32 %v2091, 0.0
        %v2206 = vmax.f32 %v2093, 0.0
        %v2207 = vmax.f32 %v2097, 0.0
        %v2208 = vmax.f32 %v2099, 0.0
        %v2209 = vmax.f32 %v2101, 0.0
        %v2210 = vmax.f32 %v2103, 0.0
        %v2211 = vmax.f32 %v2107, 0.0
        %v2212 = vmax.f32 %v2109, 0.0
        %v2213 = vmax.f32 %v2111, 0.0
        %v2214 = vmax.f32 %v2113, 0.0
        %v2215 = vmax.f32 %v2117, 0.0
        %v2216 = vmax.f32 %v2119, 0.0
        %v2217 = vmax.f32 %v2121, 0.0
        %v2218 = vmax.f32 %v2123, 0.0
        %v2219 = vmax.f32 %v2127, 0.0
        %v2220 = vmax.f32 %v2129, 0.0
        %v2221 = vmax.f32 %v2131, 0.0
        %v2222 = vmax.f32 %v2133, 0.0
        %v2223 = vmax.f32 %v2137, 0.0
        %v2224 = vmax.f32 %v2139, 0.0
        %v2225 = vmax.f32 %v2141, 0.0
        %v2226 = vmax.f32 %v2143, 0.0
        %v2227 = vmax.f32 %v2147, 0.0
        %v2228 = vmax.f32 %v2149, 0.0
        %v2229 = vmax.f32 %v2151, 0.0
        %v2230 = vmax.f32 %v2153, 0.0
        %v2231 = vmax.f32 %v2157, 0.0
        %v2232 = vmax.f32 %v2159, 0.0
        %v2233 = vmax.f32 %v2161, 0.0
        %v2234 = vmax.f32 %v2163, 0.0
        %v2235 = vmax.f32 %v2167, 0.0
        %v2236 = vmax.f32 %v2169, 0.0
        %v2237 = vmax.f32 %v2171, 0.0
        %v2238 = vmax.f32 %v2173, 0.0
        %v2239 = vpack.c.bf16 %v2177, %v2175
        %v2240 = vpack.c.bf16 %v2178, %v2176
        %v2241 = vpack.c.bf16 %v2181, %v2179
        %v2242 = vpack.c.bf16 %v2182, %v2180
        %v2243 = vpack.c.bf16 %v2185, %v2183
        %v2244 = vpack.c.bf16 %v2186, %v2184
        %v2245 = vpack.c.bf16 %v2189, %v2187
        %v2246 = vpack.c.bf16 %v2190, %v2188
        %v2247 = vpack.c.bf16 %v2193, %v2191
        %v2248 = vpack.c.bf16 %v2194, %v2192
        %v2249 = vpack.c.bf16 %v2197, %v2195
        %v2250 = vpack.c.bf16 %v2198, %v2196
        %v2251 = vpack.c.bf16 %v2201, %v2199
        %v2252 = vpack.c.bf16 %v2202, %v2200
        %v2253 = vpack.c.bf16 %v2205, %v2203
        %v2254 = vpack.c.bf16 %v2206, %v2204
        %v2255 = vpack.c.bf16 %v2209, %v2207
        %v2256 = vpack.c.bf16 %v2210, %v2208
        %v2257 = vpack.c.bf16 %v2213, %v2211
        %v2258 = vpack.c.bf16 %v2214, %v2212
        %v2259 = vpack.c.bf16 %v2217, %v2215
        %v2260 = vpack.c.bf16 %v2218, %v2216
        %v2261 = vpack.c.bf16 %v2221, %v2219
        %v2262 = vpack.c.bf16 %v2222, %v2220
        %v2263 = vpack.c.bf16 %v2225, %v2223
        %v2264 = vpack.c.bf16 %v2226, %v2224
        %v2265 = vpack.c.bf16 %v2229, %v2227
        %v2266 = vpack.c.bf16 %v2230, %v2228
        %v2267 = vpack.c.bf16 %v2233, %v2231
        %v2268 = vpack.c.bf16 %v2234, %v2232
        %v2269 = vpack.c.bf16 %v2237, %v2235
        %v2270 = vpack.c.bf16 %v2238, %v2236
        %v2271 = vld [vmem:[%s3] sm:$0xff]
        %v2272 = vld [vmem:[%s3 + $0x8] sm:$0xff]
        %v2273 = vld [vmem:[%s3 + $0x10] sm:$0xff]
        %v2274 = vld [vmem:[%s3 + $0x18] sm:$0xff]
        %v2275 = vld [vmem:[%s3 + $0x20] sm:$0xff]
        %v2276 = vld [vmem:[%s3 + $0x28] sm:$0xff]
        %v2277 = vld [vmem:[%s3 + $0x30] sm:$0xff]
        %v2278 = vld [vmem:[%s3 + $0x38] sm:$0xff]
        %v2279 = vld [vmem:[%s3 + $0x40] sm:$0xff]
        %v2280 = vld [vmem:[%s3 + $0x48] sm:$0xff]
        %v2281 = vld [vmem:[%s3 + $0x50] sm:$0xff]
        %v2282 = vld [vmem:[%s3 + $0x58] sm:$0xff]
        %v2283 = vld [vmem:[%s3 + $0x60] sm:$0xff]
        %v2284 = vld [vmem:[%s3 + $0x68] sm:$0xff]
        %v2285 = vld [vmem:[%s3 + $0x70] sm:$0xff]
        %v2286 = vld [vmem:[%s3 + $0x78] sm:$0xff]
        %v2303 = vunpack.c.l.b16 %v2271
        %v2304 = vunpack.c.h.b16 %v2271
        %v2305 = vunpack.c.l.b16 %v2272
        %v2306 = vunpack.c.h.b16 %v2272
        %v2307 = vunpack.c.l.b16 %v2273
        %v2308 = vunpack.c.h.b16 %v2273
        %v2309 = vunpack.c.l.b16 %v2274
        %v2310 = vunpack.c.h.b16 %v2274
        %v2311 = vunpack.c.l.b16 %v2275
        %v2312 = vunpack.c.h.b16 %v2275
        %v2313 = vunpack.c.l.b16 %v2276
        %v2314 = vunpack.c.h.b16 %v2276
        %v2315 = vunpack.c.l.b16 %v2277
        %v2316 = vunpack.c.h.b16 %v2277
        %v2317 = vunpack.c.l.b16 %v2278
        %v2318 = vunpack.c.h.b16 %v2278
        %v2319 = vunpack.c.l.b16 %v2279
        %v2320 = vunpack.c.h.b16 %v2279
        %v2321 = vunpack.c.l.b16 %v2280
        %v2322 = vunpack.c.h.b16 %v2280
        %v2323 = vunpack.c.l.b16 %v2281
        %v2324 = vunpack.c.h.b16 %v2281
        %v2325 = vunpack.c.l.b16 %v2282
        %v2326 = vunpack.c.h.b16 %v2282
        %v2327 = vunpack.c.l.b16 %v2283
        %v2328 = vunpack.c.h.b16 %v2283
        %v2329 = vunpack.c.l.b16 %v2284
        %v2330 = vunpack.c.h.b16 %v2284
        %v2331 = vunpack.c.l.b16 %v2285
        %v2332 = vunpack.c.h.b16 %v2285
        %v2333 = vunpack.c.l.b16 %v2286
        %v2334 = vunpack.c.h.b16 %v2286
        %v2335 = vpack.c.b16 %v2305, %v2303
        %v2336 = vpack.c.b16 %v2306, %v2304
        %v2337 = vpack.c.b16 %v2309, %v2307
        %v2338 = vpack.c.b16 %v2310, %v2308
        %v2339 = vpack.c.b16 %v2313, %v2311
        %v2340 = vpack.c.b16 %v2314, %v2312
        %v2341 = vpack.c.b16 %v2317, %v2315
        %v2342 = vpack.c.b16 %v2318, %v2316
        %v2343 = vpack.c.b16 %v2321, %v2319
        %v2344 = vpack.c.b16 %v2322, %v2320
        %v2345 = vpack.c.b16 %v2325, %v2323
        %v2346 = vpack.c.b16 %v2326, %v2324
        %v2347 = vpack.c.b16 %v2329, %v2327
        %v2348 = vpack.c.b16 %v2330, %v2328
        %v2349 = vpack.c.b16 %v2333, %v2331
        %v2350 = vpack.c.b16 %v2334, %v2332
        %2367 = vmatprep.subr.bf16.mxu0 %v2240
        %2368 = vmatpush1.bf16.msra.mxu0 %v2239
        %2369 = vmatprep.subr.bf16.mxu0 %v2242
        %2370 = vmatpush1.bf16.msra.mxu0 %v2241
        %2371 = vmatprep.subr.bf16.mxu0 %v2244
        %2372 = vmatpush1.bf16.msra.mxu0 %v2243
        %2373 = vmatprep.subr.bf16.mxu0 %v2246
        %2374 = vmatpush1.bf16.msra.mxu0 %v2245
        %2375 = vmatprep.subr.bf16.mxu0 %v2248
        %2376 = vmatpush1.bf16.msra.mxu0 %v2247
        %2377 = vmatprep.subr.bf16.mxu0 %v2250
        %2378 = vmatpush1.bf16.msra.mxu0 %v2249
        %2379 = vmatprep.subr.bf16.mxu0 %v2252
        %2380 = vmatpush1.bf16.msra.mxu0 %v2251
        %2381 = vmatprep.subr.bf16.mxu0 %v2254
        %2382 = vmatpush1.bf16.msra.mxu0 %v2253
        %2383 = vmatprep.subr.bf16.mxu0 %v2256
        %2384 = vmatpush1.bf16.msra.mxu0 %v2255
        %2385 = vmatprep.subr.bf16.mxu0 %v2258
        %2386 = vmatpush1.bf16.msra.mxu0 %v2257
        %2387 = vmatprep.subr.bf16.mxu0 %v2260
        %2388 = vmatpush1.bf16.msra.mxu0 %v2259
        %2389 = vmatprep.subr.bf16.mxu0 %v2262
        %2390 = vmatpush1.bf16.msra.mxu0 %v2261
        %2391 = vmatprep.subr.bf16.mxu0 %v2264
        %2392 = vmatpush1.bf16.msra.mxu0 %v2263
        %2393 = vmatprep.subr.bf16.mxu0 %v2266
        %2394 = vmatpush1.bf16.msra.mxu0 %v2265
        %2395 = vmatprep.subr.bf16.mxu0 %v2268
        %2396 = vmatpush1.bf16.msra.mxu0 %v2267
        %2397 = vmatprep.subr.bf16.mxu0 %v2270
        %2398 = vmatpush1.bf16.msra.mxu0 %v2269
        %2399 = vmatprep.mubr.bf16.mxu0 %v2336
        %2400 = vmatmul.mubr.bf16.gmra.mrb[0].mxu0 %v2335
        %v2401 = vpop.f32.mrb[0].mxu0
        %v2402 = vadd.f32 0.0, %v2401
        %v2403 = vpop.f32.mrb[0].mxu0
        %v2404 = vadd.f32 0.0, %v2403
        %v2405 = vpop.f32.mrb[0].mxu0
        %v2406 = vadd.f32 0.0, %v2405
        %v2407 = vpop.f32.mrb[0].mxu0
        %v2408 = vadd.f32 0.0, %v2407
        %2409 = vmatprep.mubr.bf16.mxu0 %v2338
        %2410 = vmatmul.mubr.bf16.gmra.mrb[0].mxu0 %v2337
        %v2411 = vpop.f32.mrb[0].mxu0
        %v2412 = vadd.f32 0.0, %v2411
        %v2413 = vpop.f32.mrb[0].mxu0
        %v2414 = vadd.f32 0.0, %v2413
        %v2415 = vpop.f32.mrb[0].mxu0
        %v2416 = vadd.f32 0.0, %v2415
        %v2417 = vpop.f32.mrb[0].mxu0
        %v2418 = vadd.f32 0.0, %v2417
        %2419 = vmatprep.mubr.bf16.mxu0 %v2340
        %2420 = vmatmul.mubr.bf16.gmra.mrb[0].mxu0 %v2339
        %v2421 = vpop.f32.mrb[0].mxu0
        %v2422 = vadd.f32 0.0, %v2421
        %v2423 = vpop.f32.mrb[0].mxu0
        %v2424 = vadd.f32 0.0, %v2423
        %v2425 = vpop.f32.mrb[0].mxu0
        %v2426 = vadd.f32 0.0, %v2425
        %v2427 = vpop.f32.mrb[0].mxu0
        %v2428 = vadd.f32 0.0, %v2427
        %2429 = vmatprep.mubr.bf16.mxu0 %v2342
        %2430 = vmatmul.mubr.bf16.gmra.mrb[0].mxu0 %v2341
        %v2431 = vpop.f32.mrb[0].mxu0
        %v2432 = vadd.f32 0.0, %v2431
        %v2433 = vpop.f32.mrb[0].mxu0
        %v2434 = vadd.f32 0.0, %v2433
        %v2435 = vpop.f32.mrb[0].mxu0
        %v2436 = vadd.f32 0.0, %v2435
        %v2437 = vpop.f32.mrb[0].mxu0
        %v2438 = vadd.f32 0.0, %v2437
        %2439 = vmatprep.mubr.bf16.mxu0 %v2344
        %2440 = vmatmul.mubr.bf16.gmra.mrb[0].mxu0 %v2343
        %v2441 = vpop.f32.mrb[0].mxu0
        %v2442 = vadd.f32 0.0, %v2441
        %v2443 = vpop.f32.mrb[0].mxu0
        %v2444 = vadd.f32 0.0, %v2443
        %v2445 = vpop.f32.mrb[0].mxu0
        %v2446 = vadd.f32 0.0, %v2445
        %v2447 = vpop.f32.mrb[0].mxu0
        %v2448 = vadd.f32 0.0, %v2447
        %2449 = vmatprep.mubr.bf16.mxu0 %v2346
        %2450 = vmatmul.mubr.bf16.gmra.mrb[0].mxu0 %v2345
        %v2451 = vpop.f32.mrb[0].mxu0
        %v2452 = vadd.f32 0.0, %v2451
        %v2453 = vpop.f32.mrb[0].mxu0
        %v2454 = vadd.f32 0.0, %v2453
        %v2455 = vpop.f32.mrb[0].mxu0
        %v2456 = vadd.f32 0.0, %v2455
        %v2457 = vpop.f32.mrb[0].mxu0
        %v2458 = vadd.f32 0.0, %v2457
        %2459 = vmatprep.mubr.bf16.mxu0 %v2348
        %2460 = vmatmul.mubr.bf16.gmra.mrb[0].mxu0 %v2347
        %v2461 = vpop.f32.mrb[0].mxu0
        %v2462 = vadd.f32 0.0, %v2461
        %v2463 = vpop.f32.mrb[0].mxu0
        %v2464 = vadd.f32 0.0, %v2463
        %v2465 = vpop.f32.mrb[0].mxu0
        %v2466 = vadd.f32 0.0, %v2465
        %v2467 = vpop.f32.mrb[0].mxu0
        %v2468 = vadd.f32 0.0, %v2467
        %2469 = vmatprep.mubr.bf16.mxu0 %v2350
        %2470 = vmatmul.mubr.bf16.gmra.mrb[0].mxu0 %v2349
        %v2471 = vpop.f32.mrb[0].mxu0
        %v2472 = vadd.f32 0.0, %v2471
        %v2473 = vpop.f32.mrb[0].mxu0
        %v2474 = vadd.f32 0.0, %v2473
        %v2475 = vpop.f32.mrb[0].mxu0
        %v2476 = vadd.f32 0.0, %v2475
        %v2477 = vpop.f32.mrb[0].mxu0
        %v2478 = vadd.f32 0.0, %v2477
        %2479 = vdwg.mxu0
        %v2480 = vld [vmem:[%s4] sm:$0xff]
        %v2481 = vld [vmem:[%s4 + $0x8] sm:$0xff]
        %v2482 = vld [vmem:[%s4 + $0x10] sm:$0xff]
        %v2483 = vld [vmem:[%s4 + $0x18] sm:$0xff]
        %v2484 = vld [vmem:[%s4 + $0x20] sm:$0xff]
        %v2485 = vld [vmem:[%s4 + $0x28] sm:$0xff]
        %v2486 = vld [vmem:[%s4 + $0x30] sm:$0xff]
        %v2487 = vld [vmem:[%s4 + $0x38] sm:$0xff]
        %v2488 = vld [vmem:[%s4 + $0x40] sm:$0xff]
        %v2489 = vld [vmem:[%s4 + $0x48] sm:$0xff]
        %v2490 = vld [vmem:[%s4 + $0x50] sm:$0xff]
        %v2491 = vld [vmem:[%s4 + $0x58] sm:$0xff]
        %v2492 = vld [vmem:[%s4 + $0x60] sm:$0xff]
        %v2493 = vld [vmem:[%s4 + $0x68] sm:$0xff]
        %v2494 = vld [vmem:[%s4 + $0x70] sm:$0xff]
        %v2495 = vld [vmem:[%s4 + $0x78] sm:$0xff]
        %v2512 = vunpack.c.l.b16 %v2480
        %v2513 = vunpack.c.h.b16 %v2480
        %v2514 = vunpack.c.l.b16 %v2481
        %v2515 = vunpack.c.h.b16 %v2481
        %v2516 = vunpack.c.l.b16 %v2482
        %v2517 = vunpack.c.h.b16 %v2482
        %v2518 = vunpack.c.l.b16 %v2483
        %v2519 = vunpack.c.h.b16 %v2483
        %v2520 = vunpack.c.l.b16 %v2484
        %v2521 = vunpack.c.h.b16 %v2484
        %v2522 = vunpack.c.l.b16 %v2485
        %v2523 = vunpack.c.h.b16 %v2485
        %v2524 = vunpack.c.l.b16 %v2486
        %v2525 = vunpack.c.h.b16 %v2486
        %v2526 = vunpack.c.l.b16 %v2487
        %v2527 = vunpack.c.h.b16 %v2487
        %v2528 = vunpack.c.l.b16 %v2488
        %v2529 = vunpack.c.h.b16 %v2488
        %v2530 = vunpack.c.l.b16 %v2489
        %v2531 = vunpack.c.h.b16 %v2489
        %v2532 = vunpack.c.l.b16 %v2490
        %v2533 = vunpack.c.h.b16 %v2490
        %v2534 = vunpack.c.l.b16 %v2491
        %v2535 = vunpack.c.h.b16 %v2491
        %v2536 = vunpack.c.l.b16 %v2492
        %v2537 = vunpack.c.h.b16 %v2492
        %v2538 = vunpack.c.l.b16 %v2493
        %v2539 = vunpack.c.h.b16 %v2493
        %v2540 = vunpack.c.l.b16 %v2494
        %v2541 = vunpack.c.h.b16 %v2494
        %v2542 = vunpack.c.l.b16 %v2495
        %v2543 = vunpack.c.h.b16 %v2495
        %v2544 = vpack.c.b16 %v2514, %v2512
        %v2545 = vpack.c.b16 %v2515, %v2513
        %v2546 = vpack.c.b16 %v2518, %v2516
        %v2547 = vpack.c.b16 %v2519, %v2517
        %v2548 = vpack.c.b16 %v2522, %v2520
        %v2549 = vpack.c.b16 %v2523, %v2521
        %v2550 = vpack.c.b16 %v2526, %v2524
        %v2551 = vpack.c.b16 %v2527, %v2525
        %v2552 = vpack.c.b16 %v2530, %v2528
        %v2553 = vpack.c.b16 %v2531, %v2529
        %v2554 = vpack.c.b16 %v2534, %v2532
        %v2555 = vpack.c.b16 %v2535, %v2533
        %v2556 = vpack.c.b16 %v2538, %v2536
        %v2557 = vpack.c.b16 %v2539, %v2537
        %v2558 = vpack.c.b16 %v2542, %v2540
        %v2559 = vpack.c.b16 %v2543, %v2541
        %2576 = vmatprep.subr.bf16.mxu0 %v2240
        %2577 = vmatpush1.bf16.msra.mxu0 %v2239
        %2578 = vmatprep.subr.bf16.mxu0 %v2242
        %2579 = vmatpush1.bf16.msra.mxu0 %v2241
        %2580 = vmatprep.subr.bf16.mxu0 %v2244
        %2581 = vmatpush1.bf16.msra.mxu0 %v2243
        %2582 = vmatprep.subr.bf16.mxu0 %v2246
        %2583 = vmatpush1.bf16.msra.mxu0 %v2245
        %2584 = vmatprep.subr.bf16.mxu0 %v2248
        %2585 = vmatpush1.bf16.msra.mxu0 %v2247
        %2586 = vmatprep.subr.bf16.mxu0 %v2250
        %2587 = vmatpush1.bf16.msra.mxu0 %v2249
        %2588 = vmatprep.subr.bf16.mxu0 %v2252
        %2589 = vmatpush1.bf16.msra.mxu0 %v2251
        %2590 = vmatprep.subr.bf16.mxu0 %v2254
        %2591 = vmatpush1.bf16.msra.mxu0 %v2253
        %2592 = vmatprep.subr.bf16.mxu0 %v2256
        %2593 = vmatpush1.bf16.msra.mxu0 %v2255
        %2594 = vmatprep.subr.bf16.mxu0 %v2258
        %2595 = vmatpush1.bf16.msra.mxu0 %v2257
        %2596 = vmatprep.subr.bf16.mxu0 %v2260
        %2597 = vmatpush1.bf16.msra.mxu0 %v2259
        %2598 = vmatprep.subr.bf16.mxu0 %v2262
        %2599 = vmatpush1.bf16.msra.mxu0 %v2261
        %2600 = vmatprep.subr.bf16.mxu0 %v2264
        %2601 = vmatpush1.bf16.msra.mxu0 %v2263
        %2602 = vmatprep.subr.bf16.mxu0 %v2266
        %2603 = vmatpush1.bf16.msra.mxu0 %v2265
        %2604 = vmatprep.subr.bf16.mxu0 %v2268
        %2605 = vmatpush1.bf16.msra.mxu0 %v2267
        %2606 = vmatprep.subr.bf16.mxu0 %v2270
        %2607 = vmatpush1.bf16.msra.mxu0 %v2269
        %2608 = vmatprep.mubr.bf16.mxu0 %v2545
        %2609 = vmatmul.mubr.bf16.gmra.mrb[0].mxu0 %v2544
        %v2610 = vpop.f32.mrb[0].mxu0
        %v2611 = vadd.f32 0.0, %v2610
        %v2612 = vpop.f32.mrb[0].mxu0
        %v2613 = vadd.f32 0.0, %v2612
        %v2614 = vpop.f32.mrb[0].mxu0
        %v2615 = vadd.f32 0.0, %v2614
        %v2616 = vpop.f32.mrb[0].mxu0
        %v2617 = vadd.f32 0.0, %v2616
        %2618 = vmatprep.mubr.bf16.mxu0 %v2547
        %2619 = vmatmul.mubr.bf16.gmra.mrb[0].mxu0 %v2546
        %v2620 = vpop.f32.mrb[0].mxu0
        %v2621 = vadd.f32 0.0, %v2620
        %v2622 = vpop.f32.mrb[0].mxu0
        %v2623 = vadd.f32 0.0, %v2622
        %v2624 = vpop.f32.mrb[0].mxu0
        %v2625 = vadd.f32 0.0, %v2624
        %v2626 = vpop.f32.mrb[0].mxu0
        %v2627 = vadd.f32 0.0, %v2626
        %2628 = vmatprep.mubr.bf16.mxu0 %v2549
        %2629 = vmatmul.mubr.bf16.gmra.mrb[0].mxu0 %v2548
        %v2630 = vpop.f32.mrb[0].mxu0
        %v2631 = vadd.f32 0.0, %v2630
        %v2632 = vpop.f32.mrb[0].mxu0
        %v2633 = vadd.f32 0.0, %v2632
        %v2634 = vpop.f32.mrb[0].mxu0
        %v2635 = vadd.f32 0.0, %v2634
        %v2636 = vpop.f32.mrb[0].mxu0
        %v2637 = vadd.f32 0.0, %v2636
        %2638 = vmatprep.mubr.bf16.mxu0 %v2551
        %2639 = vmatmul.mubr.bf16.gmra.mrb[0].mxu0 %v2550
        %v2640 = vpop.f32.mrb[0].mxu0
        %v2641 = vadd.f32 0.0, %v2640
        %v2642 = vpop.f32.mrb[0].mxu0
        %v2643 = vadd.f32 0.0, %v2642
        %v2644 = vpop.f32.mrb[0].mxu0
        %v2645 = vadd.f32 0.0, %v2644
        %v2646 = vpop.f32.mrb[0].mxu0
        %v2647 = vadd.f32 0.0, %v2646
        %2648 = vmatprep.mubr.bf16.mxu0 %v2553
        %2649 = vmatmul.mubr.bf16.gmra.mrb[0].mxu0 %v2552
        %v2650 = vpop.f32.mrb[0].mxu0
        %v2651 = vadd.f32 0.0, %v2650
        %v2652 = vpop.f32.mrb[0].mxu0
        %v2653 = vadd.f32 0.0, %v2652
        %v2654 = vpop.f32.mrb[0].mxu0
        %v2655 = vadd.f32 0.0, %v2654
        %v2656 = vpop.f32.mrb[0].mxu0
        %v2657 = vadd.f32 0.0, %v2656
        %2658 = vmatprep.mubr.bf16.mxu0 %v2555
        %2659 = vmatmul.mubr.bf16.gmra.mrb[0].mxu0 %v2554
        %v2660 = vpop.f32.mrb[0].mxu0
        %v2661 = vadd.f32 0.0, %v2660
        %v2662 = vpop.f32.mrb[0].mxu0
        %v2663 = vadd.f32 0.0, %v2662
        %v2664 = vpop.f32.mrb[0].mxu0
        %v2665 = vadd.f32 0.0, %v2664
        %v2666 = vpop.f32.mrb[0].mxu0
        %v2667 = vadd.f32 0.0, %v2666
        %2668 = vmatprep.mubr.bf16.mxu0 %v2557
        %2669 = vmatmul.mubr.bf16.gmra.mrb[0].mxu0 %v2556
        %v2670 = vpop.f32.mrb[0].mxu0
        %v2671 = vadd.f32 0.0, %v2670
        %v2672 = vpop.f32.mrb[0].mxu0
        %v2673 = vadd.f32 0.0, %v2672
        %v2674 = vpop.f32.mrb[0].mxu0
        %v2675 = vadd.f32 0.0, %v2674
        %v2676 = vpop.f32.mrb[0].mxu0
        %v2677 = vadd.f32 0.0, %v2676
        %2678 = vmatprep.mubr.bf16.mxu0 %v2559
        %2679 = vmatmul.mubr.bf16.gmra.mrb[0].mxu0 %v2558
        %v2680 = vpop.f32.mrb[0].mxu0
        %v2681 = vadd.f32 0.0, %v2680
        %v2682 = vpop.f32.mrb[0].mxu0
        %v2683 = vadd.f32 0.0, %v2682
        %v2684 = vpop.f32.mrb[0].mxu0
        %v2685 = vadd.f32 0.0, %v2684
        %v2686 = vpop.f32.mrb[0].mxu0
        %v2687 = vadd.f32 0.0, %v2686
        %2688 = vdwg.mxu0
        %v2689 = vmax.f32 %v2402, %v2611
        %v2690 = vmax.f32 %v2404, %v2613
        %v2691 = vmax.f32 %v2406, %v2615
        %v2692 = vmax.f32 %v2408, %v2617
        %v2693 = vmax.f32 %v2412, %v2621
        %v2694 = vmax.f32 %v2414, %v2623
        %v2695 = vmax.f32 %v2416, %v2625
        %v2696 = vmax.f32 %v2418, %v2627
        %v2697 = vmax.f32 %v2422, %v2631
        %v2698 = vmax.f32 %v2424, %v2633
        %v2699 = vmax.f32 %v2426, %v2635
        %v2700 = vmax.f32 %v2428, %v2637
        %v2701 = vmax.f32 %v2432, %v2641
        %v2702 = vmax.f32 %v2434, %v2643
        %v2703 = vmax.f32 %v2436, %v2645
        %v2704 = vmax.f32 %v2438, %v2647
        %v2705 = vmax.f32 %v2442, %v2651
        %v2706 = vmax.f32 %v2444, %v2653
        %v2707 = vmax.f32 %v2446, %v2655
        %v2708 = vmax.f32 %v2448, %v2657
        %v2709 = vmax.f32 %v2452, %v2661
        %v2710 = vmax.f32 %v2454, %v2663
        %v2711 = vmax.f32 %v2456, %v2665
        %v2712 = vmax.f32 %v2458, %v2667
        %v2713 = vmax.f32 %v2462, %v2671
        %v2714 = vmax.f32 %v2464, %v2673
        %v2715 = vmax.f32 %v2466, %v2675
        %v2716 = vmax.f32 %v2468, %v2677
        %v2717 = vmax.f32 %v2472, %v2681
        %v2718 = vmax.f32 %v2474, %v2683
        %v2719 = vmax.f32 %v2476, %v2685
        %v2720 = vmax.f32 %v2478, %v2687
        %v2721 = vpack.c.bf16 %v2691, %v2689
        %v2722 = vpack.c.bf16 %v2692, %v2690
        %v2723 = vpack.c.bf16 %v2695, %v2693
        %v2724 = vpack.c.bf16 %v2696, %v2694
        %v2725 = vpack.c.bf16 %v2699, %v2697
        %v2726 = vpack.c.bf16 %v2700, %v2698
        %v2727 = vpack.c.bf16 %v2703, %v2701
        %v2728 = vpack.c.bf16 %v2704, %v2702
        %v2729 = vpack.c.bf16 %v2707, %v2705
        %v2730 = vpack.c.bf16 %v2708, %v2706
        %v2731 = vpack.c.bf16 %v2711, %v2709
        %v2732 = vpack.c.bf16 %v2712, %v2710
        %v2733 = vpack.c.bf16 %v2715, %v2713
        %v2734 = vpack.c.bf16 %v2716, %v2714
        %v2735 = vpack.c.bf16 %v2719, %v2717
        %v2736 = vpack.c.bf16 %v2720, %v2718
        %v2737 = vld [vmem:[%s5] sm:$0xf]
        %v2738 = vld [vmem:[%s5 + $0x4] sm:$0xf]
        %v2739 = vld [vmem:[%s5 + $0x8] sm:$0xf]
        %v2740 = vld [vmem:[%s5 + $0xc] sm:$0xf]
        %v2741 = vld [vmem:[%s5 + $0x10] sm:$0xf]
        %v2742 = vld [vmem:[%s5 + $0x14] sm:$0xf]
        %v2743 = vld [vmem:[%s5 + $0x18] sm:$0xf]
        %v2744 = vld [vmem:[%s5 + $0x1c] sm:$0xf]
        %v2745 = vld [vmem:[%s5 + $0x20] sm:$0xf]
        %v2746 = vld [vmem:[%s5 + $0x24] sm:$0xf]
        %v2747 = vld [vmem:[%s5 + $0x28] sm:$0xf]
        %v2748 = vld [vmem:[%s5 + $0x2c] sm:$0xf]
        %v2749 = vld [vmem:[%s5 + $0x30] sm:$0xf]
        %v2750 = vld [vmem:[%s5 + $0x34] sm:$0xf]
        %v2751 = vld [vmem:[%s5 + $0x38] sm:$0xf]
        %v2752 = vld [vmem:[%s5 + $0x3c] sm:$0xf]
        %v2753 = vld [vmem:[%s5 + $0x40] sm:$0xf]
        %v2754 = vld [vmem:[%s5 + $0x44] sm:$0xf]
        %v2755 = vld [vmem:[%s5 + $0x48] sm:$0xf]
        %v2756 = vld [vmem:[%s5 + $0x4c] sm:$0xf]
        %v2757 = vld [vmem:[%s5 + $0x50] sm:$0xf]
        %v2779 = vunpack.c.l.b16 %v2737
        %v2780 = vunpack.c.l.b16 %v2738
        %v2781 = vunpack.c.l.b16 %v2739
        %v2782 = vunpack.c.l.b16 %v2740
        %v2783 = vunpack.c.l.b16 %v2741
        %v2784 = vunpack.c.l.b16 %v2742
        %v2785 = vunpack.c.l.b16 %v2743
        %v2786 = vunpack.c.l.b16 %v2744
        %v2787 = vunpack.c.l.b16 %v2745
        %v2788 = vunpack.c.l.b16 %v2746
        %v2789 = vunpack.c.l.b16 %v2747
        %v2790 = vunpack.c.l.b16 %v2748
        %v2791 = vunpack.c.l.b16 %v2749
        %v2792 = vunpack.c.l.b16 %v2750
        %v2793 = vunpack.c.l.b16 %v2751
        %v2794 = vunpack.c.l.b16 %v2752
        %v2795 = vunpack.c.l.b16 %v2753
        %v2796 = vunpack.c.l.b16 %v2754
        %v2797 = vunpack.c.l.b16 %v2755
        %v2798 = vunpack.c.l.b16 %v2756
        %v2799 = vunpack.c.l.b16 %v2757
        %v2800 = vpack.c.b16 %v2780, %v2779
        %v2801 = vpack.c.b16 %v2782, %v2781
        %v2802 = vpack.c.b16 %v2784, %v2783
        %v2803 = vpack.c.b16 %v2786, %v2785
        %v2804 = vpack.c.b16 %v2788, %v2787
        %v2805 = vpack.c.b16 %v2790, %v2789
        %v2806 = vpack.c.b16 %v2792, %v2791
        %v2807 = vpack.c.b16 %v2794, %v2793
        %v2808 = vpack.c.b16 %v2796, %v2795
        %v2809 = vpack.c.b16 %v2798, %v2797
        %v2810 = vpack.c.b16 %v2799, %v2799
        %vm2821 = vcmask 326656
        %v2823 = vsel %vm2821, %v2722, 0
        %v2826 = vsel %vm2821, %v2724, 0
        %v2829 = vsel %vm2821, %v2726, 0
        %v2832 = vsel %vm2821, %v2728, 0
        %v2835 = vsel %vm2821, %v2730, 0
        %v2838 = vsel %vm2821, %v2732, 0
        %v2841 = vsel %vm2821, %v2734, 0
        %v2844 = vsel %vm2821, %v2736, 0
        %vm2846 = vcmask 1043456
        %v2848 = vsel %vm2846, %v2810, 0
        %2850 = vmatprep.subr.bf16.mxu0 0
        %2851 = vmatpush1.bf16.msra.mxu0 %v2800
        %2852 = vmatprep.subr.bf16.mxu0 0
        %2853 = vmatpush1.bf16.msra.mxu0 %v2801
        %2854 = vmatprep.subr.bf16.mxu0 0
        %2855 = vmatpush1.bf16.msra.mxu0 %v2802
        %2856 = vmatprep.subr.bf16.mxu0 0
        %2857 = vmatpush1.bf16.msra.mxu0 %v2803
        %2858 = vmatprep.subr.bf16.mxu0 0
        %2859 = vmatpush1.bf16.msra.mxu0 %v2804
        %2860 = vmatprep.subr.bf16.mxu0 0
        %2861 = vmatpush1.bf16.msra.mxu0 %v2805
        %2862 = vmatprep.subr.bf16.mxu0 0
        %2863 = vmatpush1.bf16.msra.mxu0 %v2806
        %2864 = vmatprep.subr.bf16.mxu0 0
        %2865 = vmatpush1.bf16.msra.mxu0 %v2807
        %2866 = vmatprep.subr.bf16.mxu0 0
        %2867 = vmatpush1.bf16.msra.mxu0 %v2808
        %2868 = vmatprep.subr.bf16.mxu0 0
        %2869 = vmatpush1.bf16.msra.mxu0 %v2809
        %2870 = vmatprep.subr.bf16.mxu0 0
        %2871 = vmatpush1.bf16.msra.mxu0 %v2848
        %2872 = vmatprep.subr.bf16.mxu0 0
        %2873 = vmatpush1.bf16.msra.mxu0 0
        %2874 = vmatprep.subr.bf16.mxu0 0
        %2875 = vmatpush1.bf16.msra.mxu0 0
        %2876 = vmatprep.subr.bf16.mxu0 0
        %2877 = vmatpush1.bf16.msra.mxu0 0
        %2878 = vmatprep.subr.bf16.mxu0 0
        %2879 = vmatpush1.bf16.msra.mxu0 0
        %2880 = vmatprep.subr.bf16.mxu0 0
        %2881 = vmatpush1.bf16.msra.mxu0 0
        %2882 = vmatprep.mubr.bf16.mxu0 %v2823
        %2883 = vmatmul.mubr.bf16.gmra.mrb[0].mxu0 %v2721
        %v2884 = vpop.f32.mrb[0].mxu0
        %v2885 = vadd.f32 0.0, %v2884
        %v2886 = vpop.f32.mrb[0].mxu0
        %v2887 = vpop.f32.mrb[0].mxu0
        %v2888 = vadd.f32 0.0, %v2887
        %v2889 = vpop.f32.mrb[0].mxu0
        %2890 = vmatprep.mubr.bf16.mxu0 %v2826
        %2891 = vmatmul.mubr.bf16.gmra.mrb[0].mxu0 %v2723
        %v2892 = vpop.f32.mrb[0].mxu0
        %v2893 = vadd.f32 0.0, %v2892
        %v2894 = vpop.f32.mrb[0].mxu0
        %v2895 = vpop.f32.mrb[0].mxu0
        %v2896 = vadd.f32 0.0, %v2895
        %v2897 = vpop.f32.mrb[0].mxu0
        %2898 = vmatprep.mubr.bf16.mxu0 %v2829
        %2899 = vmatmul.mubr.bf16.gmra.mrb[0].mxu0 %v2725
        %v2900 = vpop.f32.mrb[0].mxu0
        %v2901 = vadd.f32 0.0, %v2900
        %v2902 = vpop.f32.mrb[0].mxu0
        %v2903 = vpop.f32.mrb[0].mxu0
        %v2904 = vadd.f32 0.0, %v2903
        %v2905 = vpop.f32.mrb[0].mxu0
        %2906 = vmatprep.mubr.bf16.mxu0 %v2832
        %2907 = vmatmul.mubr.bf16.gmra.mrb[0].mxu0 %v2727
        %v2908 = vpop.f32.mrb[0].mxu0
        %v2909 = vadd.f32 0.0, %v2908
        %v2910 = vpop.f32.mrb[0].mxu0
        %v2911 = vpop.f32.mrb[0].mxu0
        %v2912 = vadd.f32 0.0, %v2911
        %v2913 = vpop.f32.mrb[0].mxu0
        %2914 = vmatprep.mubr.bf16.mxu0 %v2835
        %2915 = vmatmul.mubr.bf16.gmra.mrb[0].mxu0 %v2729
        %v2916 = vpop.f32.mrb[0].mxu0
        %v2917 = vadd.f32 0.0, %v2916
        %v2918 = vpop.f32.mrb[0].mxu0
        %v2919 = vpop.f32.mrb[0].mxu0
        %v2920 = vadd.f32 0.0, %v2919
        %v2921 = vpop.f32.mrb[0].mxu0
        %2922 = vmatprep.mubr.bf16.mxu0 %v2838
        %2923 = vmatmul.mubr.bf16.gmra.mrb[0].mxu0 %v2731
        %v2924 = vpop.f32.mrb[0].mxu0
        %v2925 = vadd.f32 0.0, %v2924
        %v2926 = vpop.f32.mrb[0].mxu0
        %v2927 = vpop.f32.mrb[0].mxu0
        %v2928 = vadd.f32 0.0, %v2927
        %v2929 = vpop.f32.mrb[0].mxu0
        %2930 = vmatprep.mubr.bf16.mxu0 %v2841
        %2931 = vmatmul.mubr.bf16.gmra.mrb[0].mxu0 %v2733
        %v2932 = vpop.f32.mrb[0].mxu0
        %v2933 = vadd.f32 0.0, %v2932
        %v2934 = vpop.f32.mrb[0].mxu0
        %v2935 = vpop.f32.mrb[0].mxu0
        %v2936 = vadd.f32 0.0, %v2935
        %v2937 = vpop.f32.mrb[0].mxu0
        %2938 = vmatprep.mubr.bf16.mxu0 %v2844
        %2939 = vmatmul.mubr.bf16.gmra.mrb[0].mxu0 %v2735
        %v2940 = vpop.f32.mrb[0].mxu0
        %v2941 = vadd.f32 0.0, %v2940
        %v2942 = vpop.f32.mrb[0].mxu0
        %v2943 = vpop.f32.mrb[0].mxu0
        %v2944 = vadd.f32 0.0, %v2943
        %v2945 = vpop.f32.mrb[0].mxu0
        %2946 = vdwg.mxu0
        %v2947 = vld [vmem:[%s6] sm:$0xf]
        %v2948 = vld [vmem:[%s6 + $0x4] sm:$0xf]
        %v2949 = vld [vmem:[%s6 + $0x8] sm:$0xf]
        %v2950 = vld [vmem:[%s6 + $0xc] sm:$0xf]
        %v2951 = vld [vmem:[%s6 + $0x10] sm:$0xf]
        %v2952 = vld [vmem:[%s6 + $0x14] sm:$0xf]
        %v2953 = vld [vmem:[%s6 + $0x18] sm:$0xf]
        %v2954 = vld [vmem:[%s6 + $0x1c] sm:$0xf]
        %v2955 = vld [vmem:[%s6 + $0x20] sm:$0xf]
        %v2956 = vld [vmem:[%s6 + $0x24] sm:$0xf]
        %v2957 = vld [vmem:[%s6 + $0x28] sm:$0xf]
        %v2958 = vld [vmem:[%s6 + $0x2c] sm:$0xf]
        %v2959 = vld [vmem:[%s6 + $0x30] sm:$0xf]
        %v2960 = vld [vmem:[%s6 + $0x34] sm:$0xf]
        %v2961 = vld [vmem:[%s6 + $0x38] sm:$0xf]
        %v2962 = vld [vmem:[%s6 + $0x3c] sm:$0xf]
        %v2963 = vld [vmem:[%s6 + $0x40] sm:$0xf]
        %v2964 = vld [vmem:[%s6 + $0x44] sm:$0xf]
        %v2965 = vld [vmem:[%s6 + $0x48] sm:$0xf]
        %v2966 = vld [vmem:[%s6 + $0x4c] sm:$0xf]
        %v2967 = vld [vmem:[%s6 + $0x50] sm:$0xf]
        %v2989 = vunpack.c.l.b16 %v2947
        %v2990 = vunpack.c.l.b16 %v2948
        %v2991 = vunpack.c.l.b16 %v2949
        %v2992 = vunpack.c.l.b16 %v2950
        %v2993 = vunpack.c.l.b16 %v2951
        %v2994 = vunpack.c.l.b16 %v2952
        %v2995 = vunpack.c.l.b16 %v2953
        %v2996 = vunpack.c.l.b16 %v2954
        %v2997 = vunpack.c.l.b16 %v2955
        %v2998 = vunpack.c.l.b16 %v2956
        %v2999 = vunpack.c.l.b16 %v2957
        %v3000 = vunpack.c.l.b16 %v2958
        %v3001 = vunpack.c.l.b16 %v2959
        %v3002 = vunpack.c.l.b16 %v2960
        %v3003 = vunpack.c.l.b16 %v2961
        %v3004 = vunpack.c.l.b16 %v2962
        %v3005 = vunpack.c.l.b16 %v2963
        %v3006 = vunpack.c.l.b16 %v2964
        %v3007 = vunpack.c.l.b16 %v2965
        %v3008 = vunpack.c.l.b16 %v2966
        %v3009 = vunpack.c.l.b16 %v2967
        %v3010 = vpack.c.b16 %v2990, %v2989
        %v3011 = vpack.c.b16 %v2992, %v2991
        %v3012 = vpack.c.b16 %v2994, %v2993
        %v3013 = vpack.c.b16 %v2996, %v2995
        %v3014 = vpack.c.b16 %v2998, %v2997
        %v3015 = vpack.c.b16 %v3000, %v2999
        %v3016 = vpack.c.b16 %v3002, %v3001
        %v3017 = vpack.c.b16 %v3004, %v3003
        %v3018 = vpack.c.b16 %v3006, %v3005
        %v3019 = vpack.c.b16 %v3008, %v3007
        %v3020 = vpack.c.b16 %v3009, %v3009
        %v3032 = vsel %vm2846, %v3020, 0
        %3034 = vmatprep.subr.bf16.mxu0 0
        %3035 = vmatpush1.bf16.msra.mxu0 %v3010
        %3036 = vmatprep.subr.bf16.mxu0 0
        %3037 = vmatpush1.bf16.msra.mxu0 %v3011
        %3038 = vmatprep.subr.bf16.mxu0 0
        %3039 = vmatpush1.bf16.msra.mxu0 %v3012
        %3040 = vmatprep.subr.bf16.mxu0 0
        %3041 = vmatpush1.bf16.msra.mxu0 %v3013
        %3042 = vmatprep.subr.bf16.mxu0 0
        %3043 = vmatpush1.bf16.msra.mxu0 %v3014
        %3044 = vmatprep.subr.bf16.mxu0 0
        %3045 = vmatpush1.bf16.msra.mxu0 %v3015
        %3046 = vmatprep.subr.bf16.mxu0 0
        %3047 = vmatpush1.bf16.msra.mxu0 %v3016
        %3048 = vmatprep.subr.bf16.mxu0 0
        %3049 = vmatpush1.bf16.msra.mxu0 %v3017
        %3050 = vmatprep.subr.bf16.mxu0 0
        %3051 = vmatpush1.bf16.msra.mxu0 %v3018
        %3052 = vmatprep.subr.bf16.mxu0 0
        %3053 = vmatpush1.bf16.msra.mxu0 %v3019
        %3054 = vmatprep.subr.bf16.mxu0 0
        %3055 = vmatpush1.bf16.msra.mxu0 %v3032
        %3056 = vmatprep.subr.bf16.mxu0 0
        %3057 = vmatpush1.bf16.msra.mxu0 0
        %3058 = vmatprep.subr.bf16.mxu0 0
        %3059 = vmatpush1.bf16.msra.mxu0 0
        %3060 = vmatprep.subr.bf16.mxu0 0
        %3061 = vmatpush1.bf16.msra.mxu0 0
        %3062 = vmatprep.subr.bf16.mxu0 0
        %3063 = vmatpush1.bf16.msra.mxu0 0
        %3064 = vmatprep.subr.bf16.mxu0 0
        %3065 = vmatpush1.bf16.msra.mxu0 0
        %3066 = vmatprep.mubr.bf16.mxu0 %v2823
        %3067 = vmatmul.mubr.bf16.gmra.mrb[0].mxu0 %v2721
        %v3068 = vpop.f32.mrb[0].mxu0
        %v3069 = vadd.f32 0.0, %v3068
        %v3070 = vpop.f32.mrb[0].mxu0
        %v3071 = vpop.f32.mrb[0].mxu0
        %v3072 = vadd.f32 0.0, %v3071
        %v3073 = vpop.f32.mrb[0].mxu0
        %3074 = vmatprep.mubr.bf16.mxu0 %v2826
        %3075 = vmatmul.mubr.bf16.gmra.mrb[0].mxu0 %v2723
        %v3076 = vpop.f32.mrb[0].mxu0
        %v3077 = vadd.f32 0.0, %v3076
        %v3078 = vpop.f32.mrb[0].mxu0
        %v3079 = vpop.f32.mrb[0].mxu0
        %v3080 = vadd.f32 0.0, %v3079
        %v3081 = vpop.f32.mrb[0].mxu0
        %3082 = vmatprep.mubr.bf16.mxu0 %v2829
        %3083 = vmatmul.mubr.bf16.gmra.mrb[0].mxu0 %v2725
        %v3084 = vpop.f32.mrb[0].mxu0
        %v3085 = vadd.f32 0.0, %v3084
        %v3086 = vpop.f32.mrb[0].mxu0
        %v3087 = vpop.f32.mrb[0].mxu0
        %v3088 = vadd.f32 0.0, %v3087
        %v3089 = vpop.f32.mrb[0].mxu0
        %3090 = vmatprep.mubr.bf16.mxu0 %v2832
        %3091 = vmatmul.mubr.bf16.gmra.mrb[0].mxu0 %v2727
        %v3092 = vpop.f32.mrb[0].mxu0
        %v3093 = vadd.f32 0.0, %v3092
        %v3094 = vpop.f32.mrb[0].mxu0
        %v3095 = vpop.f32.mrb[0].mxu0
        %v3096 = vadd.f32 0.0, %v3095
        %v3097 = vpop.f32.mrb[0].mxu0
        %3098 = vmatprep.mubr.bf16.mxu0 %v2835
        %3099 = vmatmul.mubr.bf16.gmra.mrb[0].mxu0 %v2729
        %v3100 = vpop.f32.mrb[0].mxu0
        %v3101 = vadd.f32 0.0, %v3100
        %v3102 = vpop.f32.mrb[0].mxu0
        %v3103 = vpop.f32.mrb[0].mxu0
        %v3104 = vadd.f32 0.0, %v3103
        %v3105 = vpop.f32.mrb[0].mxu0
        %3106 = vmatprep.mubr.bf16.mxu0 %v2838
        %3107 = vmatmul.mubr.bf16.gmra.mrb[0].mxu0 %v2731
        %v3108 = vpop.f32.mrb[0].mxu0
        %v3109 = vadd.f32 0.0, %v3108
        %v3110 = vpop.f32.mrb[0].mxu0
        %v3111 = vpop.f32.mrb[0].mxu0
        %v3112 = vadd.f32 0.0, %v3111
        %v3113 = vpop.f32.mrb[0].mxu0
        %3114 = vmatprep.mubr.bf16.mxu0 %v2841
        %3115 = vmatmul.mubr.bf16.gmra.mrb[0].mxu0 %v2733
        %v3116 = vpop.f32.mrb[0].mxu0
        %v3117 = vadd.f32 0.0, %v3116
        %v3118 = vpop.f32.mrb[0].mxu0
        %v3119 = vpop.f32.mrb[0].mxu0
        %v3120 = vadd.f32 0.0, %v3119
        %v3121 = vpop.f32.mrb[0].mxu0
        %3122 = vmatprep.mubr.bf16.mxu0 %v2844
        %3123 = vmatmul.mubr.bf16.gmra.mrb[0].mxu0 %v2735
        %v3124 = vpop.f32.mrb[0].mxu0
        %v3125 = vadd.f32 0.0, %v3124
        %v3126 = vpop.f32.mrb[0].mxu0
        %v3127 = vpop.f32.mrb[0].mxu0
        %v3128 = vadd.f32 0.0, %v3127
        %v3129 = vpop.f32.mrb[0].mxu0
        %3130 = vdwg.mxu0
        %v3131 = vmax.f32 %v2885, %v3069
        %v3132 = vmax.f32 %v2888, %v3072
        %v3133 = vmax.f32 %v2893, %v3077
        %v3134 = vmax.f32 %v2896, %v3080
        %v3135 = vmax.f32 %v2901, %v3085
        %v3136 = vmax.f32 %v2904, %v3088
        %v3137 = vmax.f32 %v2909, %v3093
        %v3138 = vmax.f32 %v2912, %v3096
        %v3139 = vmax.f32 %v2917, %v3101
        %v3140 = vmax.f32 %v2920, %v3104
        %v3141 = vmax.f32 %v2925, %v3109
        %v3142 = vmax.f32 %v2928, %v3112
        %v3143 = vmax.f32 %v2933, %v3117
        %v3144 = vmax.f32 %v2936, %v3120
        %v3145 = vmax.f32 %v2941, %v3125
        %v3146 = vmax.f32 %v2944, %v3128
        %v3147 = vpack.c.bf16 %v3132, %v3131
        %v3148 = vpack.c.bf16 %v3134, %v3133
        %v3149 = vpack.c.bf16 %v3136, %v3135
        %v3150 = vpack.c.bf16 %v3138, %v3137
        %v3151 = vpack.c.bf16 %v3140, %v3139
        %v3152 = vpack.c.bf16 %v3142, %v3141
        %v3153 = vpack.c.bf16 %v3144, %v3143
        %v3154 = vpack.c.bf16 %v3146, %v3145
        %v3156 = vshrl.u32 %v3147, 16
        %v3158 = vshll.u32 %v3147, 16
        %v3160 = vrot.slane %v3158, 1
        %v3161 = vor.u32 %v3156, %v3160
        %v3163 = vshll.u32 0, 16
        %v3165 = vrot.slane %v3163, 1
        %v3166 = vsel %vm778, %v3161, %v3165
        %v3168 = vshrl.u32 %v3148, 16
        %v3170 = vshll.u32 %v3148, 16
        %v3172 = vrot.slane %v3170, 1
        %v3173 = vor.u32 %v3168, %v3172
        %v3174 = vsel %vm778, %v3173, %v3165
        %v3176 = vshrl.u32 %v3149, 16
        %v3178 = vshll.u32 %v3149, 16
        %v3180 = vrot.slane %v3178, 1
        %v3181 = vor.u32 %v3176, %v3180
        %v3182 = vsel %vm778, %v3181, %v3165
        %v3184 = vshrl.u32 %v3150, 16
        %v3186 = vshll.u32 %v3150, 16
        %v3188 = vrot.slane %v3186, 1
        %v3189 = vor.u32 %v3184, %v3188
        %v3190 = vsel %vm778, %v3189, %v3165
        %v3192 = vshrl.u32 %v3151, 16
        %v3194 = vshll.u32 %v3151, 16
        %v3196 = vrot.slane %v3194, 1
        %v3197 = vor.u32 %v3192, %v3196
        %v3198 = vsel %vm778, %v3197, %v3165
        %v3200 = vshrl.u32 %v3152, 16
        %v3202 = vshll.u32 %v3152, 16
        %v3204 = vrot.slane %v3202, 1
        %v3205 = vor.u32 %v3200, %v3204
        %v3206 = vsel %vm778, %v3205, %v3165
        %v3208 = vshrl.u32 %v3153, 16
        %v3210 = vshll.u32 %v3153, 16
        %v3212 = vrot.slane %v3210, 1
        %v3213 = vor.u32 %v3208, %v3212
        %v3214 = vsel %vm778, %v3213, %v3165
        %v3216 = vshrl.u32 %v3154, 16
        %v3218 = vshll.u32 %v3154, 16
        %v3220 = vrot.slane %v3218, 1
        %v3221 = vor.u32 %v3216, %v3220
        %v3222 = vsel %vm778, %v3221, %v3165
        %3223 = vrot.lane.b32.xlu0 %v3166, 84
        %v3224 = vpop.permute.xlu0 %3223
        %3225 = vrot.lane.b32.xlu0 %v3174, 84
        %v3226 = vpop.permute.xlu0 %3225
        %3227 = vrot.lane.b32.xlu0 %v3182, 84
        %v3228 = vpop.permute.xlu0 %3227
        %3229 = vrot.lane.b32.xlu0 %v3190, 84
        %v3230 = vpop.permute.xlu0 %3229
        %3231 = vrot.lane.b32.xlu0 %v3198, 84
        %v3232 = vpop.permute.xlu0 %3231
        %3233 = vrot.lane.b32.xlu0 %v3206, 84
        %v3234 = vpop.permute.xlu0 %3233
        %3235 = vrot.lane.b32.xlu0 %v3214, 84
        %v3236 = vpop.permute.xlu0 %3235
        %3237 = vrot.lane.b32.xlu0 %v3222, 84
        %v3238 = vpop.permute.xlu0 %3237
        %v3248 = vrot.slane %v3147, 1
        %v3249 = vrot.slane 0, 1
        %v3250 = vsel %vm971, %v3248, %v3249
        %v3251 = vrot.slane %v3148, 1
        %v3252 = vsel %vm971, %v3251, %v3249
        %v3253 = vrot.slane %v3149, 1
        %v3254 = vsel %vm971, %v3253, %v3249
        %v3255 = vrot.slane %v3150, 1
        %v3256 = vsel %vm971, %v3255, %v3249
        %v3257 = vrot.slane %v3151, 1
        %v3258 = vsel %vm971, %v3257, %v3249
        %v3259 = vrot.slane %v3152, 1
        %v3260 = vsel %vm971, %v3259, %v3249
        %v3261 = vrot.slane %v3153, 1
        %v3262 = vsel %vm971, %v3261, %v3249
        %v3263 = vrot.slane %v3154, 1
        %v3264 = vsel %vm971, %v3263, %v3249
        %3265 = vrot.lane.b32.xlu0 %v3250, 40
        %v3266 = vpop.permute.xlu0 %3265
        %3267 = vrot.lane.b32.xlu0 %v3252, 40
        %v3268 = vpop.permute.xlu0 %3267
        %3269 = vrot.lane.b32.xlu0 %v3254, 40
        %v3270 = vpop.permute.xlu0 %3269
        %3271 = vrot.lane.b32.xlu0 %v3256, 40
        %v3272 = vpop.permute.xlu0 %3271
        %3273 = vrot.lane.b32.xlu0 %v3258, 40
        %v3274 = vpop.permute.xlu0 %3273
        %3275 = vrot.lane.b32.xlu0 %v3260, 40
        %v3276 = vpop.permute.xlu0 %3275
        %3277 = vrot.lane.b32.xlu0 %v3262, 40
        %v3278 = vpop.permute.xlu0 %3277
        %3279 = vrot.lane.b32.xlu0 %v3264, 40
        %v3280 = vpop.permute.xlu0 %3279
        %v3281 = vrot.slane %v3156, 1
        %v3282 = vrot.slane %v3158, 2
        %v3283 = vor.u32 %v3281, %v3282
        %v3284 = vshrl.u32 0, 16
        %v3286 = vrot.slane %v3284, 1
        %v3287 = vrot.slane %v3163, 2
        %v3288 = vor.u32 %v3286, %v3287
        %v3289 = vsel %vm1044, %v3283, %v3288
        %v3290 = vrot.slane %v3168, 1
        %v3291 = vrot.slane %v3170, 2
        %v3292 = vor.u32 %v3290, %v3291
        %v3293 = vsel %vm1044, %v3292, %v3288
        %v3294 = vrot.slane %v3176, 1
        %v3295 = vrot.slane %v3178, 2
        %v3296 = vor.u32 %v3294, %v3295
        %v3297 = vsel %vm1044, %v3296, %v3288
        %v3298 = vrot.slane %v3184, 1
        %v3299 = vrot.slane %v3186, 2
        %v3300 = vor.u32 %v3298, %v3299
        %v3301 = vsel %vm1044, %v3300, %v3288
        %v3302 = vrot.slane %v3192, 1
        %v3303 = vrot.slane %v3194, 2
        %v3304 = vor.u32 %v3302, %v3303
        %v3305 = vsel %vm1044, %v3304, %v3288
        %v3306 = vrot.slane %v3200, 1
        %v3307 = vrot.slane %v3202, 2
        %v3308 = vor.u32 %v3306, %v3307
        %v3309 = vsel %vm1044, %v3308, %v3288
        %v3310 = vrot.slane %v3208, 1
        %v3311 = vrot.slane %v3210, 2
        %v3312 = vor.u32 %v3310, %v3311
        %v3313 = vsel %vm1044, %v3312, %v3288
        %v3314 = vrot.slane %v3216, 1
        %v3315 = vrot.slane %v3218, 2
        %v3316 = vor.u32 %v3314, %v3315
        %v3317 = vsel %vm1044, %v3316, %v3288
        %3318 = vrot.lane.b32.xlu0 %v3289, 124
        %v3319 = vpop.permute.xlu0 %3318
        %3320 = vrot.lane.b32.xlu0 %v3293, 124
        %v3321 = vpop.permute.xlu0 %3320
        %3322 = vrot.lane.b32.xlu0 %v3297, 124
        %v3323 = vpop.permute.xlu0 %3322
        %3324 = vrot.lane.b32.xlu0 %v3301, 124
        %v3325 = vpop.permute.xlu0 %3324
        %3326 = vrot.lane.b32.xlu0 %v3305, 124
        %v3327 = vpop.permute.xlu0 %3326
        %3328 = vrot.lane.b32.xlu0 %v3309, 124
        %v3329 = vpop.permute.xlu0 %3328
        %3330 = vrot.lane.b32.xlu0 %v3313, 124
        %v3331 = vpop.permute.xlu0 %3330
        %3332 = vrot.lane.b32.xlu0 %v3317, 124
        %v3333 = vpop.permute.xlu0 %3332
        %v3334 = vrot.slane %v3147, 2
        %v3335 = vrot.slane 0, 2
        %v3336 = vsel %vm1181, %v3334, %v3335
        %v3337 = vrot.slane %v3148, 2
        %v3338 = vsel %vm1181, %v3337, %v3335
        %v3339 = vrot.slane %v3149, 2
        %v3340 = vsel %vm1181, %v3339, %v3335
        %v3341 = vrot.slane %v3150, 2
        %v3342 = vsel %vm1181, %v3341, %v3335
        %v3343 = vrot.slane %v3151, 2
        %v3344 = vsel %vm1181, %v3343, %v3335
        %v3345 = vrot.slane %v3152, 2
        %v3346 = vsel %vm1181, %v3345, %v3335
        %v3347 = vrot.slane %v3153, 2
        %v3348 = vsel %vm1181, %v3347, %v3335
        %v3349 = vrot.slane %v3154, 2
        %v3350 = vsel %vm1181, %v3349, %v3335
        %3351 = vrot.lane.b32.xlu0 %v3336, 80
        %v3352 = vpop.permute.xlu0 %3351
        %3353 = vrot.lane.b32.xlu0 %v3338, 80
        %v3354 = vpop.permute.xlu0 %3353
        %3355 = vrot.lane.b32.xlu0 %v3340, 80
        %v3356 = vpop.permute.xlu0 %3355
        %3357 = vrot.lane.b32.xlu0 %v3342, 80
        %v3358 = vpop.permute.xlu0 %3357
        %3359 = vrot.lane.b32.xlu0 %v3344, 80
        %v3360 = vpop.permute.xlu0 %3359
        %3361 = vrot.lane.b32.xlu0 %v3346, 80
        %v3362 = vpop.permute.xlu0 %3361
        %3363 = vrot.lane.b32.xlu0 %v3348, 80
        %v3364 = vpop.permute.xlu0 %3363
        %3365 = vrot.lane.b32.xlu0 %v3350, 80
        %v3366 = vpop.permute.xlu0 %3365
        %vm3367 = vcmask 687104
        %v3369 = vsel %vm3367, %v3147, %v3224
        %v3372 = vsel %vm3367, %v3148, %v3226
        %v3375 = vsel %vm3367, %v3149, %v3228
        %v3378 = vsel %vm3367, %v3150, %v3230
        %v3381 = vsel %vm3367, %v3151, %v3232
        %v3384 = vsel %vm3367, %v3152, %v3234
        %v3387 = vsel %vm3367, %v3153, %v3236
        %v3390 = vsel %vm3367, %v3154, %v3238
        %v3393 = vsel %vm2821, %v3224, %v3266
        %v3395 = vsel %vm2821, %v3226, %v3268
        %v3397 = vsel %vm2821, %v3228, %v3270
        %v3399 = vsel %vm2821, %v3230, %v3272
        %v3401 = vsel %vm2821, %v3232, %v3274
        %v3403 = vsel %vm2821, %v3234, %v3276
        %v3405 = vsel %vm2821, %v3236, %v3278
        %v3407 = vsel %vm2821, %v3238, %v3280
        %vm3408 = vcmask 1014784
        %v3410 = vsel %vm3408, %v3393, %v3319
        %v3413 = vsel %vm3408, %v3395, %v3321
        %v3416 = vsel %vm3408, %v3397, %v3323
        %v3419 = vsel %vm3408, %v3399, %v3325
        %v3422 = vsel %vm3408, %v3401, %v3327
        %v3425 = vsel %vm3408, %v3403, %v3329
        %v3428 = vsel %vm3408, %v3405, %v3331
        %v3431 = vsel %vm3408, %v3407, %v3333
        %vm3433 = vcmask 654336
        %v3435 = vsel %vm3433, %v3319, %v3352
        %v3438 = vsel %vm3433, %v3321, %v3354
        %v3441 = vsel %vm3433, %v3323, %v3356
        %v3444 = vsel %vm3433, %v3325, %v3358
        %v3447 = vsel %vm3433, %v3327, %v3360
        %v3450 = vsel %vm3433, %v3329, %v3362
        %v3453 = vsel %vm3433, %v3331, %v3364
        %v3456 = vsel %vm3433, %v3333, %v3366
        %v3458 = vld [vmem:[%s7] sm:$0xff]
        %v3459 = vld [vmem:[%s7 + $0x8] sm:$0xff]
        %v3460 = vld [vmem:[%s7 + $0x10] sm:$0xff]
        %v3461 = vld [vmem:[%s7 + $0x18] sm:$0xff]
        %v3462 = vld [vmem:[%s7 + $0x20] sm:$0xff]
        %v3463 = vld [vmem:[%s7 + $0x28] sm:$0xff]
        %v3464 = vld [vmem:[%s7 + $0x30] sm:$0xff]
        %v3465 = vld [vmem:[%s7 + $0x38] sm:$0xff]
        %v3466 = vld [vmem:[%s7 + $0x40] sm:$0xff]
        %v3467 = vld [vmem:[%s7 + $0x48] sm:$0xff]
        %v3468 = vld [vmem:[%s7 + $0x50] sm:$0xff]
        %v3469 = vld [vmem:[%s7 + $0x58] sm:$0xff]
        %v3470 = vld [vmem:[%s7 + $0x60] sm:$0xff]
        %v3471 = vld [vmem:[%s7 + $0x68] sm:$0xff]
        %v3472 = vld [vmem:[%s7 + $0x70] sm:$0xff]
        %v3473 = vld [vmem:[%s7 + $0x78] sm:$0xff]
        %v3474 = vld [vmem:[%s7 + $0x80] sm:$0xff]
        %v3475 = vld [vmem:[%s7 + $0x88] sm:$0xff]
        %v3476 = vld [vmem:[%s7 + $0x90] sm:$0xff]
        %v3477 = vld [vmem:[%s7 + $0x98] sm:$0xff]
        %v3478 = vld [vmem:[%s7 + $0xa0] sm:$0xff]
        %v3479 = vld [vmem:[%s7 + $0xa8] sm:$0xff]
        %v3480 = vld [vmem:[%s7 + $0xb0] sm:$0xff]
        %v3481 = vld [vmem:[%s7 + $0xb8] sm:$0xff]
        %v3482 = vld [vmem:[%s7 + $0xc0] sm:$0xff]
        %v3483 = vld [vmem:[%s7 + $0xc8] sm:$0xff]
        %v3484 = vld [vmem:[%s7 + $0xd0] sm:$0xff]
        %v3485 = vld [vmem:[%s7 + $0xd8] sm:$0xff]
        %v3486 = vld [vmem:[%s7 + $0xe0] sm:$0xff]
        %v3487 = vld [vmem:[%s7 + $0xe8] sm:$0xff]
        %v3488 = vld [vmem:[%s7 + $0xf0] sm:$0xff]
        %v3489 = vld [vmem:[%s7 + $0xf8] sm:$0xff]
        %v3490 = vld [vmem:[%s7 + $0x100] sm:$0xff]
        %v3491 = vld [vmem:[%s7 + $0x108] sm:$0xff]
        %v3492 = vld [vmem:[%s7 + $0x110] sm:$0xff]
        %v3493 = vld [vmem:[%s7 + $0x118] sm:$0xff]
        %v3494 = vld [vmem:[%s7 + $0x120] sm:$0xff]
        %v3495 = vld [vmem:[%s7 + $0x128] sm:$0xff]
        %v3496 = vld [vmem:[%s7 + $0x130] sm:$0xff]
        %v3497 = vld [vmem:[%s7 + $0x138] sm:$0xff]
        %v3498 = vld [vmem:[%s7 + $0x140] sm:$0xff]
        %v3499 = vld [vmem:[%s7 + $0x148] sm:$0xff]
        %v3500 = vld [vmem:[%s7 + $0x150] sm:$0xff]
        %v3501 = vld [vmem:[%s7 + $0x158] sm:$0xff]
        %v3502 = vld [vmem:[%s7 + $0x160] sm:$0xff]
        %v3503 = vld [vmem:[%s7 + $0x168] sm:$0xff]
        %v3504 = vld [vmem:[%s7 + $0x170] sm:$0xff]
        %v3505 = vld [vmem:[%s7 + $0x178] sm:$0xff]
        %v3506 = vld [vmem:[%s7 + $0x180] sm:$0xff]
        %v3507 = vld [vmem:[%s7 + $0x188] sm:$0xff]
        %v3508 = vld [vmem:[%s7 + $0x190] sm:$0xff]
        %v3509 = vld [vmem:[%s7 + $0x198] sm:$0xff]
        %v3510 = vld [vmem:[%s7 + $0x1a0] sm:$0x33]
        %v3511 = vld [vmem:[%s8] sm:$0x3]
        %v3513 = vlaneseq
        %v3514 = vshrl.u32 %v3513, 7
        %v3515 = vsub.s32 0, %v3514
        %v3516 = vrot.slane %v3511, %v3515
        %v3517 = vlaneseq
        %v3518 = vshrl.u32 %v3517, 7
        %v3519 = vsub.s32 1, %v3518
        %v3520 = vrot.slane %v3511, %v3519
        %v3576 = vunpack.c.l.b16 %v3458
        %v3577 = vunpack.c.h.b16 %v3458
        %v3578 = vunpack.c.l.b16 %v3459
        %v3579 = vunpack.c.h.b16 %v3459
        %v3580 = vunpack.c.l.b16 %v3460
        %v3581 = vunpack.c.h.b16 %v3460
        %v3582 = vunpack.c.l.b16 %v3461
        %v3583 = vunpack.c.h.b16 %v3461
        %v3584 = vunpack.c.l.b16 %v3462
        %v3585 = vunpack.c.h.b16 %v3462
        %v3586 = vunpack.c.l.b16 %v3463
        %v3587 = vunpack.c.h.b16 %v3463
        %v3588 = vunpack.c.l.b16 %v3464
        %v3589 = vunpack.c.h.b16 %v3464
        %v3590 = vunpack.c.l.b16 %v3465
        %v3591 = vunpack.c.h.b16 %v3465
        %v3592 = vunpack.c.l.b16 %v3466
        %v3593 = vunpack.c.h.b16 %v3466
        %v3594 = vunpack.c.l.b16 %v3467
        %v3595 = vunpack.c.h.b16 %v3467
        %v3596 = vunpack.c.l.b16 %v3468
        %v3597 = vunpack.c.h.b16 %v3468
        %v3598 = vunpack.c.l.b16 %v3469
        %v3599 = vunpack.c.h.b16 %v3469
        %v3600 = vunpack.c.l.b16 %v3470
        %v3601 = vunpack.c.h.b16 %v3470
        %v3602 = vunpack.c.l.b16 %v3471
        %v3603 = vunpack.c.h.b16 %v3471
        %v3604 = vunpack.c.l.b16 %v3472
        %v3605 = vunpack.c.h.b16 %v3472
        %v3606 = vunpack.c.l.b16 %v3473
        %v3607 = vunpack.c.h.b16 %v3473
        %v3608 = vunpack.c.l.b16 %v3474
        %v3609 = vunpack.c.h.b16 %v3474
        %v3610 = vunpack.c.l.b16 %v3475
        %v3611 = vunpack.c.h.b16 %v3475
        %v3612 = vunpack.c.l.b16 %v3476
        %v3613 = vunpack.c.h.b16 %v3476
        %v3614 = vunpack.c.l.b16 %v3477
        %v3615 = vunpack.c.h.b16 %v3477
        %v3616 = vunpack.c.l.b16 %v3478
        %v3617 = vunpack.c.h.b16 %v3478
        %v3618 = vunpack.c.l.b16 %v3479
        %v3619 = vunpack.c.h.b16 %v3479
        %v3620 = vunpack.c.l.b16 %v3480
        %v3621 = vunpack.c.h.b16 %v3480
        %v3622 = vunpack.c.l.b16 %v3481
        %v3623 = vunpack.c.h.b16 %v3481
        %v3624 = vunpack.c.l.b16 %v3482
        %v3625 = vunpack.c.h.b16 %v3482
        %v3626 = vunpack.c.l.b16 %v3483
        %v3627 = vunpack.c.h.b16 %v3483
        %v3628 = vunpack.c.l.b16 %v3484
        %v3629 = vunpack.c.h.b16 %v3484
        %v3630 = vunpack.c.l.b16 %v3485
        %v3631 = vunpack.c.h.b16 %v3485
        %v3632 = vunpack.c.l.b16 %v3486
        %v3633 = vunpack.c.h.b16 %v3486
        %v3634 = vunpack.c.l.b16 %v3487
        %v3635 = vunpack.c.h.b16 %v3487
        %v3636 = vunpack.c.l.b16 %v3488
        %v3637 = vunpack.c.h.b16 %v3488
        %v3638 = vunpack.c.l.b16 %v3489
        %v3639 = vunpack.c.h.b16 %v3489
        %v3640 = vunpack.c.l.b16 %v3490
        %v3641 = vunpack.c.h.b16 %v3490
        %v3642 = vunpack.c.l.b16 %v3491
        %v3643 = vunpack.c.h.b16 %v3491
        %v3644 = vunpack.c.l.b16 %v3492
        %v3645 = vunpack.c.h.b16 %v3492
        %v3646 = vunpack.c.l.b16 %v3493
        %v3647 = vunpack.c.h.b16 %v3493
        %v3648 = vunpack.c.l.b16 %v3494
        %v3649 = vunpack.c.h.b16 %v3494
        %v3650 = vunpack.c.l.b16 %v3495
        %v3651 = vunpack.c.h.b16 %v3495
        %v3652 = vunpack.c.l.b16 %v3496
        %v3653 = vunpack.c.h.b16 %v3496
        %v3654 = vunpack.c.l.b16 %v3497
        %v3655 = vunpack.c.h.b16 %v3497
        %v3656 = vunpack.c.l.b16 %v3498
        %v3657 = vunpack.c.h.b16 %v3498
        %v3658 = vunpack.c.l.b16 %v3499
        %v3659 = vunpack.c.h.b16 %v3499
        %v3660 = vunpack.c.l.b16 %v3500
        %v3661 = vunpack.c.h.b16 %v3500
        %v3662 = vunpack.c.l.b16 %v3501
        %v3663 = vunpack.c.h.b16 %v3501
        %v3664 = vunpack.c.l.b16 %v3502
        %v3665 = vunpack.c.h.b16 %v3502
        %v3666 = vunpack.c.l.b16 %v3503
        %v3667 = vunpack.c.h.b16 %v3503
        %v3668 = vunpack.c.l.b16 %v3504
        %v3669 = vunpack.c.h.b16 %v3504
        %v3670 = vunpack.c.l.b16 %v3505
        %v3671 = vunpack.c.h.b16 %v3505
        %v3672 = vunpack.c.l.b16 %v3506
        %v3673 = vunpack.c.h.b16 %v3506
        %v3674 = vunpack.c.l.b16 %v3507
        %v3675 = vunpack.c.h.b16 %v3507
        %v3676 = vunpack.c.l.b16 %v3508
        %v3677 = vunpack.c.h.b16 %v3508
        %v3678 = vunpack.c.l.b16 %v3509
        %v3679 = vunpack.c.h.b16 %v3509
        %v3680 = vunpack.c.l.b16 %v3510
        %v3681 = vunpack.c.h.b16 %v3510
        %v3682 = vpack.c.b16 %v3578, %v3576
        %v3683 = vpack.c.b16 %v3579, %v3577
        %v3684 = vpack.c.b16 %v3582, %v3580
        %v3685 = vpack.c.b16 %v3583, %v3581
        %v3686 = vpack.c.b16 %v3586, %v3584
        %v3687 = vpack.c.b16 %v3587, %v3585
        %v3688 = vpack.c.b16 %v3590, %v3588
        %v3689 = vpack.c.b16 %v3591, %v3589
        %v3690 = vpack.c.b16 %v3594, %v3592
        %v3691 = vpack.c.b16 %v3595, %v3593
        %v3692 = vpack.c.b16 %v3598, %v3596
        %v3693 = vpack.c.b16 %v3599, %v3597
        %v3694 = vpack.c.b16 %v3602, %v3600
        %v3695 = vpack.c.b16 %v3603, %v3601
        %v3696 = vpack.c.b16 %v3606, %v3604
        %v3697 = vpack.c.b16 %v3607, %v3605
        %v3698 = vpack.c.b16 %v3610, %v3608
        %v3699 = vpack.c.b16 %v3611, %v3609
        %v3700 = vpack.c.b16 %v3614, %v3612
        %v3701 = vpack.c.b16 %v3615, %v3613
        %v3702 = vpack.c.b16 %v3618, %v3616
        %v3703 = vpack.c.b16 %v3619, %v3617
        %v3704 = vpack.c.b16 %v3622, %v3620
        %v3705 = vpack.c.b16 %v3623, %v3621
        %v3706 = vpack.c.b16 %v3626, %v3624
        %v3707 = vpack.c.b16 %v3627, %v3625
        %v3708 = vpack.c.b16 %v3630, %v3628
        %v3709 = vpack.c.b16 %v3631, %v3629
        %v3710 = vpack.c.b16 %v3634, %v3632
        %v3711 = vpack.c.b16 %v3635, %v3633
        %v3712 = vpack.c.b16 %v3638, %v3636
        %v3713 = vpack.c.b16 %v3639, %v3637
        %v3714 = vpack.c.b16 %v3642, %v3640
        %v3715 = vpack.c.b16 %v3643, %v3641
        %v3716 = vpack.c.b16 %v3646, %v3644
        %v3717 = vpack.c.b16 %v3647, %v3645
        %v3718 = vpack.c.b16 %v3650, %v3648
        %v3719 = vpack.c.b16 %v3651, %v3649
        %v3720 = vpack.c.b16 %v3654, %v3652
        %v3721 = vpack.c.b16 %v3655, %v3653
        %v3722 = vpack.c.b16 %v3658, %v3656
        %v3723 = vpack.c.b16 %v3659, %v3657
        %v3724 = vpack.c.b16 %v3662, %v3660
        %v3725 = vpack.c.b16 %v3663, %v3661
        %v3726 = vpack.c.b16 %v3666, %v3664
        %v3727 = vpack.c.b16 %v3667, %v3665
        %v3728 = vpack.c.b16 %v3670, %v3668
        %v3729 = vpack.c.b16 %v3671, %v3669
        %v3730 = vpack.c.b16 %v3674, %v3672
        %v3731 = vpack.c.b16 %v3675, %v3673
        %v3732 = vpack.c.b16 %v3678, %v3676
        %v3733 = vpack.c.b16 %v3679, %v3677
        %v3734 = vpack.c.b16 %v3680, %v3680
        %v3735 = vpack.c.b16 %v3681, %v3681
        %vm3788 = vcmask 293888
        %v3789 = vsel %vm3788, %v3352, 0
        %v3791 = vsel %vm3788, %v3354, 0
        %v3793 = vsel %vm3788, %v3356, 0
        %v3795 = vsel %vm3788, %v3358, 0
        %v3797 = vsel %vm3788, %v3360, 0
        %v3799 = vsel %vm3788, %v3362, 0
        %v3801 = vsel %vm3788, %v3364, 0
        %v3803 = vsel %vm3788, %v3366, 0
        %vm3805 = vcmask 1041408
        %v3807 = vsel %vm3805, %v3734, 0
        %v3810 = vsel %vm3805, %v3735, 0
        %3812 = vmatprep.subr.bf16.mxu0 %v3683
        %3813 = vmatpush1.bf16.msra.mxu0 %v3682
        %3814 = vmatprep.subr.bf16.mxu0 %v3685
        %3815 = vmatpush1.bf16.msra.mxu0 %v3684
        %3816 = vmatprep.subr.bf16.mxu0 %v3687
        %3817 = vmatpush1.bf16.msra.mxu0 %v3686
        %3818 = vmatprep.subr.bf16.mxu0 %v3689
        %3819 = vmatpush1.bf16.msra.mxu0 %v3688
        %3820 = vmatprep.subr.bf16.mxu0 %v3691
        %3821 = vmatpush1.bf16.msra.mxu0 %v3690
        %3822 = vmatprep.subr.bf16.mxu0 %v3693
        %3823 = vmatpush1.bf16.msra.mxu0 %v3692
        %3824 = vmatprep.subr.bf16.mxu0 %v3695
        %3825 = vmatpush1.bf16.msra.mxu0 %v3694
        %3826 = vmatprep.subr.bf16.mxu0 %v3697
        %3827 = vmatpush1.bf16.msra.mxu0 %v3696
        %3828 = vmatprep.subr.bf16.mxu0 %v3699
        %3829 = vmatpush1.bf16.msra.mxu0 %v3698
        %3830 = vmatprep.subr.bf16.mxu0 %v3701
        %3831 = vmatpush1.bf16.msra.mxu0 %v3700
        %3832 = vmatprep.subr.bf16.mxu0 %v3703
        %3833 = vmatpush1.bf16.msra.mxu0 %v3702
        %3834 = vmatprep.subr.bf16.mxu0 %v3705
        %3835 = vmatpush1.bf16.msra.mxu0 %v3704
        %3836 = vmatprep.subr.bf16.mxu0 %v3707
        %3837 = vmatpush1.bf16.msra.mxu0 %v3706
        %3838 = vmatprep.subr.bf16.mxu0 %v3709
        %3839 = vmatpush1.bf16.msra.mxu0 %v3708
        %3840 = vmatprep.subr.bf16.mxu0 %v3711
        %3841 = vmatpush1.bf16.msra.mxu0 %v3710
        %3842 = vmatprep.subr.bf16.mxu0 %v3713
        %3843 = vmatpush1.bf16.msra.mxu0 %v3712
        %3844 = vmatprep.mubr.bf16.mxu0 %v3410
        %3845 = vmatmul.mubr.bf16.gmra.mrb[0].mxu0 %v3369
        %v3846 = vpop.f32.mrb[0].mxu0
        %v3847 = vadd.f32 %v3516, %v3846
        %v3848 = vpop.f32.mrb[0].mxu0
        %v3849 = vadd.f32 %v3520, %v3848
        %v3850 = vpop.f32.mrb[0].mxu0
        %v3851 = vadd.f32 %v3516, %v3850
        %v3852 = vpop.f32.mrb[0].mxu0
        %v3853 = vadd.f32 %v3520, %v3852
        %3854 = vmatprep.mubr.bf16.mxu0 %v3413
        %3855 = vmatmul.mubr.bf16.gmra.mrb[0].mxu0 %v3372
        %v3856 = vpop.f32.mrb[0].mxu0
        %v3857 = vadd.f32 %v3516, %v3856
        %v3858 = vpop.f32.mrb[0].mxu0
        %v3859 = vadd.f32 %v3520, %v3858
        %v3860 = vpop.f32.mrb[0].mxu0
        %v3861 = vadd.f32 %v3516, %v3860
        %v3862 = vpop.f32.mrb[0].mxu0
        %v3863 = vadd.f32 %v3520, %v3862
        %3864 = vmatprep.mubr.bf16.mxu0 %v3416
        %3865 = vmatmul.mubr.bf16.gmra.mrb[0].mxu0 %v3375
        %v3866 = vpop.f32.mrb[0].mxu0
        %v3867 = vadd.f32 %v3516, %v3866
        %v3868 = vpop.f32.mrb[0].mxu0
        %v3869 = vadd.f32 %v3520, %v3868
        %v3870 = vpop.f32.mrb[0].mxu0
        %v3871 = vadd.f32 %v3516, %v3870
        %v3872 = vpop.f32.mrb[0].mxu0
        %v3873 = vadd.f32 %v3520, %v3872
        %3874 = vmatprep.mubr.bf16.mxu0 %v3419
        %3875 = vmatmul.mubr.bf16.gmra.mrb[0].mxu0 %v3378
        %v3876 = vpop.f32.mrb[0].mxu0
        %v3877 = vadd.f32 %v3516, %v3876
        %v3878 = vpop.f32.mrb[0].mxu0
        %v3879 = vadd.f32 %v3520, %v3878
        %v3880 = vpop.f32.mrb[0].mxu0
        %v3881 = vadd.f32 %v3516, %v3880
        %v3882 = vpop.f32.mrb[0].mxu0
        %v3883 = vadd.f32 %v3520, %v3882
        %3884 = vmatprep.mubr.bf16.mxu0 %v3422
        %3885 = vmatmul.mubr.bf16.gmra.mrb[0].mxu0 %v3381
        %v3886 = vpop.f32.mrb[0].mxu0
        %v3887 = vadd.f32 %v3516, %v3886
        %v3888 = vpop.f32.mrb[0].mxu0
        %v3889 = vadd.f32 %v3520, %v3888
        %v3890 = vpop.f32.mrb[0].mxu0
        %v3891 = vadd.f32 %v3516, %v3890
        %v3892 = vpop.f32.mrb[0].mxu0
        %v3893 = vadd.f32 %v3520, %v3892
        %3894 = vmatprep.mubr.bf16.mxu0 %v3425
        %3895 = vmatmul.mubr.bf16.gmra.mrb[0].mxu0 %v3384
        %v3896 = vpop.f32.mrb[0].mxu0
        %v3897 = vadd.f32 %v3516, %v3896
        %v3898 = vpop.f32.mrb[0].mxu0
        %v3899 = vadd.f32 %v3520, %v3898
        %v3900 = vpop.f32.mrb[0].mxu0
        %v3901 = vadd.f32 %v3516, %v3900
        %v3902 = vpop.f32.mrb[0].mxu0
        %v3903 = vadd.f32 %v3520, %v3902
        %3904 = vmatprep.mubr.bf16.mxu0 %v3428
        %3905 = vmatmul.mubr.bf16.gmra.mrb[0].mxu0 %v3387
        %v3906 = vpop.f32.mrb[0].mxu0
        %v3907 = vadd.f32 %v3516, %v3906
        %v3908 = vpop.f32.mrb[0].mxu0
        %v3909 = vadd.f32 %v3520, %v3908
        %v3910 = vpop.f32.mrb[0].mxu0
        %v3911 = vadd.f32 %v3516, %v3910
        %v3912 = vpop.f32.mrb[0].mxu0
        %v3913 = vadd.f32 %v3520, %v3912
        %3914 = vmatprep.mubr.bf16.mxu0 %v3431
        %3915 = vmatmul.mubr.bf16.gmra.mrb[0].mxu0 %v3390
        %v3916 = vpop.f32.mrb[0].mxu0
        %v3917 = vadd.f32 %v3516, %v3916
        %v3918 = vpop.f32.mrb[0].mxu0
        %v3919 = vadd.f32 %v3520, %v3918
        %v3920 = vpop.f32.mrb[0].mxu0
        %v3921 = vadd.f32 %v3516, %v3920
        %v3922 = vpop.f32.mrb[0].mxu0
        %v3923 = vadd.f32 %v3520, %v3922
        %3924 = vdwg.mxu0
        %3925 = vmatprep.subr.bf16.mxu0 %v3715
        %3926 = vmatpush1.bf16.msra.mxu0 %v3714
        %3927 = vmatprep.subr.bf16.mxu0 %v3717
        %3928 = vmatpush1.bf16.msra.mxu0 %v3716
        %3929 = vmatprep.subr.bf16.mxu0 %v3719
        %3930 = vmatpush1.bf16.msra.mxu0 %v3718
        %3931 = vmatprep.subr.bf16.mxu0 %v3721
        %3932 = vmatpush1.bf16.msra.mxu0 %v3720
        %3933 = vmatprep.subr.bf16.mxu0 %v3723
        %3934 = vmatpush1.bf16.msra.mxu0 %v3722
        %3935 = vmatprep.subr.bf16.mxu0 %v3725
        %3936 = vmatpush1.bf16.msra.mxu0 %v3724
        %3937 = vmatprep.subr.bf16.mxu0 %v3727
        %3938 = vmatpush1.bf16.msra.mxu0 %v3726
        %3939 = vmatprep.subr.bf16.mxu0 %v3729
        %3940 = vmatpush1.bf16.msra.mxu0 %v3728
        %3941 = vmatprep.subr.bf16.mxu0 %v3731
        %3942 = vmatpush1.bf16.msra.mxu0 %v3730
        %3943 = vmatprep.subr.bf16.mxu0 %v3733
        %3944 = vmatpush1.bf16.msra.mxu0 %v3732
        %3945 = vmatprep.subr.bf16.mxu0 %v3810
        %3946 = vmatpush1.bf16.msra.mxu0 %v3807
        %3947 = vmatprep.subr.bf16.mxu0 0
        %3948 = vmatpush1.bf16.msra.mxu0 0
        %3949 = vmatprep.subr.bf16.mxu0 0
        %3950 = vmatpush1.bf16.msra.mxu0 0
        %3951 = vmatprep.subr.bf16.mxu0 0
        %3952 = vmatpush1.bf16.msra.mxu0 0
        %3953 = vmatprep.subr.bf16.mxu0 0
        %3954 = vmatpush1.bf16.msra.mxu0 0
        %3955 = vmatprep.subr.bf16.mxu0 0
        %3956 = vmatpush1.bf16.msra.mxu0 0
        %3957 = vmatprep.mubr.bf16.mxu0 %v3789
        %3958 = vmatmul.mubr.bf16.gmra.mrb[0].mxu0 %v3435
        %v3959 = vpop.f32.mrb[0].mxu0
        %v3960 = vadd.f32 %v3847, %v3959
        %v3961 = vpop.f32.mrb[0].mxu0
        %v3962 = vadd.f32 %v3849, %v3961
        %v3963 = vpop.f32.mrb[0].mxu0
        %v3964 = vadd.f32 %v3851, %v3963
        %v3965 = vpop.f32.mrb[0].mxu0
        %v3966 = vadd.f32 %v3853, %v3965
        %3967 = vmatprep.mubr.bf16.mxu0 %v3791
        %3968 = vmatmul.mubr.bf16.gmra.mrb[0].mxu0 %v3438
        %v3969 = vpop.f32.mrb[0].mxu0
        %v3970 = vadd.f32 %v3857, %v3969
        %v3971 = vpop.f32.mrb[0].mxu0
        %v3972 = vadd.f32 %v3859, %v3971
        %v3973 = vpop.f32.mrb[0].mxu0
        %v3974 = vadd.f32 %v3861, %v3973
        %v3975 = vpop.f32.mrb[0].mxu0
        %v3976 = vadd.f32 %v3863, %v3975
        %3977 = vmatprep.mubr.bf16.mxu0 %v3793
        %3978 = vmatmul.mubr.bf16.gmra.mrb[0].mxu0 %v3441
        %v3979 = vpop.f32.mrb[0].mxu0
        %v3980 = vadd.f32 %v3867, %v3979
        %v3981 = vpop.f32.mrb[0].mxu0
        %v3982 = vadd.f32 %v3869, %v3981
        %v3983 = vpop.f32.mrb[0].mxu0
        %v3984 = vadd.f32 %v3871, %v3983
        %v3985 = vpop.f32.mrb[0].mxu0
        %v3986 = vadd.f32 %v3873, %v3985
        %3987 = vmatprep.mubr.bf16.mxu0 %v3795
        %3988 = vmatmul.mubr.bf16.gmra.mrb[0].mxu0 %v3444
        %v3989 = vpop.f32.mrb[0].mxu0
        %v3990 = vadd.f32 %v3877, %v3989
        %v3991 = vpop.f32.mrb[0].mxu0
        %v3992 = vadd.f32 %v3879, %v3991
        %v3993 = vpop.f32.mrb[0].mxu0
        %v3994 = vadd.f32 %v3881, %v3993
        %v3995 = vpop.f32.mrb[0].mxu0
        %v3996 = vadd.f32 %v3883, %v3995
        %3997 = vmatprep.mubr.bf16.mxu0 %v3797
        %3998 = vmatmul.mubr.bf16.gmra.mrb[0].mxu0 %v3447
        %v3999 = vpop.f32.mrb[0].mxu0
        %v4000 = vadd.f32 %v3887, %v3999
        %v4001 = vpop.f32.mrb[0].mxu0
        %v4002 = vadd.f32 %v3889, %v4001
        %v4003 = vpop.f32.mrb[0].mxu0
        %v4004 = vadd.f32 %v3891, %v4003
        %v4005 = vpop.f32.mrb[0].mxu0
        %v4006 = vadd.f32 %v3893, %v4005
        %4007 = vmatprep.mubr.bf16.mxu0 %v3799
        %4008 = vmatmul.mubr.bf16.gmra.mrb[0].mxu0 %v3450
        %v4009 = vpop.f32.mrb[0].mxu0
        %v4010 = vadd.f32 %v3897, %v4009
        %v4011 = vpop.f32.mrb[0].mxu0
        %v4012 = vadd.f32 %v3899, %v4011
        %v4013 = vpop.f32.mrb[0].mxu0
        %v4014 = vadd.f32 %v3901, %v4013
        %v4015 = vpop.f32.mrb[0].mxu0
        %v4016 = vadd.f32 %v3903, %v4015
        %4017 = vmatprep.mubr.bf16.mxu0 %v3801
        %4018 = vmatmul.mubr.bf16.gmra.mrb[0].mxu0 %v3453
        %v4019 = vpop.f32.mrb[0].mxu0
        %v4020 = vadd.f32 %v3907, %v4019
        %v4021 = vpop.f32.mrb[0].mxu0
        %v4022 = vadd.f32 %v3909, %v4021
        %v4023 = vpop.f32.mrb[0].mxu0
        %v4024 = vadd.f32 %v3911, %v4023
        %v4025 = vpop.f32.mrb[0].mxu0
        %v4026 = vadd.f32 %v3913, %v4025
        %4027 = vmatprep.mubr.bf16.mxu0 %v3803
        %4028 = vmatmul.mubr.bf16.gmra.mrb[0].mxu0 %v3456
        %v4029 = vpop.f32.mrb[0].mxu0
        %v4030 = vadd.f32 %v3917, %v4029
        %v4031 = vpop.f32.mrb[0].mxu0
        %v4032 = vadd.f32 %v3919, %v4031
        %v4033 = vpop.f32.mrb[0].mxu0
        %v4034 = vadd.f32 %v3921, %v4033
        %v4035 = vpop.f32.mrb[0].mxu0
        %v4036 = vadd.f32 %v3923, %v4035
        %4037 = vdwg.mxu0
        %v4038 = vmax.f32 %v3960, 0.0
        %v4039 = vmax.f32 %v3962, 0.0
        %v4040 = vmax.f32 %v3964, 0.0
        %v4041 = vmax.f32 %v3966, 0.0
        %v4042 = vmax.f32 %v3970, 0.0
        %v4043 = vmax.f32 %v3972, 0.0
        %v4044 = vmax.f32 %v3974, 0.0
        %v4045 = vmax.f32 %v3976, 0.0
        %v4046 = vmax.f32 %v3980, 0.0
        %v4047 = vmax.f32 %v3982, 0.0
        %v4048 = vmax.f32 %v3984, 0.0
        %v4049 = vmax.f32 %v3986, 0.0
        %v4050 = vmax.f32 %v3990, 0.0
        %v4051 = vmax.f32 %v3992, 0.0
        %v4052 = vmax.f32 %v3994, 0.0
        %v4053 = vmax.f32 %v3996, 0.0
        %v4054 = vmax.f32 %v4000, 0.0
        %v4055 = vmax.f32 %v4002, 0.0
        %v4056 = vmax.f32 %v4004, 0.0
        %v4057 = vmax.f32 %v4006, 0.0
        %v4058 = vmax.f32 %v4010, 0.0
        %v4059 = vmax.f32 %v4012, 0.0
        %v4060 = vmax.f32 %v4014, 0.0
        %v4061 = vmax.f32 %v4016, 0.0
        %v4062 = vmax.f32 %v4020, 0.0
        %v4063 = vmax.f32 %v4022, 0.0
        %v4064 = vmax.f32 %v4024, 0.0
        %v4065 = vmax.f32 %v4026, 0.0
        %v4066 = vmax.f32 %v4030, 0.0
        %v4067 = vmax.f32 %v4032, 0.0
        %v4068 = vmax.f32 %v4034, 0.0
        %v4069 = vmax.f32 %v4036, 0.0
        %v4070 = vpack.c.bf16 %v4040, %v4038
        %v4071 = vpack.c.bf16 %v4041, %v4039
        %v4072 = vpack.c.bf16 %v4044, %v4042
        %v4073 = vpack.c.bf16 %v4045, %v4043
        %v4074 = vpack.c.bf16 %v4048, %v4046
        %v4075 = vpack.c.bf16 %v4049, %v4047
        %v4076 = vpack.c.bf16 %v4052, %v4050
        %v4077 = vpack.c.bf16 %v4053, %v4051
        %v4078 = vpack.c.bf16 %v4056, %v4054
        %v4079 = vpack.c.bf16 %v4057, %v4055
        %v4080 = vpack.c.bf16 %v4060, %v4058
        %v4081 = vpack.c.bf16 %v4061, %v4059
        %v4082 = vpack.c.bf16 %v4064, %v4062
        %v4083 = vpack.c.bf16 %v4065, %v4063
        %v4084 = vpack.c.bf16 %v4068, %v4066
        %v4085 = vpack.c.bf16 %v4069, %v4067
        %v4086 = vld [vmem:[%s9] sm:$0xf]
        %v4087 = vld [vmem:[%s9 + $0x4] sm:$0xf]
        %v4088 = vld [vmem:[%s9 + $0x8] sm:$0xf]
        %v4089 = vld [vmem:[%s9 + $0xc] sm:$0xf]
        %v4090 = vld [vmem:[%s9 + $0x10] sm:$0xf]
        %v4091 = vld [vmem:[%s9 + $0x14] sm:$0xf]
        %v4092 = vld [vmem:[%s9 + $0x18] sm:$0xf]
        %v4093 = vld [vmem:[%s9 + $0x1c] sm:$0xf]
        %v4102 = vunpack.c.l.b16 %v4086
        %v4103 = vunpack.c.l.b16 %v4087
        %v4104 = vunpack.c.l.b16 %v4088
        %v4105 = vunpack.c.l.b16 %v4089
        %v4106 = vunpack.c.l.b16 %v4090
        %v4107 = vunpack.c.l.b16 %v4091
        %v4108 = vunpack.c.l.b16 %v4092
        %v4109 = vunpack.c.l.b16 %v4093
        %v4110 = vpack.c.b16 %v4103, %v4102
        %v4111 = vpack.c.b16 %v4105, %v4104
        %v4112 = vpack.c.b16 %v4107, %v4106
        %v4113 = vpack.c.b16 %v4109, %v4108
        %4118 = vmatprep.subr.bf16.mxu0 %v4071
        %4119 = vmatpush1.bf16.msra.mxu0 %v4070
        %4120 = vmatprep.subr.bf16.mxu0 %v4073
        %4121 = vmatpush1.bf16.msra.mxu0 %v4072
        %4122 = vmatprep.subr.bf16.mxu0 %v4075
        %4123 = vmatpush1.bf16.msra.mxu0 %v4074
        %4124 = vmatprep.subr.bf16.mxu0 %v4077
        %4125 = vmatpush1.bf16.msra.mxu0 %v4076
        %4126 = vmatprep.subr.bf16.mxu0 %v4079
        %4127 = vmatpush1.bf16.msra.mxu0 %v4078
        %4128 = vmatprep.subr.bf16.mxu0 %v4081
        %4129 = vmatpush1.bf16.msra.mxu0 %v4080
        %4130 = vmatprep.subr.bf16.mxu0 %v4083
        %4131 = vmatpush1.bf16.msra.mxu0 %v4082
        %4132 = vmatprep.subr.bf16.mxu0 %v4085
        %4133 = vmatpush1.bf16.msra.mxu0 %v4084
        %4134 = vmatprep.subr.bf16.mxu0 0
        %4135 = vmatpush1.bf16.msra.mxu0 0
        %4136 = vmatprep.subr.bf16.mxu0 0
        %4137 = vmatpush1.bf16.msra.mxu0 0
        %4138 = vmatprep.subr.bf16.mxu0 0
        %4139 = vmatpush1.bf16.msra.mxu0 0
        %4140 = vmatprep.subr.bf16.mxu0 0
        %4141 = vmatpush1.bf16.msra.mxu0 0
        %4142 = vmatprep.subr.bf16.mxu0 0
        %4143 = vmatpush1.bf16.msra.mxu0 0
        %4144 = vmatprep.subr.bf16.mxu0 0
        %4145 = vmatpush1.bf16.msra.mxu0 0
        %4146 = vmatprep.subr.bf16.mxu0 0
        %4147 = vmatpush1.bf16.msra.mxu0 0
        %4148 = vmatprep.subr.bf16.mxu0 0
        %4149 = vmatpush1.bf16.msra.mxu0 0
        %4150 = vmatprep.mubr.bf16.mxu0 0
        %4151 = vmatmul.mubr.bf16.gmra.mrb[0].mxu0 %v4110
        %v4152 = vpop.f32.mrb[0].mxu0
        %v4153 = vadd.f32 0.0, %v4152
        %v4154 = vpop.f32.mrb[0].mxu0
        %v4155 = vadd.f32 0.0, %v4154
        %v4156 = vpop.f32.mrb[0].mxu0
        %v4157 = vadd.f32 0.0, %v4156
        %v4158 = vpop.f32.mrb[0].mxu0
        %v4159 = vadd.f32 0.0, %v4158
        %4160 = vmatprep.mubr.bf16.mxu0 0
        %4161 = vmatmul.mubr.bf16.gmra.mrb[0].mxu0 %v4111
        %v4162 = vpop.f32.mrb[0].mxu0
        %v4163 = vadd.f32 0.0, %v4162
        %v4164 = vpop.f32.mrb[0].mxu0
        %v4165 = vadd.f32 0.0, %v4164
        %v4166 = vpop.f32.mrb[0].mxu0
        %v4167 = vadd.f32 0.0, %v4166
        %v4168 = vpop.f32.mrb[0].mxu0
        %v4169 = vadd.f32 0.0, %v4168
        %4170 = vmatprep.mubr.bf16.mxu0 0
        %4171 = vmatmul.mubr.bf16.gmra.mrb[0].mxu0 %v4112
        %v4172 = vpop.f32.mrb[0].mxu0
        %v4173 = vadd.f32 0.0, %v4172
        %v4174 = vpop.f32.mrb[0].mxu0
        %v4175 = vadd.f32 0.0, %v4174
        %v4176 = vpop.f32.mrb[0].mxu0
        %v4177 = vadd.f32 0.0, %v4176
        %v4178 = vpop.f32.mrb[0].mxu0
        %v4179 = vadd.f32 0.0, %v4178
        %4180 = vmatprep.mubr.bf16.mxu0 0
        %4181 = vmatmul.mubr.bf16.gmra.mrb[0].mxu0 %v4113
        %v4182 = vpop.f32.mrb[0].mxu0
        %v4183 = vadd.f32 0.0, %v4182
        %v4184 = vpop.f32.mrb[0].mxu0
        %v4185 = vadd.f32 0.0, %v4184
        %v4186 = vpop.f32.mrb[0].mxu0
        %v4187 = vadd.f32 0.0, %v4186
        %v4188 = vpop.f32.mrb[0].mxu0
        %v4189 = vadd.f32 0.0, %v4188
        %4190 = vdwg.mxu0
        %v4191 = vld [vmem:[%s10] sm:$0xf]
        %v4192 = vld [vmem:[%s10 + $0x4] sm:$0xf]
        %v4193 = vld [vmem:[%s10 + $0x8] sm:$0xf]
        %v4194 = vld [vmem:[%s10 + $0xc] sm:$0xf]
        %v4195 = vld [vmem:[%s10 + $0x10] sm:$0xf]
        %v4196 = vld [vmem:[%s10 + $0x14] sm:$0xf]
        %v4197 = vld [vmem:[%s10 + $0x18] sm:$0xf]
        %v4198 = vld [vmem:[%s10 + $0x1c] sm:$0xf]
        %v4207 = vunpack.c.l.b16 %v4191
        %v4208 = vunpack.c.l.b16 %v4192
        %v4209 = vunpack.c.l.b16 %v4193
        %v4210 = vunpack.c.l.b16 %v4194
        %v4211 = vunpack.c.l.b16 %v4195
        %v4212 = vunpack.c.l.b16 %v4196
        %v4213 = vunpack.c.l.b16 %v4197
        %v4214 = vunpack.c.l.b16 %v4198
        %v4215 = vpack.c.b16 %v4208, %v4207
        %v4216 = vpack.c.b16 %v4210, %v4209
        %v4217 = vpack.c.b16 %v4212, %v4211
        %v4218 = vpack.c.b16 %v4214, %v4213
        %4223 = vmatprep.subr.bf16.mxu0 %v4071
        %4224 = vmatpush1.bf16.msra.mxu0 %v4070
        %4225 = vmatprep.subr.bf16.mxu0 %v4073
        %4226 = vmatpush1.bf16.msra.mxu0 %v4072
        %4227 = vmatprep.subr.bf16.mxu0 %v4075
        %4228 = vmatpush1.bf16.msra.mxu0 %v4074
        %4229 = vmatprep.subr.bf16.mxu0 %v4077
        %4230 = vmatpush1.bf16.msra.mxu0 %v4076
        %4231 = vmatprep.subr.bf16.mxu0 %v4079
        %4232 = vmatpush1.bf16.msra.mxu0 %v4078
        %4233 = vmatprep.subr.bf16.mxu0 %v4081
        %4234 = vmatpush1.bf16.msra.mxu0 %v4080
        %4235 = vmatprep.subr.bf16.mxu0 %v4083
        %4236 = vmatpush1.bf16.msra.mxu0 %v4082
        %4237 = vmatprep.subr.bf16.mxu0 %v4085
        %4238 = vmatpush1.bf16.msra.mxu0 %v4084
        %4239 = vmatprep.subr.bf16.mxu0 0
        %4240 = vmatpush1.bf16.msra.mxu0 0
        %4241 = vmatprep.subr.bf16.mxu0 0
        %4242 = vmatpush1.bf16.msra.mxu0 0
        %4243 = vmatprep.subr.bf16.mxu0 0
        %4244 = vmatpush1.bf16.msra.mxu0 0
        %4245 = vmatprep.subr.bf16.mxu0 0
        %4246 = vmatpush1.bf16.msra.mxu0 0
        %4247 = vmatprep.subr.bf16.mxu0 0
        %4248 = vmatpush1.bf16.msra.mxu0 0
        %4249 = vmatprep.subr.bf16.mxu0 0
        %4250 = vmatpush1.bf16.msra.mxu0 0
        %4251 = vmatprep.subr.bf16.mxu0 0
        %4252 = vmatpush1.bf16.msra.mxu0 0
        %4253 = vmatprep.subr.bf16.mxu0 0
        %4254 = vmatpush1.bf16.msra.mxu0 0
        %4255 = vmatprep.mubr.bf16.mxu0 0
        %4256 = vmatmul.mubr.bf16.gmra.mrb[0].mxu0 %v4215
        %v4257 = vpop.f32.mrb[0].mxu0
        %v4258 = vadd.f32 0.0, %v4257
        %v4259 = vpop.f32.mrb[0].mxu0
        %v4260 = vadd.f32 0.0, %v4259
        %v4261 = vpop.f32.mrb[0].mxu0
        %v4262 = vadd.f32 0.0, %v4261
        %v4263 = vpop.f32.mrb[0].mxu0
        %v4264 = vadd.f32 0.0, %v4263
        %4265 = vmatprep.mubr.bf16.mxu0 0
        %4266 = vmatmul.mubr.bf16.gmra.mrb[0].mxu0 %v4216
        %v4267 = vpop.f32.mrb[0].mxu0
        %v4268 = vadd.f32 0.0, %v4267
        %v4269 = vpop.f32.mrb[0].mxu0
        %v4270 = vadd.f32 0.0, %v4269
        %v4271 = vpop.f32.mrb[0].mxu0
        %v4272 = vadd.f32 0.0, %v4271
        %v4273 = vpop.f32.mrb[0].mxu0
        %v4274 = vadd.f32 0.0, %v4273
        %4275 = vmatprep.mubr.bf16.mxu0 0
        %4276 = vmatmul.mubr.bf16.gmra.mrb[0].mxu0 %v4217
        %v4277 = vpop.f32.mrb[0].mxu0
        %v4278 = vadd.f32 0.0, %v4277
        %v4279 = vpop.f32.mrb[0].mxu0
        %v4280 = vadd.f32 0.0, %v4279
        %v4281 = vpop.f32.mrb[0].mxu0
        %v4282 = vadd.f32 0.0, %v4281
        %v4283 = vpop.f32.mrb[0].mxu0
        %v4284 = vadd.f32 0.0, %v4283
        %4285 = vmatprep.mubr.bf16.mxu0 0
        %4286 = vmatmul.mubr.bf16.gmra.mrb[0].mxu0 %v4218
        %v4287 = vpop.f32.mrb[0].mxu0
        %v4288 = vadd.f32 0.0, %v4287
        %v4289 = vpop.f32.mrb[0].mxu0
        %v4290 = vadd.f32 0.0, %v4289
        %v4291 = vpop.f32.mrb[0].mxu0
        %v4292 = vadd.f32 0.0, %v4291
        %v4293 = vpop.f32.mrb[0].mxu0
        %v4294 = vadd.f32 0.0, %v4293
        %4295 = vdwg.mxu0
        %v4296 = vmax.f32 %v4153, %v4258
        %v4297 = vmax.f32 %v4155, %v4260
        %v4298 = vmax.f32 %v4157, %v4262
        %v4299 = vmax.f32 %v4159, %v4264
        %v4300 = vmax.f32 %v4163, %v4268
        %v4301 = vmax.f32 %v4165, %v4270
        %v4302 = vmax.f32 %v4167, %v4272
        %v4303 = vmax.f32 %v4169, %v4274
        %v4304 = vmax.f32 %v4173, %v4278
        %v4305 = vmax.f32 %v4175, %v4280
        %v4306 = vmax.f32 %v4177, %v4282
        %v4307 = vmax.f32 %v4179, %v4284
        %v4308 = vmax.f32 %v4183, %v4288
        %v4309 = vmax.f32 %v4185, %v4290
        %v4310 = vmax.f32 %v4187, %v4292
        %v4311 = vmax.f32 %v4189, %v4294
        %v4312 = vpack.c.bf16 %v4298, %v4296
        %v4313 = vpack.c.bf16 %v4299, %v4297
        %v4314 = vpack.c.bf16 %v4302, %v4300
        %v4315 = vpack.c.bf16 %v4303, %v4301
        %v4316 = vpack.c.bf16 %v4306, %v4304
        %v4317 = vpack.c.bf16 %v4307, %v4305
        %v4318 = vpack.c.bf16 %v4310, %v4308
        %v4319 = vpack.c.bf16 %v4311, %v4309
        %v4320 = vld [vmem:[%s11] sm:$0xf]
        %v4321 = vld [vmem:[%s11 + $0x4] sm:$0xf]
        %v4322 = vld [vmem:[%s11 + $0x8] sm:$0xf]
        %v4323 = vld [vmem:[%s11 + $0xc] sm:$0xf]
        %v4324 = vld [vmem:[%s11 + $0x10] sm:$0xf]
        %v4325 = vld [vmem:[%s11 + $0x14] sm:$0xf]
        %v4326 = vld [vmem:[%s11 + $0x18] sm:$0xf]
        %v4327 = vld [vmem:[%s11 + $0x1c] sm:$0xf]
        %v4328 = vld [vmem:[%s11 + $0x20] sm:$0xf]
        %v4329 = vld [vmem:[%s11 + $0x24] sm:$0xf]
        %v4330 = vld [vmem:[%s11 + $0x28] sm:$0xf]
        %v4331 = vld [vmem:[%s11 + $0x2c] sm:$0xf]
        %v4332 = vld [vmem:[%s11 + $0x30] sm:$0xf]
        %v4333 = vld [vmem:[%s11 + $0x34] sm:$0xf]
        %v4334 = vld [vmem:[%s11 + $0x38] sm:$0xf]
        %v4335 = vld [vmem:[%s11 + $0x3c] sm:$0xf]
        %v4336 = vld [vmem:[%s11 + $0x40] sm:$0xf]
        %v4337 = vld [vmem:[%s11 + $0x44] sm:$0xf]
        %v4338 = vld [vmem:[%s11 + $0x48] sm:$0xf]
        %v4339 = vld [vmem:[%s11 + $0x4c] sm:$0xf]
        %v4360 = vunpack.c.l.b16 %v4320
        %v4361 = vunpack.c.l.b16 %v4321
        %v4362 = vunpack.c.l.b16 %v4322
        %v4363 = vunpack.c.l.b16 %v4323
        %v4364 = vunpack.c.l.b16 %v4324
        %v4365 = vunpack.c.l.b16 %v4325
        %v4366 = vunpack.c.l.b16 %v4326
        %v4367 = vunpack.c.l.b16 %v4327
        %v4368 = vunpack.c.l.b16 %v4328
        %v4369 = vunpack.c.l.b16 %v4329
        %v4370 = vunpack.c.l.b16 %v4330
        %v4371 = vunpack.c.l.b16 %v4331
        %v4372 = vunpack.c.l.b16 %v4332
        %v4373 = vunpack.c.l.b16 %v4333
        %v4374 = vunpack.c.l.b16 %v4334
        %v4375 = vunpack.c.l.b16 %v4335
        %v4376 = vunpack.c.l.b16 %v4336
        %v4377 = vunpack.c.l.b16 %v4337
        %v4378 = vunpack.c.l.b16 %v4338
        %v4379 = vunpack.c.l.b16 %v4339
        %v4380 = vpack.c.b16 %v4361, %v4360
        %v4381 = vpack.c.b16 %v4363, %v4362
        %v4382 = vpack.c.b16 %v4365, %v4364
        %v4383 = vpack.c.b16 %v4367, %v4366
        %v4384 = vpack.c.b16 %v4369, %v4368
        %v4385 = vpack.c.b16 %v4371, %v4370
        %v4386 = vpack.c.b16 %v4373, %v4372
        %v4387 = vpack.c.b16 %v4375, %v4374
        %v4388 = vpack.c.b16 %v4377, %v4376
        %v4389 = vpack.c.b16 %v4379, %v4378
        %v4401 = vsel %vm1320, %v4313, 0
        %v4404 = vsel %vm1320, %v4315, 0
        %v4407 = vsel %vm1320, %v4317, 0
        %v4410 = vsel %vm1320, %v4319, 0
        %4412 = vmatprep.subr.bf16.mxu0 0
        %4413 = vmatpush1.bf16.msra.mxu0 %v4380
        %4414 = vmatprep.subr.bf16.mxu0 0
        %4415 = vmatpush1.bf16.msra.mxu0 %v4381
        %4416 = vmatprep.subr.bf16.mxu0 0
        %4417 = vmatpush1.bf16.msra.mxu0 %v4382
        %4418 = vmatprep.subr.bf16.mxu0 0
        %4419 = vmatpush1.bf16.msra.mxu0 %v4383
        %4420 = vmatprep.subr.bf16.mxu0 0
        %4421 = vmatpush1.bf16.msra.mxu0 %v4384
        %4422 = vmatprep.subr.bf16.mxu0 0
        %4423 = vmatpush1.bf16.msra.mxu0 %v4385
        %4424 = vmatprep.subr.bf16.mxu0 0
        %4425 = vmatpush1.bf16.msra.mxu0 %v4386
        %4426 = vmatprep.subr.bf16.mxu0 0
        %4427 = vmatpush1.bf16.msra.mxu0 %v4387
        %4428 = vmatprep.subr.bf16.mxu0 0
        %4429 = vmatpush1.bf16.msra.mxu0 %v4388
        %4430 = vmatprep.subr.bf16.mxu0 0
        %4431 = vmatpush1.bf16.msra.mxu0 %v4389
        %4432 = vmatprep.subr.bf16.mxu0 0
        %4433 = vmatpush1.bf16.msra.mxu0 0
        %4434 = vmatprep.subr.bf16.mxu0 0
        %4435 = vmatpush1.bf16.msra.mxu0 0
        %4436 = vmatprep.subr.bf16.mxu0 0
        %4437 = vmatpush1.bf16.msra.mxu0 0
        %4438 = vmatprep.subr.bf16.mxu0 0
        %4439 = vmatpush1.bf16.msra.mxu0 0
        %4440 = vmatprep.subr.bf16.mxu0 0
        %4441 = vmatpush1.bf16.msra.mxu0 0
        %4442 = vmatprep.subr.bf16.mxu0 0
        %4443 = vmatpush1.bf16.msra.mxu0 0
        %4444 = vmatprep.mubr.bf16.mxu0 %v4401
        %4445 = vmatmul.mubr.bf16.gmra.mrb[0].mxu0 %v4312
        %v4446 = vpop.f32.mrb[0].mxu0
        %v4447 = vadd.f32 0.0, %v4446
        %v4448 = vpop.f32.mrb[0].mxu0
        %v4449 = vpop.f32.mrb[0].mxu0
        %v4450 = vadd.f32 0.0, %v4449
        %v4451 = vpop.f32.mrb[0].mxu0
        %4452 = vmatprep.mubr.bf16.mxu0 %v4404
        %4453 = vmatmul.mubr.bf16.gmra.mrb[0].mxu0 %v4314
        %v4454 = vpop.f32.mrb[0].mxu0
        %v4455 = vadd.f32 0.0, %v4454
        %v4456 = vpop.f32.mrb[0].mxu0
        %v4457 = vpop.f32.mrb[0].mxu0
        %v4458 = vadd.f32 0.0, %v4457
        %v4459 = vpop.f32.mrb[0].mxu0
        %4460 = vmatprep.mubr.bf16.mxu0 %v4407
        %4461 = vmatmul.mubr.bf16.gmra.mrb[0].mxu0 %v4316
        %v4462 = vpop.f32.mrb[0].mxu0
        %v4463 = vadd.f32 0.0, %v4462
        %v4464 = vpop.f32.mrb[0].mxu0
        %v4465 = vpop.f32.mrb[0].mxu0
        %v4466 = vadd.f32 0.0, %v4465
        %v4467 = vpop.f32.mrb[0].mxu0
        %4468 = vmatprep.mubr.bf16.mxu0 %v4410
        %4469 = vmatmul.mubr.bf16.gmra.mrb[0].mxu0 %v4318
        %v4470 = vpop.f32.mrb[0].mxu0
        %v4471 = vadd.f32 0.0, %v4470
        %v4472 = vpop.f32.mrb[0].mxu0
        %v4473 = vpop.f32.mrb[0].mxu0
        %v4474 = vadd.f32 0.0, %v4473
        %v4475 = vpop.f32.mrb[0].mxu0
        %4476 = vdwg.mxu0
        %v4477 = vld [vmem:[%s12] sm:$0xf]
        %v4478 = vld [vmem:[%s12 + $0x4] sm:$0xf]
        %v4479 = vld [vmem:[%s12 + $0x8] sm:$0xf]
        %v4480 = vld [vmem:[%s12 + $0xc] sm:$0xf]
        %v4481 = vld [vmem:[%s12 + $0x10] sm:$0xf]
        %v4482 = vld [vmem:[%s12 + $0x14] sm:$0xf]
        %v4483 = vld [vmem:[%s12 + $0x18] sm:$0xf]
        %v4484 = vld [vmem:[%s12 + $0x1c] sm:$0xf]
        %v4485 = vld [vmem:[%s12 + $0x20] sm:$0xf]
        %v4486 = vld [vmem:[%s12 + $0x24] sm:$0xf]
        %v4487 = vld [vmem:[%s12 + $0x28] sm:$0xf]
        %v4488 = vld [vmem:[%s12 + $0x2c] sm:$0xf]
        %v4489 = vld [vmem:[%s12 + $0x30] sm:$0xf]
        %v4490 = vld [vmem:[%s12 + $0x34] sm:$0xf]
        %v4491 = vld [vmem:[%s12 + $0x38] sm:$0xf]
        %v4492 = vld [vmem:[%s12 + $0x3c] sm:$0xf]
        %v4493 = vld [vmem:[%s12 + $0x40] sm:$0xf]
        %v4494 = vld [vmem:[%s12 + $0x44] sm:$0xf]
        %v4495 = vld [vmem:[%s12 + $0x48] sm:$0xf]
        %v4496 = vld [vmem:[%s12 + $0x4c] sm:$0xf]
        %v4517 = vunpack.c.l.b16 %v4477
        %v4518 = vunpack.c.l.b16 %v4478
        %v4519 = vunpack.c.l.b16 %v4479
        %v4520 = vunpack.c.l.b16 %v4480
        %v4521 = vunpack.c.l.b16 %v4481
        %v4522 = vunpack.c.l.b16 %v4482
        %v4523 = vunpack.c.l.b16 %v4483
        %v4524 = vunpack.c.l.b16 %v4484
        %v4525 = vunpack.c.l.b16 %v4485
        %v4526 = vunpack.c.l.b16 %v4486
        %v4527 = vunpack.c.l.b16 %v4487
        %v4528 = vunpack.c.l.b16 %v4488
        %v4529 = vunpack.c.l.b16 %v4489
        %v4530 = vunpack.c.l.b16 %v4490
        %v4531 = vunpack.c.l.b16 %v4491
        %v4532 = vunpack.c.l.b16 %v4492
        %v4533 = vunpack.c.l.b16 %v4493
        %v4534 = vunpack.c.l.b16 %v4494
        %v4535 = vunpack.c.l.b16 %v4495
        %v4536 = vunpack.c.l.b16 %v4496
        %v4537 = vpack.c.b16 %v4518, %v4517
        %v4538 = vpack.c.b16 %v4520, %v4519
        %v4539 = vpack.c.b16 %v4522, %v4521
        %v4540 = vpack.c.b16 %v4524, %v4523
        %v4541 = vpack.c.b16 %v4526, %v4525
        %v4542 = vpack.c.b16 %v4528, %v4527
        %v4543 = vpack.c.b16 %v4530, %v4529
        %v4544 = vpack.c.b16 %v4532, %v4531
        %v4545 = vpack.c.b16 %v4534, %v4533
        %v4546 = vpack.c.b16 %v4536, %v4535
        %4557 = vmatprep.subr.bf16.mxu0 0
        %4558 = vmatpush1.bf16.msra.mxu0 %v4537
        %4559 = vmatprep.subr.bf16.mxu0 0
        %4560 = vmatpush1.bf16.msra.mxu0 %v4538
        %4561 = vmatprep.subr.bf16.mxu0 0
        %4562 = vmatpush1.bf16.msra.mxu0 %v4539
        %4563 = vmatprep.subr.bf16.mxu0 0
        %4564 = vmatpush1.bf16.msra.mxu0 %v4540
        %4565 = vmatprep.subr.bf16.mxu0 0
        %4566 = vmatpush1.bf16.msra.mxu0 %v4541
        %4567 = vmatprep.subr.bf16.mxu0 0
        %4568 = vmatpush1.bf16.msra.mxu0 %v4542
        %4569 = vmatprep.subr.bf16.mxu0 0
        %4570 = vmatpush1.bf16.msra.mxu0 %v4543
        %4571 = vmatprep.subr.bf16.mxu0 0
        %4572 = vmatpush1.bf16.msra.mxu0 %v4544
        %4573 = vmatprep.subr.bf16.mxu0 0
        %4574 = vmatpush1.bf16.msra.mxu0 %v4545
        %4575 = vmatprep.subr.bf16.mxu0 0
        %4576 = vmatpush1.bf16.msra.mxu0 %v4546
        %4577 = vmatprep.subr.bf16.mxu0 0
        %4578 = vmatpush1.bf16.msra.mxu0 0
        %4579 = vmatprep.subr.bf16.mxu0 0
        %4580 = vmatpush1.bf16.msra.mxu0 0
        %4581 = vmatprep.subr.bf16.mxu0 0
        %4582 = vmatpush1.bf16.msra.mxu0 0
        %4583 = vmatprep.subr.bf16.mxu0 0
        %4584 = vmatpush1.bf16.msra.mxu0 0
        %4585 = vmatprep.subr.bf16.mxu0 0
        %4586 = vmatpush1.bf16.msra.mxu0 0
        %4587 = vmatprep.subr.bf16.mxu0 0
        %4588 = vmatpush1.bf16.msra.mxu0 0
        %4589 = vmatprep.mubr.bf16.mxu0 %v4401
        %4590 = vmatmul.mubr.bf16.gmra.mrb[0].mxu0 %v4312
        %v4591 = vpop.f32.mrb[0].mxu0
        %v4592 = vadd.f32 0.0, %v4591
        %v4593 = vpop.f32.mrb[0].mxu0
        %v4594 = vpop.f32.mrb[0].mxu0
        %v4595 = vadd.f32 0.0, %v4594
        %v4596 = vpop.f32.mrb[0].mxu0
        %4597 = vmatprep.mubr.bf16.mxu0 %v4404
        %4598 = vmatmul.mubr.bf16.gmra.mrb[0].mxu0 %v4314
        %v4599 = vpop.f32.mrb[0].mxu0
        %v4600 = vadd.f32 0.0, %v4599
        %v4601 = vpop.f32.mrb[0].mxu0
        %v4602 = vpop.f32.mrb[0].mxu0
        %v4603 = vadd.f32 0.0, %v4602
        %v4604 = vpop.f32.mrb[0].mxu0
        %4605 = vmatprep.mubr.bf16.mxu0 %v4407
        %4606 = vmatmul.mubr.bf16.gmra.mrb[0].mxu0 %v4316
        %v4607 = vpop.f32.mrb[0].mxu0
        %v4608 = vadd.f32 0.0, %v4607
        %v4609 = vpop.f32.mrb[0].mxu0
        %v4610 = vpop.f32.mrb[0].mxu0
        %v4611 = vadd.f32 0.0, %v4610
        %v4612 = vpop.f32.mrb[0].mxu0
        %4613 = vmatprep.mubr.bf16.mxu0 %v4410
        %4614 = vmatmul.mubr.bf16.gmra.mrb[0].mxu0 %v4318
        %v4615 = vpop.f32.mrb[0].mxu0
        %v4616 = vadd.f32 0.0, %v4615
        %v4617 = vpop.f32.mrb[0].mxu0
        %v4618 = vpop.f32.mrb[0].mxu0
        %v4619 = vadd.f32 0.0, %v4618
        %v4620 = vpop.f32.mrb[0].mxu0
        %4621 = vdwg.mxu0
        %v4622 = vmax.f32 %v4447, %v4592
        %v4623 = vmax.f32 %v4450, %v4595
        %v4624 = vmax.f32 %v4455, %v4600
        %v4625 = vmax.f32 %v4458, %v4603
        %v4626 = vmax.f32 %v4463, %v4608
        %v4627 = vmax.f32 %v4466, %v4611
        %v4628 = vmax.f32 %v4471, %v4616
        %v4629 = vmax.f32 %v4474, %v4619
        %v4630 = vpack.c.bf16 %v4623, %v4622
        %v4631 = vpack.c.bf16 %v4625, %v4624
        %v4632 = vpack.c.bf16 %v4627, %v4626
        %v4633 = vpack.c.bf16 %v4629, %v4628
        %v4634 = vld [vmem:[%s13] sm:$0xf]
        %v4636 = vsel %vm1271, %v4634, 0
        %4638 = vmatprep.subr.bf16.mxu0 0
        %4639 = vmatpush1.bf16.msra.mxu0 %v4630
        %4640 = vmatprep.subr.bf16.mxu0 0
        %4641 = vmatpush1.bf16.msra.mxu0 %v4631
        %4642 = vmatprep.subr.bf16.mxu0 0
        %4643 = vmatpush1.bf16.msra.mxu0 %v4632
        %4644 = vmatprep.subr.bf16.mxu0 0
        %4645 = vmatpush1.bf16.msra.mxu0 %v4633
        %4646 = vmatprep.subr.bf16.mxu0 0
        %4647 = vmatpush1.bf16.msra.mxu0 0
        %4648 = vmatprep.subr.bf16.mxu0 0
        %4649 = vmatpush1.bf16.msra.mxu0 0
        %4650 = vmatprep.subr.bf16.mxu0 0
        %4651 = vmatpush1.bf16.msra.mxu0 0
        %4652 = vmatprep.subr.bf16.mxu0 0
        %4653 = vmatpush1.bf16.msra.mxu0 0
        %4654 = vmatprep.subr.bf16.mxu0 0
        %4655 = vmatpush1.bf16.msra.mxu0 0
        %4656 = vmatprep.subr.bf16.mxu0 0
        %4657 = vmatpush1.bf16.msra.mxu0 0
        %4658 = vmatprep.subr.bf16.mxu0 0
        %4659 = vmatpush1.bf16.msra.mxu0 0
        %4660 = vmatprep.subr.bf16.mxu0 0
        %4661 = vmatpush1.bf16.msra.mxu0 0
        %4662 = vmatprep.subr.bf16.mxu0 0
        %4663 = vmatpush1.bf16.msra.mxu0 0
        %4664 = vmatprep.subr.bf16.mxu0 0
        %4665 = vmatpush1.bf16.msra.mxu0 0
        %4666 = vmatprep.subr.bf16.mxu0 0
        %4667 = vmatpush1.bf16.msra.mxu0 0
        %4668 = vmatprep.subr.bf16.mxu0 0
        %4669 = vmatpush1.bf16.msra.mxu0 0
        %4670 = vmatprep.mubr.bf16.mxu0 0
        %4671 = vmatmul.mubr.bf16.gmra.mrb[0].mxu0 %v4636
        %v4672 = vpop.f32.mrb[0].mxu0
        %v4673 = vadd.f32 0.0, %v4672
        %v4674 = vpop.f32.mrb[0].mxu0
        %v4675 = vpop.f32.mrb[0].mxu0
        %v4676 = vpop.f32.mrb[0].mxu0
        %4677 = vdwg.mxu0
        %v4678 = vpack.c.bf16 %v4673, %v4673
        %v4679 = vld [vmem:[%s14] sm:$0xf]
        %v4680 = vld [vmem:[%s14 + $0x4] sm:$0xf]
        %v4681 = vld [vmem:[%s14 + $0x8] sm:$0xf]
        %v4682 = vld [vmem:[%s14 + $0xc] sm:$0xf]
        %v4683 = vld [vmem:[%s14 + $0x10] sm:$0xf]
        %v4684 = vld [vmem:[%s14 + $0x14] sm:$0xf]
        %v4685 = vld [vmem:[%s14 + $0x18] sm:$0xf]
        %v4686 = vld [vmem:[%s14 + $0x1c] sm:$0xf]
        %v4687 = vld [vmem:[%s14 + $0x20] sm:$0xf]
        %v4688 = vld [vmem:[%s14 + $0x24] sm:$0xf]
        %s4689 = scalar_lea.vmem %s13, 4
        %v4690 = vld [vmem:[%s4689] sm:$0xf]
        %v4692 = vsel %vm1271, %v4690, 0
        %4694 = vmatprep.subr.bf16.mxu0 0
        %4695 = vmatpush1.bf16.msra.mxu0 %v4630
        %4696 = vmatprep.subr.bf16.mxu0 0
        %4697 = vmatpush1.bf16.msra.mxu0 %v4631
        %4698 = vmatprep.subr.bf16.mxu0 0
        %4699 = vmatpush1.bf16.msra.mxu0 %v4632
        %4700 = vmatprep.subr.bf16.mxu0 0
        %4701 = vmatpush1.bf16.msra.mxu0 %v4633
        %4702 = vmatprep.subr.bf16.mxu0 0
        %4703 = vmatpush1.bf16.msra.mxu0 0
        %4704 = vmatprep.subr.bf16.mxu0 0
        %4705 = vmatpush1.bf16.msra.mxu0 0
        %4706 = vmatprep.subr.bf16.mxu0 0
        %4707 = vmatpush1.bf16.msra.mxu0 0
        %4708 = vmatprep.subr.bf16.mxu0 0
        %4709 = vmatpush1.bf16.msra.mxu0 0
        %4710 = vmatprep.subr.bf16.mxu0 0
        %4711 = vmatpush1.bf16.msra.mxu0 0
        %4712 = vmatprep.subr.bf16.mxu0 0
        %4713 = vmatpush1.bf16.msra.mxu0 0
        %4714 = vmatprep.subr.bf16.mxu0 0
        %4715 = vmatpush1.bf16.msra.mxu0 0
        %4716 = vmatprep.subr.bf16.mxu0 0
        %4717 = vmatpush1.bf16.msra.mxu0 0
        %4718 = vmatprep.subr.bf16.mxu0 0
        %4719 = vmatpush1.bf16.msra.mxu0 0
        %4720 = vmatprep.subr.bf16.mxu0 0
        %4721 = vmatpush1.bf16.msra.mxu0 0
        %4722 = vmatprep.subr.bf16.mxu0 0
        %4723 = vmatpush1.bf16.msra.mxu0 0
        %4724 = vmatprep.subr.bf16.mxu0 0
        %4725 = vmatpush1.bf16.msra.mxu0 0
        %4726 = vmatprep.mubr.bf16.mxu0 0
        %4727 = vmatmul.mubr.bf16.gmra.mrb[0].mxu0 %v4692
        %v4728 = vpop.f32.mrb[0].mxu0
        %v4729 = vadd.f32 0.0, %v4728
        %v4730 = vpop.f32.mrb[0].mxu0
        %v4731 = vpop.f32.mrb[0].mxu0
        %v4732 = vpop.f32.mrb[0].mxu0
        %4733 = vdwg.mxu0
        %v4734 = vpack.c.bf16 %v4729, %v4729
        %s4735 = scalar_lea.vmem %s14, 40
        %v4736 = vld [vmem:[%s4735] sm:$0xf]
        %v4737 = vld [vmem:[%s4735 + $0x4] sm:$0xf]
        %v4738 = vld [vmem:[%s4735 + $0x8] sm:$0xf]
        %v4739 = vld [vmem:[%s4735 + $0xc] sm:$0xf]
        %v4740 = vld [vmem:[%s4735 + $0x10] sm:$0xf]
        %v4741 = vld [vmem:[%s4735 + $0x14] sm:$0xf]
        %v4742 = vld [vmem:[%s4735 + $0x18] sm:$0xf]
        %v4743 = vld [vmem:[%s4735 + $0x1c] sm:$0xf]
        %v4744 = vld [vmem:[%s4735 + $0x20] sm:$0xf]
        %v4745 = vld [vmem:[%s4735 + $0x24] sm:$0xf]
        %v4756 = vunpack.c.l.b16 %v4736
        %v4757 = vunpack.c.l.b16 %v4737
        %v4758 = vunpack.c.l.b16 %v4738
        %v4759 = vunpack.c.l.b16 %v4739
        %v4760 = vunpack.c.l.b16 %v4740
        %v4761 = vunpack.c.l.b16 %v4741
        %v4762 = vunpack.c.l.b16 %v4742
        %v4763 = vunpack.c.l.b16 %v4743
        %v4764 = vunpack.c.l.b16 %v4744
        %v4765 = vunpack.c.l.b16 %v4745
        %v4766 = vpack.c.b16 %v4757, %v4756
        %v4767 = vpack.c.b16 %v4759, %v4758
        %v4768 = vpack.c.b16 %v4761, %v4760
        %v4769 = vpack.c.b16 %v4763, %v4762
        %v4770 = vpack.c.b16 %v4765, %v4764
        %v4777 = vsel %vm3433, %v4734, 0
        %4779 = vmatprep.subr.bf16.mxu0 0
        %4780 = vmatpush1.bf16.msra.mxu0 %v4766
        %4781 = vmatprep.subr.bf16.mxu0 0
        %4782 = vmatpush1.bf16.msra.mxu0 %v4767
        %4783 = vmatprep.subr.bf16.mxu0 0
        %4784 = vmatpush1.bf16.msra.mxu0 %v4768
        %4785 = vmatprep.subr.bf16.mxu0 0
        %4786 = vmatpush1.bf16.msra.mxu0 %v4769
        %4787 = vmatprep.subr.bf16.mxu0 0
        %4788 = vmatpush1.bf16.msra.mxu0 %v4770
        %4789 = vmatprep.subr.bf16.mxu0 0
        %4790 = vmatpush1.bf16.msra.mxu0 0
        %4791 = vmatprep.subr.bf16.mxu0 0
        %4792 = vmatpush1.bf16.msra.mxu0 0
        %4793 = vmatprep.subr.bf16.mxu0 0
        %4794 = vmatpush1.bf16.msra.mxu0 0
        %4795 = vmatprep.subr.bf16.mxu0 0
        %4796 = vmatpush1.bf16.msra.mxu0 0
        %4797 = vmatprep.subr.bf16.mxu0 0
        %4798 = vmatpush1.bf16.msra.mxu0 0
        %4799 = vmatprep.subr.bf16.mxu0 0
        %4800 = vmatpush1.bf16.msra.mxu0 0
        %4801 = vmatprep.subr.bf16.mxu0 0
        %4802 = vmatpush1.bf16.msra.mxu0 0
        %4803 = vmatprep.subr.bf16.mxu0 0
        %4804 = vmatpush1.bf16.msra.mxu0 0
        %4805 = vmatprep.subr.bf16.mxu0 0
        %4806 = vmatpush1.bf16.msra.mxu0 0
        %4807 = vmatprep.subr.bf16.mxu0 0
        %4808 = vmatpush1.bf16.msra.mxu0 0
        %4809 = vmatprep.subr.bf16.mxu0 0
        %4810 = vmatpush1.bf16.msra.mxu0 0
        %4811 = vmatprep.mubr.bf16.mxu0 0
        %4812 = vmatmul.mubr.bf16.gmra.mrb[0].mxu0 %v4777
        %v4813 = vpop.f32.mrb[0].mxu0
        %v4814 = vadd.f32 0.0, %v4813
        %v4815 = vpop.f32.mrb[0].mxu0
        %v4816 = vpop.f32.mrb[0].mxu0
        %v4817 = vpop.f32.mrb[0].mxu0
        %4818 = vdwg.mxu0
        %v4829 = vunpack.c.l.b16 %v4679
        %v4830 = vunpack.c.l.b16 %v4680
        %v4831 = vunpack.c.l.b16 %v4681
        %v4832 = vunpack.c.l.b16 %v4682
        %v4833 = vunpack.c.l.b16 %v4683
        %v4834 = vunpack.c.l.b16 %v4684
        %v4835 = vunpack.c.l.b16 %v4685
        %v4836 = vunpack.c.l.b16 %v4686
        %v4837 = vunpack.c.l.b16 %v4687
        %v4838 = vunpack.c.l.b16 %v4688
        %v4839 = vpack.c.b16 %v4830, %v4829
        %v4840 = vpack.c.b16 %v4832, %v4831
        %v4841 = vpack.c.b16 %v4834, %v4833
        %v4842 = vpack.c.b16 %v4836, %v4835
        %v4843 = vpack.c.b16 %v4838, %v4837
        %v4850 = vsel %vm3433, %v4678, 0
        %4852 = vmatprep.subr.bf16.mxu0 0
        %4853 = vmatpush1.bf16.msra.mxu0 %v4839
        %4854 = vmatprep.subr.bf16.mxu0 0
        %4855 = vmatpush1.bf16.msra.mxu0 %v4840
        %4856 = vmatprep.subr.bf16.mxu0 0
        %4857 = vmatpush1.bf16.msra.mxu0 %v4841
        %4858 = vmatprep.subr.bf16.mxu0 0
        %4859 = vmatpush1.bf16.msra.mxu0 %v4842
        %4860 = vmatprep.subr.bf16.mxu0 0
        %4861 = vmatpush1.bf16.msra.mxu0 %v4843
        %4862 = vmatprep.subr.bf16.mxu0 0
        %4863 = vmatpush1.bf16.msra.mxu0 0
        %4864 = vmatprep.subr.bf16.mxu0 0
        %4865 = vmatpush1.bf16.msra.mxu0 0
        %4866 = vmatprep.subr.bf16.mxu0 0
        %4867 = vmatpush1.bf16.msra.mxu0 0
        %4868 = vmatprep.subr.bf16.mxu0 0
        %4869 = vmatpush1.bf16.msra.mxu0 0
        %4870 = vmatprep.subr.bf16.mxu0 0
        %4871 = vmatpush1.bf16.msra.mxu0 0
        %4872 = vmatprep.subr.bf16.mxu0 0
        %4873 = vmatpush1.bf16.msra.mxu0 0
        %4874 = vmatprep.subr.bf16.mxu0 0
        %4875 = vmatpush1.bf16.msra.mxu0 0
        %4876 = vmatprep.subr.bf16.mxu0 0
        %4877 = vmatpush1.bf16.msra.mxu0 0
        %4878 = vmatprep.subr.bf16.mxu0 0
        %4879 = vmatpush1.bf16.msra.mxu0 0
        %4880 = vmatprep.subr.bf16.mxu0 0
        %4881 = vmatpush1.bf16.msra.mxu0 0
        %4882 = vmatprep.subr.bf16.mxu0 0
        %4883 = vmatpush1.bf16.msra.mxu0 0
        %4884 = vmatprep.mubr.bf16.mxu0 0
        %4885 = vmatmul.mubr.bf16.gmra.mrb[0].mxu0 %v4850
        %v4886 = vpop.f32.mrb[0].mxu0
        %v4887 = vadd.f32 %v4814, %v4886
        %v4888 = vpop.f32.mrb[0].mxu0
        %v4889 = vpop.f32.mrb[0].mxu0
        %v4890 = vpop.f32.mrb[0].mxu0
        %4891 = vdwg.mxu0
        %s4892 = scalar_lea.vmem %s13, 8
        %v4893 = vld [vmem:[%s4892] sm:$0xf]
        %v4895 = vsel %vm1271, %v4893, 0
        %4897 = vmatprep.subr.bf16.mxu0 0
        %4898 = vmatpush1.bf16.msra.mxu0 %v4630
        %4899 = vmatprep.subr.bf16.mxu0 0
        %4900 = vmatpush1.bf16.msra.mxu0 %v4631
        %4901 = vmatprep.subr.bf16.mxu0 0
        %4902 = vmatpush1.bf16.msra.mxu0 %v4632
        %4903 = vmatprep.subr.bf16.mxu0 0
        %4904 = vmatpush1.bf16.msra.mxu0 %v4633
        %4905 = vmatprep.subr.bf16.mxu0 0
        %4906 = vmatpush1.bf16.msra.mxu0 0
        %4907 = vmatprep.subr.bf16.mxu0 0
        %4908 = vmatpush1.bf16.msra.mxu0 0
        %4909 = vmatprep.subr.bf16.mxu0 0
        %4910 = vmatpush1.bf16.msra.mxu0 0
        %4911 = vmatprep.subr.bf16.mxu0 0
        %4912 = vmatpush1.bf16.msra.mxu0 0
        %4913 = vmatprep.subr.bf16.mxu0 0
        %4914 = vmatpush1.bf16.msra.mxu0 0
        %4915 = vmatprep.subr.bf16.mxu0 0
        %4916 = vmatpush1.bf16.msra.mxu0 0
        %4917 = vmatprep.subr.bf16.mxu0 0
        %4918 = vmatpush1.bf16.msra.mxu0 0
        %4919 = vmatprep.subr.bf16.mxu0 0
        %4920 = vmatpush1.bf16.msra.mxu0 0
        %4921 = vmatprep.subr.bf16.mxu0 0
        %4922 = vmatpush1.bf16.msra.mxu0 0
        %4923 = vmatprep.subr.bf16.mxu0 0
        %4924 = vmatpush1.bf16.msra.mxu0 0
        %4925 = vmatprep.subr.bf16.mxu0 0
        %4926 = vmatpush1.bf16.msra.mxu0 0
        %4927 = vmatprep.subr.bf16.mxu0 0
        %4928 = vmatpush1.bf16.msra.mxu0 0
        %4929 = vmatprep.mubr.bf16.mxu0 0
        %4930 = vmatmul.mubr.bf16.gmra.mrb[0].mxu0 %v4895
        %v4931 = vpop.f32.mrb[0].mxu0
        %v4932 = vadd.f32 0.0, %v4931
        %v4933 = vpop.f32.mrb[0].mxu0
        %v4934 = vpop.f32.mrb[0].mxu0
        %v4935 = vpop.f32.mrb[0].mxu0
        %4936 = vdwg.mxu0
        %v4937 = vpack.c.bf16 %v4932, %v4932
        %s4938 = scalar_lea.vmem %s14, 80
        %v4939 = vld [vmem:[%s4938] sm:$0xf]
        %v4940 = vld [vmem:[%s4938 + $0x4] sm:$0xf]
        %v4941 = vld [vmem:[%s4938 + $0x8] sm:$0xf]
        %v4942 = vld [vmem:[%s4938 + $0xc] sm:$0xf]
        %v4943 = vld [vmem:[%s4938 + $0x10] sm:$0xf]
        %v4944 = vld [vmem:[%s4938 + $0x14] sm:$0xf]
        %v4945 = vld [vmem:[%s4938 + $0x18] sm:$0xf]
        %v4946 = vld [vmem:[%s4938 + $0x1c] sm:$0xf]
        %v4947 = vld [vmem:[%s4938 + $0x20] sm:$0xf]
        %v4948 = vld [vmem:[%s4938 + $0x24] sm:$0xf]
        %v4959 = vunpack.c.l.b16 %v4939
        %v4960 = vunpack.c.l.b16 %v4940
        %v4961 = vunpack.c.l.b16 %v4941
        %v4962 = vunpack.c.l.b16 %v4942
        %v4963 = vunpack.c.l.b16 %v4943
        %v4964 = vunpack.c.l.b16 %v4944
        %v4965 = vunpack.c.l.b16 %v4945
        %v4966 = vunpack.c.l.b16 %v4946
        %v4967 = vunpack.c.l.b16 %v4947
        %v4968 = vunpack.c.l.b16 %v4948
        %v4969 = vpack.c.b16 %v4960, %v4959
        %v4970 = vpack.c.b16 %v4962, %v4961
        %v4971 = vpack.c.b16 %v4964, %v4963
        %v4972 = vpack.c.b16 %v4966, %v4965
        %v4973 = vpack.c.b16 %v4968, %v4967
        %v4980 = vsel %vm3433, %v4937, 0
        %4982 = vmatprep.subr.bf16.mxu0 0
        %4983 = vmatpush1.bf16.msra.mxu0 %v4969
        %4984 = vmatprep.subr.bf16.mxu0 0
        %4985 = vmatpush1.bf16.msra.mxu0 %v4970
        %4986 = vmatprep.subr.bf16.mxu0 0
        %4987 = vmatpush1.bf16.msra.mxu0 %v4971
        %4988 = vmatprep.subr.bf16.mxu0 0
        %4989 = vmatpush1.bf16.msra.mxu0 %v4972
        %4990 = vmatprep.subr.bf16.mxu0 0
        %4991 = vmatpush1.bf16.msra.mxu0 %v4973
        %4992 = vmatprep.subr.bf16.mxu0 0
        %4993 = vmatpush1.bf16.msra.mxu0 0
        %4994 = vmatprep.subr.bf16.mxu0 0
        %4995 = vmatpush1.bf16.msra.mxu0 0
        %4996 = vmatprep.subr.bf16.mxu0 0
        %4997 = vmatpush1.bf16.msra.mxu0 0
        %4998 = vmatprep.subr.bf16.mxu0 0
        %4999 = vmatpush1.bf16.msra.mxu0 0
        %5000 = vmatprep.subr.bf16.mxu0 0
        %5001 = vmatpush1.bf16.msra.mxu0 0
        %5002 = vmatprep.subr.bf16.mxu0 0
        %5003 = vmatpush1.bf16.msra.mxu0 0
        %5004 = vmatprep.subr.bf16.mxu0 0
        %5005 = vmatpush1.bf16.msra.mxu0 0
        %5006 = vmatprep.subr.bf16.mxu0 0
        %5007 = vmatpush1.bf16.msra.mxu0 0
        %5008 = vmatprep.subr.bf16.mxu0 0
        %5009 = vmatpush1.bf16.msra.mxu0 0
        %5010 = vmatprep.subr.bf16.mxu0 0
        %5011 = vmatpush1.bf16.msra.mxu0 0
        %5012 = vmatprep.subr.bf16.mxu0 0
        %5013 = vmatpush1.bf16.msra.mxu0 0
        %5014 = vmatprep.mubr.bf16.mxu0 0
        %5015 = vmatmul.mubr.bf16.gmra.mrb[0].mxu0 %v4980
        %v5016 = vpop.f32.mrb[0].mxu0
        %v5017 = vadd.f32 0.0, %v5016
        %v5018 = vpop.f32.mrb[0].mxu0
        %v5019 = vpop.f32.mrb[0].mxu0
        %v5020 = vpop.f32.mrb[0].mxu0
        %5021 = vdwg.mxu0
        %v5022 = vadd.f32 %v4887, %v5017
        %s5023 = scalar_lea.vmem %s13, 12
        %v5024 = vld [vmem:[%s5023] sm:$0xf]
        %v5026 = vsel %vm1271, %v5024, 0
        %5028 = vmatprep.subr.bf16.mxu0 0
        %5029 = vmatpush1.bf16.msra.mxu0 %v4630
        %5030 = vmatprep.subr.bf16.mxu0 0
        %5031 = vmatpush1.bf16.msra.mxu0 %v4631
        %5032 = vmatprep.subr.bf16.mxu0 0
        %5033 = vmatpush1.bf16.msra.mxu0 %v4632
        %5034 = vmatprep.subr.bf16.mxu0 0
        %5035 = vmatpush1.bf16.msra.mxu0 %v4633
        %5036 = vmatprep.subr.bf16.mxu0 0
        %5037 = vmatpush1.bf16.msra.mxu0 0
        %5038 = vmatprep.subr.bf16.mxu0 0
        %5039 = vmatpush1.bf16.msra.mxu0 0
        %5040 = vmatprep.subr.bf16.mxu0 0
        %5041 = vmatpush1.bf16.msra.mxu0 0
        %5042 = vmatprep.subr.bf16.mxu0 0
        %5043 = vmatpush1.bf16.msra.mxu0 0
        %5044 = vmatprep.subr.bf16.mxu0 0
        %5045 = vmatpush1.bf16.msra.mxu0 0
        %5046 = vmatprep.subr.bf16.mxu0 0
        %5047 = vmatpush1.bf16.msra.mxu0 0
        %5048 = vmatprep.subr.bf16.mxu0 0
        %5049 = vmatpush1.bf16.msra.mxu0 0
        %5050 = vmatprep.subr.bf16.mxu0 0
        %5051 = vmatpush1.bf16.msra.mxu0 0
        %5052 = vmatprep.subr.bf16.mxu0 0
        %5053 = vmatpush1.bf16.msra.mxu0 0
        %5054 = vmatprep.subr.bf16.mxu0 0
        %5055 = vmatpush1.bf16.msra.mxu0 0
        %5056 = vmatprep.subr.bf16.mxu0 0
        %5057 = vmatpush1.bf16.msra.mxu0 0
        %5058 = vmatprep.subr.bf16.mxu0 0
        %5059 = vmatpush1.bf16.msra.mxu0 0
        %5060 = vmatprep.mubr.bf16.mxu0 0
        %5061 = vmatmul.mubr.bf16.gmra.mrb[0].mxu0 %v5026
        %v5062 = vpop.f32.mrb[0].mxu0
        %v5063 = vadd.f32 0.0, %v5062
        %v5064 = vpop.f32.mrb[0].mxu0
        %v5065 = vpop.f32.mrb[0].mxu0
        %v5066 = vpop.f32.mrb[0].mxu0
        %5067 = vdwg.mxu0
        %v5068 = vpack.c.bf16 %v5063, %v5063
        %s5069 = scalar_lea.vmem %s14, 120
        %v5070 = vld [vmem:[%s5069] sm:$0xf]
        %v5071 = vld [vmem:[%s5069 + $0x4] sm:$0xf]
        %v5072 = vld [vmem:[%s5069 + $0x8] sm:$0xf]
        %v5073 = vld [vmem:[%s5069 + $0xc] sm:$0xf]
        %v5074 = vld [vmem:[%s5069 + $0x10] sm:$0xf]
        %v5075 = vld [vmem:[%s5069 + $0x14] sm:$0xf]
        %v5076 = vld [vmem:[%s5069 + $0x18] sm:$0xf]
        %v5077 = vld [vmem:[%s5069 + $0x1c] sm:$0xf]
        %v5078 = vld [vmem:[%s5069 + $0x20] sm:$0xf]
        %v5079 = vld [vmem:[%s5069 + $0x24] sm:$0xf]
        %v5090 = vunpack.c.l.b16 %v5070
        %v5091 = vunpack.c.l.b16 %v5071
        %v5092 = vunpack.c.l.b16 %v5072
        %v5093 = vunpack.c.l.b16 %v5073
        %v5094 = vunpack.c.l.b16 %v5074
        %v5095 = vunpack.c.l.b16 %v5075
        %v5096 = vunpack.c.l.b16 %v5076
        %v5097 = vunpack.c.l.b16 %v5077
        %v5098 = vunpack.c.l.b16 %v5078
        %v5099 = vunpack.c.l.b16 %v5079
        %v5100 = vpack.c.b16 %v5091, %v5090
        %v5101 = vpack.c.b16 %v5093, %v5092
        %v5102 = vpack.c.b16 %v5095, %v5094
        %v5103 = vpack.c.b16 %v5097, %v5096
        %v5104 = vpack.c.b16 %v5099, %v5098
        %v5111 = vsel %vm3433, %v5068, 0
        %5113 = vmatprep.subr.bf16.mxu0 0
        %5114 = vmatpush1.bf16.msra.mxu0 %v5100
        %5115 = vmatprep.subr.bf16.mxu0 0
        %5116 = vmatpush1.bf16.msra.mxu0 %v5101
        %5117 = vmatprep.subr.bf16.mxu0 0
        %5118 = vmatpush1.bf16.msra.mxu0 %v5102
        %5119 = vmatprep.subr.bf16.mxu0 0
        %5120 = vmatpush1.bf16.msra.mxu0 %v5103
        %5121 = vmatprep.subr.bf16.mxu0 0
        %5122 = vmatpush1.bf16.msra.mxu0 %v5104
        %5123 = vmatprep.subr.bf16.mxu0 0
        %5124 = vmatpush1.bf16.msra.mxu0 0
        %5125 = vmatprep.subr.bf16.mxu0 0
        %5126 = vmatpush1.bf16.msra.mxu0 0
        %5127 = vmatprep.subr.bf16.mxu0 0
        %5128 = vmatpush1.bf16.msra.mxu0 0
        %5129 = vmatprep.subr.bf16.mxu0 0
        %5130 = vmatpush1.bf16.msra.mxu0 0
        %5131 = vmatprep.subr.bf16.mxu0 0
        %5132 = vmatpush1.bf16.msra.mxu0 0
        %5133 = vmatprep.subr.bf16.mxu0 0
        %5134 = vmatpush1.bf16.msra.mxu0 0
        %5135 = vmatprep.subr.bf16.mxu0 0
        %5136 = vmatpush1.bf16.msra.mxu0 0
        %5137 = vmatprep.subr.bf16.mxu0 0
        %5138 = vmatpush1.bf16.msra.mxu0 0
        %5139 = vmatprep.subr.bf16.mxu0 0
        %5140 = vmatpush1.bf16.msra.mxu0 0
        %5141 = vmatprep.subr.bf16.mxu0 0
        %5142 = vmatpush1.bf16.msra.mxu0 0
        %5143 = vmatprep.subr.bf16.mxu0 0
        %5144 = vmatpush1.bf16.msra.mxu0 0
        %5145 = vmatprep.mubr.bf16.mxu0 0
        %5146 = vmatmul.mubr.bf16.gmra.mrb[0].mxu0 %v5111
        %v5147 = vpop.f32.mrb[0].mxu0
        %v5148 = vadd.f32 0.0, %v5147
        %v5149 = vpop.f32.mrb[0].mxu0
        %v5150 = vpop.f32.mrb[0].mxu0
        %v5151 = vpop.f32.mrb[0].mxu0
        %5152 = vdwg.mxu0
        %v5153 = vadd.f32 %v5022, %v5148
        %s5154 = scalar_lea.vmem %s13, 16
        %v5155 = vld [vmem:[%s5154] sm:$0xf]
        %v5157 = vsel %vm1271, %v5155, 0
        %5159 = vmatprep.subr.bf16.mxu0 0
        %5160 = vmatpush1.bf16.msra.mxu0 %v4630
        %5161 = vmatprep.subr.bf16.mxu0 0
        %5162 = vmatpush1.bf16.msra.mxu0 %v4631
        %5163 = vmatprep.subr.bf16.mxu0 0
        %5164 = vmatpush1.bf16.msra.mxu0 %v4632
        %5165 = vmatprep.subr.bf16.mxu0 0
        %5166 = vmatpush1.bf16.msra.mxu0 %v4633
        %5167 = vmatprep.subr.bf16.mxu0 0
        %5168 = vmatpush1.bf16.msra.mxu0 0
        %5169 = vmatprep.subr.bf16.mxu0 0
        %5170 = vmatpush1.bf16.msra.mxu0 0
        %5171 = vmatprep.subr.bf16.mxu0 0
        %5172 = vmatpush1.bf16.msra.mxu0 0
        %5173 = vmatprep.subr.bf16.mxu0 0
        %5174 = vmatpush1.bf16.msra.mxu0 0
        %5175 = vmatprep.subr.bf16.mxu0 0
        %5176 = vmatpush1.bf16.msra.mxu0 0
        %5177 = vmatprep.subr.bf16.mxu0 0
        %5178 = vmatpush1.bf16.msra.mxu0 0
        %5179 = vmatprep.subr.bf16.mxu0 0
        %5180 = vmatpush1.bf16.msra.mxu0 0
        %5181 = vmatprep.subr.bf16.mxu0 0
        %5182 = vmatpush1.bf16.msra.mxu0 0
        %5183 = vmatprep.subr.bf16.mxu0 0
        %5184 = vmatpush1.bf16.msra.mxu0 0
        %5185 = vmatprep.subr.bf16.mxu0 0
        %5186 = vmatpush1.bf16.msra.mxu0 0
        %5187 = vmatprep.subr.bf16.mxu0 0
        %5188 = vmatpush1.bf16.msra.mxu0 0
        %5189 = vmatprep.subr.bf16.mxu0 0
        %5190 = vmatpush1.bf16.msra.mxu0 0
        %5191 = vmatprep.mubr.bf16.mxu0 0
        %5192 = vmatmul.mubr.bf16.gmra.mrb[0].mxu0 %v5157
        %v5193 = vpop.f32.mrb[0].mxu0
        %v5194 = vadd.f32 0.0, %v5193
        %v5195 = vpop.f32.mrb[0].mxu0
        %v5196 = vpop.f32.mrb[0].mxu0
        %v5197 = vpop.f32.mrb[0].mxu0
        %5198 = vdwg.mxu0
        %v5199 = vpack.c.bf16 %v5194, %v5194
        %s5200 = scalar_lea.vmem %s14, 160
        %v5201 = vld [vmem:[%s5200] sm:$0xf]
        %v5202 = vld [vmem:[%s5200 + $0x4] sm:$0xf]
        %v5203 = vld [vmem:[%s5200 + $0x8] sm:$0xf]
        %v5204 = vld [vmem:[%s5200 + $0xc] sm:$0xf]
        %v5205 = vld [vmem:[%s5200 + $0x10] sm:$0xf]
        %v5206 = vld [vmem:[%s5200 + $0x14] sm:$0xf]
        %v5207 = vld [vmem:[%s5200 + $0x18] sm:$0xf]
        %v5208 = vld [vmem:[%s5200 + $0x1c] sm:$0xf]
        %v5209 = vld [vmem:[%s5200 + $0x20] sm:$0xf]
        %v5210 = vld [vmem:[%s5200 + $0x24] sm:$0xf]
        %v5221 = vunpack.c.l.b16 %v5201
        %v5222 = vunpack.c.l.b16 %v5202
        %v5223 = vunpack.c.l.b16 %v5203
        %v5224 = vunpack.c.l.b16 %v5204
        %v5225 = vunpack.c.l.b16 %v5205
        %v5226 = vunpack.c.l.b16 %v5206
        %v5227 = vunpack.c.l.b16 %v5207
        %v5228 = vunpack.c.l.b16 %v5208
        %v5229 = vunpack.c.l.b16 %v5209
        %v5230 = vunpack.c.l.b16 %v5210
        %v5231 = vpack.c.b16 %v5222, %v5221
        %v5232 = vpack.c.b16 %v5224, %v5223
        %v5233 = vpack.c.b16 %v5226, %v5225
        %v5234 = vpack.c.b16 %v5228, %v5227
        %v5235 = vpack.c.b16 %v5230, %v5229
        %v5242 = vsel %vm3433, %v5199, 0
        %5244 = vmatprep.subr.bf16.mxu0 0
        %5245 = vmatpush1.bf16.msra.mxu0 %v5231
        %5246 = vmatprep.subr.bf16.mxu0 0
        %5247 = vmatpush1.bf16.msra.mxu0 %v5232
        %5248 = vmatprep.subr.bf16.mxu0 0
        %5249 = vmatpush1.bf16.msra.mxu0 %v5233
        %5250 = vmatprep.subr.bf16.mxu0 0
        %5251 = vmatpush1.bf16.msra.mxu0 %v5234
        %5252 = vmatprep.subr.bf16.mxu0 0
        %5253 = vmatpush1.bf16.msra.mxu0 %v5235
        %5254 = vmatprep.subr.bf16.mxu0 0
        %5255 = vmatpush1.bf16.msra.mxu0 0
        %5256 = vmatprep.subr.bf16.mxu0 0
        %5257 = vmatpush1.bf16.msra.mxu0 0
        %5258 = vmatprep.subr.bf16.mxu0 0
        %5259 = vmatpush1.bf16.msra.mxu0 0
        %5260 = vmatprep.subr.bf16.mxu0 0
        %5261 = vmatpush1.bf16.msra.mxu0 0
        %5262 = vmatprep.subr.bf16.mxu0 0
        %5263 = vmatpush1.bf16.msra.mxu0 0
        %5264 = vmatprep.subr.bf16.mxu0 0
        %5265 = vmatpush1.bf16.msra.mxu0 0
        %5266 = vmatprep.subr.bf16.mxu0 0
        %5267 = vmatpush1.bf16.msra.mxu0 0
        %5268 = vmatprep.subr.bf16.mxu0 0
        %5269 = vmatpush1.bf16.msra.mxu0 0
        %5270 = vmatprep.subr.bf16.mxu0 0
        %5271 = vmatpush1.bf16.msra.mxu0 0
        %5272 = vmatprep.subr.bf16.mxu0 0
        %5273 = vmatpush1.bf16.msra.mxu0 0
        %5274 = vmatprep.subr.bf16.mxu0 0
        %5275 = vmatpush1.bf16.msra.mxu0 0
        %5276 = vmatprep.mubr.bf16.mxu0 0
        %5277 = vmatmul.mubr.bf16.gmra.mrb[0].mxu0 %v5242
        %v5278 = vpop.f32.mrb[0].mxu0
        %v5279 = vadd.f32 0.0, %v5278
        %v5280 = vpop.f32.mrb[0].mxu0
        %v5281 = vpop.f32.mrb[0].mxu0
        %v5282 = vpop.f32.mrb[0].mxu0
        %5283 = vdwg.mxu0
        %v5284 = vadd.f32 %v5153, %v5279
        %v5285 = vld [vmem:[%s15] sm:$0x1]
        %v5287 = vlaneseq
        %v5288 = vshrl.u32 %v5287, 7
        %v5289 = vsub.s32 0, %v5288
        %v5290 = vrot.slane %v5285, %v5289
        %v5292 = vadd.f32 %v5284, %v5290
        %v5293 = vmax.f32 %v5292, 0.0
        %v5294 = vpack.c.bf16 %v5293, %v5293
        %v5295 = vld [vmem:[%s16] sm:$0xf]
        %v5296 = vld [vmem:[%s16 + $0x4] sm:$0xf]
        %v5297 = vld [vmem:[%s16 + $0x8] sm:$0xf]
        %v5298 = vld [vmem:[%s16 + $0xc] sm:$0xf]
        %v5299 = vld [vmem:[%s16 + $0x10] sm:$0xf]
        %v5300 = vld [vmem:[%s16 + $0x14] sm:$0xf]
        %v5301 = vld [vmem:[%s16 + $0x18] sm:$0xf]
        %v5302 = vld [vmem:[%s16 + $0x1c] sm:$0xf]
        %v5303 = vld [vmem:[%s16 + $0x20] sm:$0xf]
        %v5304 = vld [vmem:[%s16 + $0x24] sm:$0xf]
        %v5305 = vld [vmem:[%s16 + $0x28] sm:$0xf]
        %v5306 = vld [vmem:[%s16 + $0x2c] sm:$0xf]
        %v5307 = vld [vmem:[%s16 + $0x30] sm:$0xf]
        %v5308 = vld [vmem:[%s16 + $0x34] sm:$0xf]
        %v5309 = vld [vmem:[%s16 + $0x38] sm:$0xf]
        %v5310 = vld [vmem:[%s17] sm:$0x1]
        %v5312 = vlaneseq
        %v5313 = vshrl.u32 %v5312, 7
        %v5314 = vsub.s32 0, %v5313
        %v5315 = vrot.slane %v5310, %v5314
        %v5332 = vunpack.c.l.b16 %v5295
        %v5333 = vunpack.c.l.b16 %v5296
        %v5334 = vunpack.c.l.b16 %v5297
        %v5335 = vunpack.c.l.b16 %v5298
        %v5336 = vunpack.c.l.b16 %v5299
        %v5337 = vunpack.c.l.b16 %v5300
        %v5338 = vunpack.c.l.b16 %v5301
        %v5339 = vunpack.c.l.b16 %v5302
        %v5340 = vunpack.c.l.b16 %v5303
        %v5341 = vunpack.c.l.b16 %v5304
        %v5342 = vunpack.c.l.b16 %v5305
        %v5343 = vunpack.c.l.b16 %v5306
        %v5344 = vunpack.c.l.b16 %v5307
        %v5345 = vunpack.c.l.b16 %v5308
        %v5346 = vunpack.c.l.b16 %v5309
        %v5347 = vpack.c.b16 %v5333, %v5332
        %v5348 = vpack.c.b16 %v5335, %v5334
        %v5349 = vpack.c.b16 %v5337, %v5336
        %v5350 = vpack.c.b16 %v5339, %v5338
        %v5351 = vpack.c.b16 %v5341, %v5340
        %v5352 = vpack.c.b16 %v5343, %v5342
        %v5353 = vpack.c.b16 %v5345, %v5344
        %v5354 = vpack.c.b16 %v5346, %v5346
        %vm5362 = vcmask 982016
        %v5364 = vsel %vm5362, %v5294, 0
        %v5367 = vsel %vm2846, %v5354, 0
        %5369 = vmatprep.subr.bf16.mxu0 0
        %5370 = vmatpush1.bf16.msra.mxu0 %v5347
        %5371 = vmatprep.subr.bf16.mxu0 0
        %5372 = vmatpush1.bf16.msra.mxu0 %v5348
        %5373 = vmatprep.subr.bf16.mxu0 0
        %5374 = vmatpush1.bf16.msra.mxu0 %v5349
        %5375 = vmatprep.subr.bf16.mxu0 0
        %5376 = vmatpush1.bf16.msra.mxu0 %v5350
        %5377 = vmatprep.subr.bf16.mxu0 0
        %5378 = vmatpush1.bf16.msra.mxu0 %v5351
        %5379 = vmatprep.subr.bf16.mxu0 0
        %5380 = vmatpush1.bf16.msra.mxu0 %v5352
        %5381 = vmatprep.subr.bf16.mxu0 0
        %5382 = vmatpush1.bf16.msra.mxu0 %v5353
        %5383 = vmatprep.subr.bf16.mxu0 0
        %5384 = vmatpush1.bf16.msra.mxu0 %v5367
        %5385 = vmatprep.subr.bf16.mxu0 0
        %5386 = vmatpush1.bf16.msra.mxu0 0
        %5387 = vmatprep.subr.bf16.mxu0 0
        %5388 = vmatpush1.bf16.msra.mxu0 0
        %5389 = vmatprep.subr.bf16.mxu0 0
        %5390 = vmatpush1.bf16.msra.mxu0 0
        %5391 = vmatprep.subr.bf16.mxu0 0
        %5392 = vmatpush1.bf16.msra.mxu0 0
        %5393 = vmatprep.subr.bf16.mxu0 0
        %5394 = vmatpush1.bf16.msra.mxu0 0
        %5395 = vmatprep.subr.bf16.mxu0 0
        %5396 = vmatpush1.bf16.msra.mxu0 0
        %5397 = vmatprep.subr.bf16.mxu0 0
        %5398 = vmatpush1.bf16.msra.mxu0 0
        %5399 = vmatprep.subr.bf16.mxu0 0
        %5400 = vmatpush1.bf16.msra.mxu0 0
        %5401 = vmatprep.mubr.bf16.mxu0 0
        %5402 = vmatmul.mubr.bf16.gmra.mrb[0].mxu0 %v5364
        %v5403 = vpop.f32.mrb[0].mxu0
        %v5404 = vadd.f32 %v5315, %v5403
        %v5405 = vpop.f32.mrb[0].mxu0
        %v5406 = vpop.f32.mrb[0].mxu0
        %v5407 = vpop.f32.mrb[0].mxu0
        %5408 = vdwg.mxu0
        %v5409 = vmax.f32 %v5404, 0.0
        %v5410 = vpack.c.bf16 %v5409, %v5409
        %v5411 = vld [vmem:[%s18] sm:$0xf]
        %v5412 = vld [vmem:[%s18 + $0x4] sm:$0xf]
        %v5413 = vld [vmem:[%s18 + $0x8] sm:$0xf]
        %v5414 = vld [vmem:[%s18 + $0xc] sm:$0xf]
        %v5415 = vld [vmem:[%s18 + $0x10] sm:$0xf]
        %v5416 = vld [vmem:[%s18 + $0x14] sm:$0xf]
        %v5417 = vld [vmem:[%s18 + $0x18] sm:$0xf]
        %v5418 = vld [vmem:[%s18 + $0x1c] sm:$0xf]
        %v5419 = vld [vmem:[%s18 + $0x20] sm:$0xf]
        %v5420 = vld [vmem:[%s18 + $0x24] sm:$0xf]
        %v5421 = vld [vmem:[%s18 + $0x28] sm:$0x3]
        %v5422 = vld [vmem:[%s19] sm:$0x1]
        %v5424 = vlaneseq
        %v5425 = vshrl.u32 %v5424, 7
        %v5426 = vsub.s32 0, %v5425
        %v5427 = vrot.slane %v5422, %v5426
        %v5440 = vunpack.c.l.b16 %v5411
        %v5441 = vunpack.c.l.b16 %v5412
        %v5442 = vunpack.c.l.b16 %v5413
        %v5443 = vunpack.c.l.b16 %v5414
        %v5444 = vunpack.c.l.b16 %v5415
        %v5445 = vunpack.c.l.b16 %v5416
        %v5446 = vunpack.c.l.b16 %v5417
        %v5447 = vunpack.c.l.b16 %v5418
        %v5448 = vunpack.c.l.b16 %v5419
        %v5449 = vunpack.c.l.b16 %v5420
        %v5450 = vunpack.c.l.b16 %v5421
        %v5451 = vpack.c.b16 %v5441, %v5440
        %v5452 = vpack.c.b16 %v5443, %v5442
        %v5453 = vpack.c.b16 %v5445, %v5444
        %v5454 = vpack.c.b16 %v5447, %v5446
        %v5455 = vpack.c.b16 %v5449, %v5448
        %v5456 = vpack.c.b16 %v5450, %v5450
        %v5463 = vsel %vm3367, %v5410, 0
        %v5466 = vsel %vm3805, %v5456, 0
        %5468 = vmatprep.subr.bf16.mxu0 0
        %5469 = vmatpush1.bf16.msra.mxu0 %v5451
        %5470 = vmatprep.subr.bf16.mxu0 0
        %5471 = vmatpush1.bf16.msra.mxu0 %v5452
        %5472 = vmatprep.subr.bf16.mxu0 0
        %5473 = vmatpush1.bf16.msra.mxu0 %v5453
        %5474 = vmatprep.subr.bf16.mxu0 0
        %5475 = vmatpush1.bf16.msra.mxu0 %v5454
        %5476 = vmatprep.subr.bf16.mxu0 0
        %5477 = vmatpush1.bf16.msra.mxu0 %v5455
        %5478 = vmatprep.subr.bf16.mxu0 0
        %5479 = vmatpush1.bf16.msra.mxu0 %v5466
        %5480 = vmatprep.subr.bf16.mxu0 0
        %5481 = vmatpush1.bf16.msra.mxu0 0
        %5482 = vmatprep.subr.bf16.mxu0 0
        %5483 = vmatpush1.bf16.msra.mxu0 0
        %5484 = vmatprep.subr.bf16.mxu0 0
        %5485 = vmatpush1.bf16.msra.mxu0 0
        %5486 = vmatprep.subr.bf16.mxu0 0
        %5487 = vmatpush1.bf16.msra.mxu0 0
        %5488 = vmatprep.subr.bf16.mxu0 0
        %5489 = vmatpush1.bf16.msra.mxu0 0
        %5490 = vmatprep.subr.bf16.mxu0 0
        %5491 = vmatpush1.bf16.msra.mxu0 0
        %5492 = vmatprep.subr.bf16.mxu0 0
        %5493 = vmatpush1.bf16.msra.mxu0 0
        %5494 = vmatprep.subr.bf16.mxu0 0
        %5495 = vmatpush1.bf16.msra.mxu0 0
        %5496 = vmatprep.subr.bf16.mxu0 0
        %5497 = vmatpush1.bf16.msra.mxu0 0
        %5498 = vmatprep.subr.bf16.mxu0 0
        %5499 = vmatpush1.bf16.msra.mxu0 0
        %5500 = vmatprep.mubr.bf16.mxu0 0
        %5501 = vmatmul.mubr.bf16.gmra.mrb[0].mxu0 %v5463
        %v5502 = vpop.f32.mrb[0].mxu0
        %v5503 = vadd.f32 %v5427, %v5502
        %v5504 = vpop.f32.mrb[0].mxu0
        %v5505 = vpop.f32.mrb[0].mxu0
        %v5506 = vpop.f32.mrb[0].mxu0
        %5507 = vdwg.mxu0
        %vm5508 = vcmask 80896
        %5509 = vst.msk [vmem:[%s625] sm:$0xff] %vm5508, %v5503
        %s5510 = sand.u32 %s467, 1
        %s5511 = scalar_lea.sflag [#allocation3], %s5510
        %s5512 = sand.u32 %s467, 1
        %s5513 = smul.addr %s5512, 8
        %s5514 = scalar_lea.vmem [#allocation2], %s5513
        // Predicated region
        $region101: #{cnn_forward.1} parent=99 // pred_check
          %p5515 = pneg %p477
        $region102: #{cnn_forward.1} parent=99 // pred_check_branch
          %5517 = sbr.rel (%p5515) target = $region104
        $region103: #{cnn_forward.1} parent=99 // pred_region
          %s5519 = ssub.s32 128, 128
          %5520 = vsyncadd %s5511, %s5519
          %s5521 = smul.addr %s34, 128
          %s5522 = scalar_lea.hbm %s20, %s5521
          %s5524 = sshll.u32 %s5514, 4
          %s5525 = int_to_ptr.vmem [resolvable:$true] %s5524
          %5527 = dma.vmem_to_hbm [thread:$0]  %s5525, 128, %s5522, %s5511
        $region104: #{cnn_forward.1} parent=99 // pred_fallthru
          _
      $region100: #{cnn_forward.1} parent=5 // pred_fallthru
        _
      %p5528 = scmp.le.s32.totalorder 2, %s29
      // Predicated region
      $region105: #{cnn_forward.1} parent=5 // pred_check
        %p5529 = pneg %p5528
      $region106: #{cnn_forward.1} parent=5 // pred_check_branch
        %5531 = sbr.rel (%p5529) target = $region108
      $region107: #{cnn_forward.1} parent=5 // pred_region
        %s5532 = ssub.s32 %s29, 2
        // Predicated region
        $region109: #{cnn_forward.1} parent=107 // pred_check
          %p5533 = pneg %p483
        $region110: #{cnn_forward.1} parent=107 // pred_check_branch
          %5535 = sbr.rel (%p5533) target = $region112
        $region111: #{cnn_forward.1} parent=107 // pred_region
          %s5536 = sand.u32 %s468, 1
          %s5537 = scalar_lea.sflag [#allocation3], %s5536
          %s5538 = sand.u32 %s468, 1
          %s5539 = smul.addr %s5538, 8
          %s5540 = scalar_lea.vmem [#allocation2], %s5539
          %5541 = dma.done %s5537, 128
        $region112: #{cnn_forward.1} parent=107 // pred_fallthru
          _
      $region108: #{cnn_forward.1} parent=5 // pred_fallthru
        _
    $region6: #{cnn_forward.1} parent=1 // loop_footer
      %s33 = sadd.s32 1, %s29
    $region7: #{cnn_forward.1} parent=1 // loop_footer_branch
      %28 = sbr.rel target = $region3
    $region8: #{cnn_forward.1} parent=1 // loop_exit
      _
    %5542 = vsyncpa [#allocation3], 1
    %s5543 = scalar_lea.sflag [#allocation3], 1
    %5544 = vsyncpa %s5543, 1

</llo_original>
